<compile_context>
chip_gen: v7x
topology: tpu7x:2x2x1
jax: 0.10.0
libtpu: 0.0.40
codegen_flags: <defaults>
</compile_context>

<pallas_src>
import jax
import jax.numpy as jnp
from jax.experimental import pallas as pl
from jax.experimental.pallas import tpu as pltpu

IN_CHANNELS = 3
EMB_DIM = 1024
FEAT_DIM = 2 * EMB_DIM          # state = cat(emb_src, emb_tgt)
HEAD_DIM = 64
NUM_ACTIONS = 6
NUM_STEPSIZES = 4
NUM_NOPS = 3
ACT_DIM = NUM_ACTIONS * NUM_STEPSIZES + NUM_NOPS   # 27 = 3 * (2*NUM_STEPSIZES + 1)
LOGIT_PAD = 128                                    # lane-dense packed logits / value width
TB = 8                                             # batch tile (sublane count)


# ----------------------------------------------------------------------------
# Fused forward kernel: embed(src) | embed(tgt) | state | actor-critic head
# ----------------------------------------------------------------------------
def _agent_kernel(src_ref, tgt_ref,
                  w1, b1, w2, b2, w3, b3,                  # point embed MLP
                  wh1, bh1, wh2, bh2, wa, ba,              # fused t/r head branches
                  wv1, bv1, wv2, bv2,                      # value head
                  state_ref, emb_tgt_ref, logits_ref, value_ref):
    tb, n, _ = src_ref.shape

    # ---- pointwise MLP on 2*TB clouds at once ------------------------------
    src = src_ref[...].reshape(tb * n, IN_CHANNELS)
    tgt = tgt_ref[...].reshape(tb * n, IN_CHANNELS)
    x = jnp.concatenate([src, tgt], axis=0)                 # (2*TB*N, 3) f32

    # layer 1 (K=3): VPU broadcast-FMAs instead of a ~2%-utilized MXU matmul
    w1v = w1[...]                                            # (3, 64) f32
    h = (x[:, 0:1] * w1v[0:1, :]
         + x[:, 1:2] * w1v[1:2, :]
         + x[:, 2:3] * w1v[2:3, :]
         + b1[...])
    h = jnp.maximum(h, 0.0)                                  # (M, 64)

    # layers 2/3 on the MXU, bf16 operands, f32 accumulate
    h = jnp.dot(h.astype(jnp.bfloat16), w2[...],
                preferred_element_type=jnp.float32) + b2[...]
    h = jnp.maximum(h, 0.0)                                  # (M, 128)
    h = jnp.dot(h.astype(jnp.bfloat16), w3[...],
                preferred_element_type=jnp.float32) + b3[...]  # (M, 1024)

    # max-pool over points -> per-cloud embedding
    emb = jnp.max(h.reshape(2 * tb, n, EMB_DIM), axis=1)     # (2*TB, 1024)
    emb_src = emb[0:tb]
    emb_tgt = emb[tb:2 * tb]

    state = jnp.concatenate([emb_src, emb_tgt], axis=-1)     # (TB, 2048)
    state_ref[...] = state
    emb_tgt_ref[...] = emb_tgt

    # ---- actor-critic head (fused t/r branches) ----------------------------
    s16 = state.astype(jnp.bfloat16)
    h1 = jnp.dot(s16, wh1[...], preferred_element_type=jnp.float32) + bh1[...]
    h1 = jnp.maximum(h1, 0.0)                                # (TB, 256) = [t | r]
    h2 = jnp.dot(h1.astype(jnp.bfloat16), wh2[...],
                 preferred_element_type=jnp.float32) + bh2[...]
    h2 = jnp.maximum(h2, 0.0)                                # (TB, 128) = [emb_t | emb_r]

    # packed action logits: cols 0:ACT_DIM = logits_t, cols 64:64+ACT_DIM = logits_r
    logits_ref[...] = jnp.dot(h2.astype(jnp.bfloat16), wa[...],
                              preferred_element_type=jnp.float32) + ba[...]

    # value head: h2 is already cat([emb_t, emb_r], dim=1) by construction
    emb_v = jnp.dot(h2.astype(jnp.bfloat16), wv1[...],
                    preferred_element_type=jnp.float32) + bv1[...]
    emb_v = jnp.maximum(emb_v, 0.0)                          # (TB, 64)
    value_ref[...] = jnp.dot(emb_v.astype(jnp.bfloat16), wv2[...],
                             preferred_element_type=jnp.float32) + bv2[...]   # col 0 = value


# ----------------------------------------------------------------------------
# Parameter init (PyTorch-style uniform(-1/sqrt(fan_in), +)) and head packing
# ----------------------------------------------------------------------------
def _linear_params(key, fan_in, fan_out):
    kw, kb = jax.random.split(key)
    bound = 1.0 / float(fan_in) ** 0.5
    w = jax.random.uniform(kw, (fan_in, fan_out), jnp.float32, -bound, bound)
    b = jax.random.uniform(kb, (1, fan_out), jnp.float32, -bound, bound)
    return w, b


def init_params(key):
    keys = jax.random.split(key, 11)
    embed = []
    for k, (fi, fo) in zip(keys[:3], [(IN_CHANNELS, 64), (64, 128), (128, EMB_DIM)]):
        embed.extend(_linear_params(k, fi, fo))

    head_dims = [
        (FEAT_DIM, 2 * HEAD_DIM), (2 * HEAD_DIM, HEAD_DIM),   # emb_t
        (FEAT_DIM, 2 * HEAD_DIM), (2 * HEAD_DIM, HEAD_DIM),   # emb_r
        (HEAD_DIM, ACT_DIM), (HEAD_DIM, ACT_DIM),             # action_t, action_r
        (2 * HEAD_DIM, HEAD_DIM), (HEAD_DIM, 1),              # emb_v, value
    ]
    head = []
    for k, (fi, fo) in zip(keys[3:11], head_dims):
        head.extend(_linear_params(k, fi, fo))

    return {"embed": tuple(embed), "head": tuple(head)}


def pack_params(params):
    """Fuse head branches (wide / block-diagonal weights), cast matmul weights to bf16."""
    w1, b1, w2, b2, w3, b3 = params["embed"]
    (wt1, bt1, wt2, bt2,
     wr1, br1, wr2, br2,
     wat, bat, war, bar,
     wv1, bv1, wv2, bv2) = params["head"]

    # layer 1 of both branches: one (2048, 256) matmul, [t | r] columns
    wh1 = jnp.concatenate([wt1, wr1], axis=1)
    bh1 = jnp.concatenate([bt1, br1], axis=1)

    # layer 2: block-diagonal (256, 128) so h2 = [emb_t | emb_r]
    wh2 = jnp.zeros((4 * HEAD_DIM, 2 * HEAD_DIM), jnp.float32)
    wh2 = wh2.at[0:2 * HEAD_DIM, 0:HEAD_DIM].set(wt2)
    wh2 = wh2.at[2 * HEAD_DIM:, HEAD_DIM:].set(wr2)
    bh2 = jnp.concatenate([bt2, br2], axis=1)

    # action heads: block-diagonal + zero-padded to a lane-dense (128, 128) output
    wa = jnp.zeros((2 * HEAD_DIM, LOGIT_PAD), jnp.float32)
    wa = wa.at[0:HEAD_DIM, 0:ACT_DIM].set(wat)
    wa = wa.at[HEAD_DIM:, 64:64 + ACT_DIM].set(war)
    ba = jnp.zeros((1, LOGIT_PAD), jnp.float32)
    ba = ba.at[:, 0:ACT_DIM].set(bat).at[:, 64:64 + ACT_DIM].set(bar)

    # value head output padded to 128 lanes (col 0 = value)
    wv2p = jnp.zeros((HEAD_DIM, LOGIT_PAD), jnp.float32).at[:, 0:1].set(wv2)
    bv2p = jnp.zeros((1, LOGIT_PAD), jnp.float32).at[:, 0:1].set(bv2)

    bf = lambda a: a.astype(jnp.bfloat16)
    return (
        w1, b1,                      # layer 1 stays f32 (VPU FMAs)
        bf(w2), b2, bf(w3), b3,
        bf(wh1), bh1, bf(wh2), bh2, bf(wa), ba,
        bf(wv1), bv1, bf(wv2p), bv2p,
    )


# ----------------------------------------------------------------------------
# Agent2D forward
# ----------------------------------------------------------------------------
def agent2d_forward(src, tgt, packed):
    # TODO(synk): BENCHMARK branch (tgt passed as a precomputed embedding) is not
    # implemented; require a 3-D tgt point cloud.
    assert tgt.ndim == 3, "precomputed tgt embedding (BENCHMARK branch) not supported"
    B, N, C = src.shape

    b_pad = ((B + TB - 1) // TB) * TB
    if b_pad != B:
        pad = ((0, b_pad - B), (0, 0), (0, 0))
        src = jnp.pad(src, pad)
        tgt = jnp.pad(tgt, pad)

    def full_spec(a):
        nd = a.ndim
        return pl.BlockSpec(a.shape, lambda i, _nd=nd: (0,) * _nd)

    grid = (b_pad // TB,)
    out_shape = (
        jax.ShapeDtypeStruct((b_pad, FEAT_DIM), jnp.float32),    # state
        jax.ShapeDtypeStruct((b_pad, EMB_DIM), jnp.float32),     # emb_tgt
        jax.ShapeDtypeStruct((b_pad, LOGIT_PAD), jnp.float32),   # packed logits
        jax.ShapeDtypeStruct((b_pad, LOGIT_PAD), jnp.float32),   # padded value
    )

    # rough cost hint for the XLA scheduler
    m_pts = 2 * b_pad * N
    flops = (2 * m_pts * (IN_CHANNELS * 64 + 64 * 128 + 128 * EMB_DIM)
             + 2 * b_pad * (FEAT_DIM * 256 + 256 * 128 + 128 * LOGIT_PAD
                            + 128 * HEAD_DIM + HEAD_DIM * LOGIT_PAD))
    bytes_accessed = (2 * b_pad * N * C * 4
                      + sum(int(w.size) * w.dtype.itemsize for w in packed)
                      + b_pad * (FEAT_DIM + EMB_DIM + 2 * LOGIT_PAD) * 4)

    state, emb_tgt, logits, value = pl.pallas_call(
        _agent_kernel,
        out_shape=out_shape,
        grid=grid,
        in_specs=[
            pl.BlockSpec((TB, N, C), lambda i: (i, 0, 0)),
            pl.BlockSpec((TB, N, C), lambda i: (i, 0, 0)),
        ] + [full_spec(w) for w in packed],
        out_specs=(
            pl.BlockSpec((TB, FEAT_DIM), lambda i: (i, 0)),
            pl.BlockSpec((TB, EMB_DIM), lambda i: (i, 0)),
            pl.BlockSpec((TB, LOGIT_PAD), lambda i: (i, 0)),
            pl.BlockSpec((TB, LOGIT_PAD), lambda i: (i, 0)),
        ),
        compiler_params=pltpu.CompilerParams(
            dimension_semantics=("parallel",),
            vmem_limit_bytes=32 * 1024 * 1024,
        ),
        cost_estimate=pl.CostEstimate(
            flops=int(flops), transcendentals=0, bytes_accessed=int(bytes_accessed)),
    )(src, tgt, *packed)

    state = state[:B]
    emb_tgt = emb_tgt[:B]
    logits_t = logits[:B, 0:ACT_DIM]
    logits_r = logits[:B, 64:64 + ACT_DIM]
    value = value[:B, 0:1]

    action = (
        logits_t.reshape(-1, 3, 2 * NUM_STEPSIZES + 1),
        logits_r.reshape(-1, 3, 2 * NUM_STEPSIZES + 1),
    )
    value = value.reshape(-1, 1, 1)
    return state, action, value, emb_tgt


if __name__ == "__main__":
    key = jax.random.PRNGKey(0)
    k_src, k_tgt, k_par = jax.random.split(key, 3)

    B, N = 2, 16
    src = jax.random.normal(k_src, (B, N, IN_CHANNELS), jnp.float32)
    tgt = jax.random.normal(k_tgt, (B, N, IN_CHANNELS), jnp.float32)

    params = init_params(k_par)
    packed = pack_params(params)          # fuse / bf16-cast once, outside jit

    fwd = jax.jit(agent2d_forward)
    state, action, value, emb_tgt = fwd(src, tgt, packed)
    jax.block_until_ready((state, action, value, emb_tgt))

    assert state.shape == (B, FEAT_DIM)
    assert action[0].shape == (B, 3, 2 * NUM_STEPSIZES + 1)
    assert action[1].shape == (B, 3, 2 * NUM_STEPSIZES + 1)
    assert value.shape == (B, 1, 1)
    assert emb_tgt.shape == (B, EMB_DIM)
    assert bool(jnp.all(jnp.isfinite(state)))
    assert bool(jnp.all(jnp.isfinite(action[0]))) and bool(jnp.all(jnp.isfinite(action[1])))
    assert bool(jnp.all(jnp.isfinite(value)))

    print("KERNEL_OK")
</pallas_src>

<mosaic_0001>
module attributes {stable_mosaic.version = 11 : i64} {
  func.func @_agent_kernel(%arg0: i32, %arg1: memref<8x16x3xf32, #tpu.memory_space<vmem>>, %arg2: memref<8x16x3xf32, #tpu.memory_space<vmem>>, %arg3: memref<3x64xf32, #tpu.memory_space<vmem>>, %arg4: memref<1x64xf32, #tpu.memory_space<vmem>>, %arg5: memref<64x128xbf16, #tpu.memory_space<vmem>>, %arg6: memref<1x128xf32, #tpu.memory_space<vmem>>, %arg7: memref<128x1024xbf16, #tpu.memory_space<vmem>>, %arg8: memref<1x1024xf32, #tpu.memory_space<vmem>>, %arg9: memref<2048x256xbf16, #tpu.memory_space<vmem>>, %arg10: memref<1x256xf32, #tpu.memory_space<vmem>>, %arg11: memref<256x128xbf16, #tpu.memory_space<vmem>>, %arg12: memref<1x128xf32, #tpu.memory_space<vmem>>, %arg13: memref<128x128xbf16, #tpu.memory_space<vmem>>, %arg14: memref<1x128xf32, #tpu.memory_space<vmem>>, %arg15: memref<128x64xbf16, #tpu.memory_space<vmem>>, %arg16: memref<1x64xf32, #tpu.memory_space<vmem>>, %arg17: memref<64x128xbf16, #tpu.memory_space<vmem>>, %arg18: memref<1x128xf32, #tpu.memory_space<vmem>>, %arg19: memref<8x2048xf32, #tpu.memory_space<vmem>>, %arg20: memref<8x1024xf32, #tpu.memory_space<vmem>>, %arg21: memref<8x128xf32, #tpu.memory_space<vmem>>, %arg22: memref<8x128xf32, #tpu.memory_space<vmem>>) attributes {dimension_semantics = [#tpu.dimension_semantics<parallel>], iteration_bounds = array<i64: 1>, scalar_prefetch = 0 : i64, scratch_operands = 0 : i64, tpu.core_type = #tpu.core_type<tc>, window_params = [{transform_indices = @transform_0, window_bounds = array<i64: 8, 16, 3>}, {transform_indices = @transform_1, window_bounds = array<i64: 8, 16, 3>}, {pipeline_mode = #tpu.pipeline_mode<synchronous>, transform_indices = @transform_2, window_bounds = array<i64: 3, 64>}, {pipeline_mode = #tpu.pipeline_mode<synchronous>, transform_indices = @transform_3, window_bounds = array<i64: 1, 64>}, {pipeline_mode = #tpu.pipeline_mode<synchronous>, transform_indices = @transform_4, window_bounds = array<i64: 64, 128>}, {pipeline_mode = #tpu.pipeline_mode<synchronous>, transform_indices = @transform_5, window_bounds = array<i64: 1, 128>}, {pipeline_mode = #tpu.pipeline_mode<synchronous>, transform_indices = @transform_6, window_bounds = array<i64: 128, 1024>}, {pipeline_mode = #tpu.pipeline_mode<synchronous>, transform_indices = @transform_7, window_bounds = array<i64: 1, 1024>}, {pipeline_mode = #tpu.pipeline_mode<synchronous>, transform_indices = @transform_8, window_bounds = array<i64: 2048, 256>}, {pipeline_mode = #tpu.pipeline_mode<synchronous>, transform_indices = @transform_9, window_bounds = array<i64: 1, 256>}, {pipeline_mode = #tpu.pipeline_mode<synchronous>, transform_indices = @transform_10, window_bounds = array<i64: 256, 128>}, {pipeline_mode = #tpu.pipeline_mode<synchronous>, transform_indices = @transform_11, window_bounds = array<i64: 1, 128>}, {pipeline_mode = #tpu.pipeline_mode<synchronous>, transform_indices = @transform_12, window_bounds = array<i64: 128, 128>}, {pipeline_mode = #tpu.pipeline_mode<synchronous>, transform_indices = @transform_13, window_bounds = array<i64: 1, 128>}, {pipeline_mode = #tpu.pipeline_mode<synchronous>, transform_indices = @transform_14, window_bounds = array<i64: 128, 64>}, {pipeline_mode = #tpu.pipeline_mode<synchronous>, transform_indices = @transform_15, window_bounds = array<i64: 1, 64>}, {pipeline_mode = #tpu.pipeline_mode<synchronous>, transform_indices = @transform_16, window_bounds = array<i64: 64, 128>}, {pipeline_mode = #tpu.pipeline_mode<synchronous>, transform_indices = @transform_17, window_bounds = array<i64: 1, 128>}, {transform_indices = @transform_18, window_bounds = array<i64: 8, 2048>}, {transform_indices = @transform_19, window_bounds = array<i64: 8, 1024>}, {transform_indices = @transform_20, window_bounds = array<i64: 8, 128>}, {transform_indices = @transform_21, window_bounds = array<i64: 8, 128>}]} {
    %c0 = arith.constant 0 : index
    %c0_0 = arith.constant 0 : index
    %c0_1 = arith.constant 0 : index
    %0 = vector.load %arg1[%c0, %c0_0, %c0_1] : memref<8x16x3xf32, #tpu.memory_space<vmem>>, vector<8x16x3xf32>
    %1 = vector.shape_cast %0 : vector<8x16x3xf32> to vector<128x3xf32>
    %c0_2 = arith.constant 0 : index
    %c0_3 = arith.constant 0 : index
    %c0_4 = arith.constant 0 : index
    %2 = vector.load %arg2[%c0_2, %c0_3, %c0_4] : memref<8x16x3xf32, #tpu.memory_space<vmem>>, vector<8x16x3xf32>
    %3 = vector.shape_cast %2 : vector<8x16x3xf32> to vector<128x3xf32>
    %4 = tpu.concatenate %1, %3 in 0 : vector<128x3xf32>, vector<128x3xf32> -> vector<256x3xf32>
    %c0_5 = arith.constant 0 : index
    %c0_6 = arith.constant 0 : index
    %5 = vector.load %arg3[%c0_5, %c0_6] : memref<3x64xf32, #tpu.memory_space<vmem>>, vector<3x64xf32>
    %6 = vector.extract_strided_slice %4 {offsets = [0, 0], sizes = [256, 1], strides = [1, 1]} : vector<256x3xf32> to vector<256x1xf32>
    %7 = vector.extract_strided_slice %5 {offsets = [0, 0], sizes = [1, 64], strides = [1, 1]} : vector<3x64xf32> to vector<1x64xf32>
    %8 = vector.broadcast %6 : vector<256x1xf32> to vector<256x64xf32>
    %9 = vector.broadcast %7 : vector<1x64xf32> to vector<256x64xf32>
    %10 = arith.mulf %8, %9 : vector<256x64xf32>
    %11 = vector.extract_strided_slice %4 {offsets = [0, 1], sizes = [256, 1], strides = [1, 1]} : vector<256x3xf32> to vector<256x1xf32>
    %12 = vector.extract_strided_slice %5 {offsets = [1, 0], sizes = [1, 64], strides = [1, 1]} : vector<3x64xf32> to vector<1x64xf32>
    %13 = vector.broadcast %11 : vector<256x1xf32> to vector<256x64xf32>
    %14 = vector.broadcast %12 : vector<1x64xf32> to vector<256x64xf32>
    %15 = arith.mulf %13, %14 : vector<256x64xf32>
    %16 = arith.addf %10, %15 : vector<256x64xf32>
    %17 = vector.extract_strided_slice %4 {offsets = [0, 2], sizes = [256, 1], strides = [1, 1]} : vector<256x3xf32> to vector<256x1xf32>
    %18 = vector.extract_strided_slice %5 {offsets = [2, 0], sizes = [1, 64], strides = [1, 1]} : vector<3x64xf32> to vector<1x64xf32>
    %19 = vector.broadcast %17 : vector<256x1xf32> to vector<256x64xf32>
    %20 = vector.broadcast %18 : vector<1x64xf32> to vector<256x64xf32>
    %21 = arith.mulf %19, %20 : vector<256x64xf32>
    %22 = arith.addf %16, %21 : vector<256x64xf32>
    %c0_7 = arith.constant 0 : index
    %c0_8 = arith.constant 0 : index
    %23 = vector.load %arg4[%c0_7, %c0_8] : memref<1x64xf32, #tpu.memory_space<vmem>>, vector<1x64xf32>
    %24 = vector.broadcast %23 : vector<1x64xf32> to vector<256x64xf32>
    %25 = arith.addf %22, %24 : vector<256x64xf32>
    %cst = arith.constant 0.000000e+00 : f32
    %26 = vector.broadcast %cst : f32 to vector<256x64xf32>
    %27 = arith.maximumf %25, %26 : vector<256x64xf32>
    %28 = arith.truncf %27 : vector<256x64xf32> to vector<256x64xbf16>
    %c0_9 = arith.constant 0 : index
    %c0_10 = arith.constant 0 : index
    %29 = vector.load %arg5[%c0_9, %c0_10] : memref<64x128xbf16, #tpu.memory_space<vmem>>, vector<64x128xbf16>
    %cst_11 = arith.constant dense<0.000000e+00> : vector<256x128xf32>
    %30 = tpu.matmul %28, %29, %cst_11 {dimension_numbers = #tpu.dot_dimension_numbers<[1], [0], [0], [1], [0, 0, 1, 1], [], []>} : vector<256x64xbf16>, vector<64x128xbf16>, vector<256x128xf32> -> vector<256x128xf32>
    %c0_12 = arith.constant 0 : index
    %c0_13 = arith.constant 0 : index
    %31 = vector.load %arg6[%c0_12, %c0_13] : memref<1x128xf32, #tpu.memory_space<vmem>>, vector<1x128xf32>
    %32 = vector.broadcast %31 : vector<1x128xf32> to vector<256x128xf32>
    %33 = arith.addf %30, %32 : vector<256x128xf32>
    %cst_14 = arith.constant 0.000000e+00 : f32
    %34 = vector.broadcast %cst_14 : f32 to vector<256x128xf32>
    %35 = arith.maximumf %33, %34 : vector<256x128xf32>
    %36 = arith.truncf %35 : vector<256x128xf32> to vector<256x128xbf16>
    %c0_15 = arith.constant 0 : index
    %c0_16 = arith.constant 0 : index
    %37 = vector.load %arg7[%c0_15, %c0_16] : memref<128x1024xbf16, #tpu.memory_space<vmem>>, vector<128x1024xbf16>
    %cst_17 = arith.constant dense<0.000000e+00> : vector<256x1024xf32>
    %38 = tpu.matmul %36, %37, %cst_17 {dimension_numbers = #tpu.dot_dimension_numbers<[1], [0], [0], [1], [0, 0, 1, 1], [], []>} : vector<256x128xbf16>, vector<128x1024xbf16>, vector<256x1024xf32> -> vector<256x1024xf32>
    %c0_18 = arith.constant 0 : index
    %c0_19 = arith.constant 0 : index
    %39 = vector.load %arg8[%c0_18, %c0_19] : memref<1x1024xf32, #tpu.memory_space<vmem>>, vector<1x1024xf32>
    %40 = vector.broadcast %39 : vector<1x1024xf32> to vector<256x1024xf32>
    %41 = arith.addf %38, %40 : vector<256x1024xf32>
    %42 = vector.shape_cast %41 : vector<256x1024xf32> to vector<16x16x1024xf32>
    %cst_20 = arith.constant dense<0xFF800000> : vector<16x1024xf32>
    %43 = vector.multi_reduction <maximumf>, %42, %cst_20 [1] : vector<16x16x1024xf32> to vector<16x1024xf32>
    %44 = vector.extract_strided_slice %43 {offsets = [0, 0], sizes = [8, 1024], strides = [1, 1]} : vector<16x1024xf32> to vector<8x1024xf32>
    %45 = vector.extract_strided_slice %43 {offsets = [8, 0], sizes = [8, 1024], strides = [1, 1]} : vector<16x1024xf32> to vector<8x1024xf32>
    %46 = tpu.concatenate %44, %45 in 1 : vector<8x1024xf32>, vector<8x1024xf32> -> vector<8x2048xf32>
    %c0_21 = arith.constant 0 : index
    %c0_22 = arith.constant 0 : index
    %47 = vector.load %arg19[%c0_21, %c0_22] : memref<8x2048xf32, #tpu.memory_space<vmem>>, vector<8x2048xf32>
    tpu.vector_store %arg19[%c0_21, %c0_22], %46 {strides = array<i32>} : memref<8x2048xf32, #tpu.memory_space<vmem>>, vector<8x2048xf32>,
    %c0_23 = arith.constant 0 : index
    %c0_24 = arith.constant 0 : index
    %48 = vector.load %arg20[%c0_23, %c0_24] : memref<8x1024xf32, #tpu.memory_space<vmem>>, vector<8x1024xf32>
    tpu.vector_store %arg20[%c0_23, %c0_24], %45 {strides = array<i32>} : memref<8x1024xf32, #tpu.memory_space<vmem>>, vector<8x1024xf32>,
    %49 = arith.truncf %46 : vector<8x2048xf32> to vector<8x2048xbf16>
    %c0_25 = arith.constant 0 : index
    %c0_26 = arith.constant 0 : index
    %50 = vector.load %arg9[%c0_25, %c0_26] : memref<2048x256xbf16, #tpu.memory_space<vmem>>, vector<2048x256xbf16>
    %cst_27 = arith.constant dense<0.000000e+00> : vector<8x256xf32>
    %51 = tpu.matmul %49, %50, %cst_27 {dimension_numbers = #tpu.dot_dimension_numbers<[1], [0], [0], [1], [0, 0, 1, 1], [], []>} : vector<8x2048xbf16>, vector<2048x256xbf16>, vector<8x256xf32> -> vector<8x256xf32>
    %c0_28 = arith.constant 0 : index
    %c0_29 = arith.constant 0 : index
    %52 = vector.load %arg10[%c0_28, %c0_29] : memref<1x256xf32, #tpu.memory_space<vmem>>, vector<1x256xf32>
    %53 = vector.broadcast %52 : vector<1x256xf32> to vector<8x256xf32>
    %54 = arith.addf %51, %53 : vector<8x256xf32>
    %cst_30 = arith.constant 0.000000e+00 : f32
    %55 = vector.broadcast %cst_30 : f32 to vector<8x256xf32>
    %56 = arith.maximumf %54, %55 : vector<8x256xf32>
    %57 = arith.truncf %56 : vector<8x256xf32> to vector<8x256xbf16>
    %c0_31 = arith.constant 0 : index
    %c0_32 = arith.constant 0 : index
    %58 = vector.load %arg11[%c0_31, %c0_32] : memref<256x128xbf16, #tpu.memory_space<vmem>>, vector<256x128xbf16>
    %cst_33 = arith.constant dense<0.000000e+00> : vector<8x128xf32>
    %59 = tpu.matmul %57, %58, %cst_33 {dimension_numbers = #tpu.dot_dimension_numbers<[1], [0], [0], [1], [0, 0, 1, 1], [], []>} : vector<8x256xbf16>, vector<256x128xbf16>, vector<8x128xf32> -> vector<8x128xf32>
    %c0_34 = arith.constant 0 : index
    %c0_35 = arith.constant 0 : index
    %60 = vector.load %arg12[%c0_34, %c0_35] : memref<1x128xf32, #tpu.memory_space<vmem>>, vector<1x128xf32>
    %61 = vector.broadcast %60 : vector<1x128xf32> to vector<8x128xf32>
    %62 = arith.addf %59, %61 : vector<8x128xf32>
    %cst_36 = arith.constant 0.000000e+00 : f32
    %63 = vector.broadcast %cst_36 : f32 to vector<8x128xf32>
    %64 = arith.maximumf %62, %63 : vector<8x128xf32>
    %65 = arith.truncf %64 : vector<8x128xf32> to vector<8x128xbf16>
    %c0_37 = arith.constant 0 : index
    %c0_38 = arith.constant 0 : index
    %66 = vector.load %arg13[%c0_37, %c0_38] : memref<128x128xbf16, #tpu.memory_space<vmem>>, vector<128x128xbf16>
    %cst_39 = arith.constant dense<0.000000e+00> : vector<8x128xf32>
    %67 = tpu.matmul %65, %66, %cst_39 {dimension_numbers = #tpu.dot_dimension_numbers<[1], [0], [0], [1], [0, 0, 1, 1], [], []>} : vector<8x128xbf16>, vector<128x128xbf16>, vector<8x128xf32> -> vector<8x128xf32>
    %c0_40 = arith.constant 0 : index
    %c0_41 = arith.constant 0 : index
    %68 = vector.load %arg14[%c0_40, %c0_41] : memref<1x128xf32, #tpu.memory_space<vmem>>, vector<1x128xf32>
    %69 = vector.broadcast %68 : vector<1x128xf32> to vector<8x128xf32>
    %70 = arith.addf %67, %69 : vector<8x128xf32>
    %c0_42 = arith.constant 0 : index
    %c0_43 = arith.constant 0 : index
    %71 = vector.load %arg21[%c0_42, %c0_43] : memref<8x128xf32, #tpu.memory_space<vmem>>, vector<8x128xf32>
    tpu.vector_store %arg21[%c0_42, %c0_43], %70 {strides = array<i32>} : memref<8x128xf32, #tpu.memory_space<vmem>>, vector<8x128xf32>,
    %72 = arith.truncf %64 : vector<8x128xf32> to vector<8x128xbf16>
    %c0_44 = arith.constant 0 : index
    %c0_45 = arith.constant 0 : index
    %73 = vector.load %arg15[%c0_44, %c0_45] : memref<128x64xbf16, #tpu.memory_space<vmem>>, vector<128x64xbf16>
    %cst_46 = arith.constant dense<0.000000e+00> : vector<8x64xf32>
    %74 = tpu.matmul %72, %73, %cst_46 {dimension_numbers = #tpu.dot_dimension_numbers<[1], [0], [0], [1], [0, 0, 1, 1], [], []>} : vector<8x128xbf16>, vector<128x64xbf16>, vector<8x64xf32> -> vector<8x64xf32>
    %c0_47 = arith.constant 0 : index
    %c0_48 = arith.constant 0 : index
    %75 = vector.load %arg16[%c0_47, %c0_48] : memref<1x64xf32, #tpu.memory_space<vmem>>, vector<1x64xf32>
    %76 = vector.broadcast %75 : vector<1x64xf32> to vector<8x64xf32>
    %77 = arith.addf %74, %76 : vector<8x64xf32>
    %cst_49 = arith.constant 0.000000e+00 : f32
    %78 = vector.broadcast %cst_49 : f32 to vector<8x64xf32>
    %79 = arith.maximumf %77, %78 : vector<8x64xf32>
    %80 = arith.truncf %79 : vector<8x64xf32> to vector<8x64xbf16>
    %c0_50 = arith.constant 0 : index
    %c0_51 = arith.constant 0 : index
    %81 = vector.load %arg17[%c0_50, %c0_51] : memref<64x128xbf16, #tpu.memory_space<vmem>>, vector<64x128xbf16>
    %cst_52 = arith.constant dense<0.000000e+00> : vector<8x128xf32>
    %82 = tpu.matmul %80, %81, %cst_52 {dimension_numbers = #tpu.dot_dimension_numbers<[1], [0], [0], [1], [0, 0, 1, 1], [], []>} : vector<8x64xbf16>, vector<64x128xbf16>, vector<8x128xf32> -> vector<8x128xf32>
    %c0_53 = arith.constant 0 : index
    %c0_54 = arith.constant 0 : index
    %83 = vector.load %arg18[%c0_53, %c0_54] : memref<1x128xf32, #tpu.memory_space<vmem>>, vector<1x128xf32>
    %84 = vector.broadcast %83 : vector<1x128xf32> to vector<8x128xf32>
    %85 = arith.addf %82, %84 : vector<8x128xf32>
    %c0_55 = arith.constant 0 : index
    %c0_56 = arith.constant 0 : index
    %86 = vector.load %arg22[%c0_55, %c0_56] : memref<8x128xf32, #tpu.memory_space<vmem>>, vector<8x128xf32>
    tpu.vector_store %arg22[%c0_55, %c0_56], %85 {strides = array<i32>} : memref<8x128xf32, #tpu.memory_space<vmem>>, vector<8x128xf32>,
    return
  }
  func.func @transform_0(%arg0: i32) -> (i32, i32, i32) {
    %c0_i32 = arith.constant 0 : i32
    %c0_i32_0 = arith.constant 0 : i32
    %c0_i32_1 = arith.constant 0 : i32
    return %arg0, %c0_i32, %c0_i32_0 : i32, i32, i32
  }
  func.func @transform_1(%arg0: i32) -> (i32, i32, i32) {
    %c0_i32 = arith.constant 0 : i32
    %c0_i32_0 = arith.constant 0 : i32
    %c0_i32_1 = arith.constant 0 : i32
    return %arg0, %c0_i32, %c0_i32_0 : i32, i32, i32
  }
  func.func @transform_2(%arg0: i32) -> (i32, i32) {
    %c0_i32 = arith.constant 0 : i32
    %c0_i32_0 = arith.constant 0 : i32
    %c0_i32_1 = arith.constant 0 : i32
    return %c0_i32, %c0_i32_0 : i32, i32
  }
  func.func @transform_3(%arg0: i32) -> (i32, i32) {
    %c0_i32 = arith.constant 0 : i32
    %c0_i32_0 = arith.constant 0 : i32
    %c0_i32_1 = arith.constant 0 : i32
    return %c0_i32, %c0_i32_0 : i32, i32
  }
  func.func @transform_4(%arg0: i32) -> (i32, i32) {
    %c0_i32 = arith.constant 0 : i32
    %c0_i32_0 = arith.constant 0 : i32
    %c0_i32_1 = arith.constant 0 : i32
    return %c0_i32, %c0_i32_0 : i32, i32
  }
  func.func @transform_5(%arg0: i32) -> (i32, i32) {
    %c0_i32 = arith.constant 0 : i32
    %c0_i32_0 = arith.constant 0 : i32
    %c0_i32_1 = arith.constant 0 : i32
    return %c0_i32, %c0_i32_0 : i32, i32
  }
  func.func @transform_6(%arg0: i32) -> (i32, i32) {
    %c0_i32 = arith.constant 0 : i32
    %c0_i32_0 = arith.constant 0 : i32
    %c0_i32_1 = arith.constant 0 : i32
    return %c0_i32, %c0_i32_0 : i32, i32
  }
  func.func @transform_7(%arg0: i32) -> (i32, i32) {
    %c0_i32 = arith.constant 0 : i32
    %c0_i32_0 = arith.constant 0 : i32
    %c0_i32_1 = arith.constant 0 : i32
    return %c0_i32, %c0_i32_0 : i32, i32
  }
  func.func @transform_8(%arg0: i32) -> (i32, i32) {
    %c0_i32 = arith.constant 0 : i32
    %c0_i32_0 = arith.constant 0 : i32
    %c0_i32_1 = arith.constant 0 : i32
    return %c0_i32, %c0_i32_0 : i32, i32
  }
  func.func @transform_9(%arg0: i32) -> (i32, i32) {
    %c0_i32 = arith.constant 0 : i32
    %c0_i32_0 = arith.constant 0 : i32
    %c0_i32_1 = arith.constant 0 : i32
    return %c0_i32, %c0_i32_0 : i32, i32
  }
  func.func @transform_10(%arg0: i32) -> (i32, i32) {
    %c0_i32 = arith.constant 0 : i32
    %c0_i32_0 = arith.constant 0 : i32
    %c0_i32_1 = arith.constant 0 : i32
    return %c0_i32, %c0_i32_0 : i32, i32
  }
  func.func @transform_11(%arg0: i32) -> (i32, i32) {
    %c0_i32 = arith.constant 0 : i32
    %c0_i32_0 = arith.constant 0 : i32
    %c0_i32_1 = arith.constant 0 : i32
    return %c0_i32, %c0_i32_0 : i32, i32
  }
  func.func @transform_12(%arg0: i32) -> (i32, i32) {
    %c0_i32 = arith.constant 0 : i32
    %c0_i32_0 = arith.constant 0 : i32
    %c0_i32_1 = arith.constant 0 : i32
    return %c0_i32, %c0_i32_0 : i32, i32
  }
  func.func @transform_13(%arg0: i32) -> (i32, i32) {
    %c0_i32 = arith.constant 0 : i32
    %c0_i32_0 = arith.constant 0 : i32
    %c0_i32_1 = arith.constant 0 : i32
    return %c0_i32, %c0_i32_0 : i32, i32
  }
  func.func @transform_14(%arg0: i32) -> (i32, i32) {
    %c0_i32 = arith.constant 0 : i32
    %c0_i32_0 = arith.constant 0 : i32
    %c0_i32_1 = arith.constant 0 : i32
    return %c0_i32, %c0_i32_0 : i32, i32
  }
  func.func @transform_15(%arg0: i32) -> (i32, i32) {
    %c0_i32 = arith.constant 0 : i32
    %c0_i32_0 = arith.constant 0 : i32
    %c0_i32_1 = arith.constant 0 : i32
    return %c0_i32, %c0_i32_0 : i32, i32
  }
  func.func @transform_16(%arg0: i32) -> (i32, i32) {
    %c0_i32 = arith.constant 0 : i32
    %c0_i32_0 = arith.constant 0 : i32
    %c0_i32_1 = arith.constant 0 : i32
    return %c0_i32, %c0_i32_0 : i32, i32
  }
  func.func @transform_17(%arg0: i32) -> (i32, i32) {
    %c0_i32 = arith.constant 0 : i32
    %c0_i32_0 = arith.constant 0 : i32
    %c0_i32_1 = arith.constant 0 : i32
    return %c0_i32, %c0_i32_0 : i32, i32
  }
  func.func @transform_18(%arg0: i32) -> (i32, i32) {
    %c0_i32 = arith.constant 0 : i32
    %c0_i32_0 = arith.constant 0 : i32
    return %arg0, %c0_i32 : i32, i32
  }
  func.func @transform_19(%arg0: i32) -> (i32, i32) {
    %c0_i32 = arith.constant 0 : i32
    %c0_i32_0 = arith.constant 0 : i32
    return %arg0, %c0_i32 : i32, i32
  }
  func.func @transform_20(%arg0: i32) -> (i32, i32) {
    %c0_i32 = arith.constant 0 : i32
    %c0_i32_0 = arith.constant 0 : i32
    return %arg0, %c0_i32 : i32, i32
  }
  func.func @transform_21(%arg0: i32) -> (i32, i32) {
    %c0_i32 = arith.constant 0 : i32
    %c0_i32_0 = arith.constant 0 : i32
    return %arg0, %c0_i32 : i32, i32
  }
}

</mosaic_0001>

<llo_original>
// kernel: agent2d_forward.1
$region0: #{agent2d_forward.1}
  #allocation0 [shape = 'u32[]', space=smem, size = 0x4, offset = 0x4, fixed_abs, tag = 'smem constant byte address 0x4 - core index']
  #allocation1 [shape = 'u32[144,128]{1,0:T(1,128)}', space=vmem, size = 0x12000, scoped, tag = 'internal scratch']
  %s0 = inlined_call_operand.vmem [shape: f32[8,16,3], index: 0, kind: input, shape index: {}]
  %s1 = inlined_call_operand.vmem [shape: f32[8,16,3], index: 1, kind: input, shape index: {}]
  %s2 = inlined_call_operand.hbm [shape: f32[3,64], index: 2, kind: input, shape index: {}]
  %s3 = inlined_call_operand.hbm [shape: f32[1,64], index: 3, kind: input, shape index: {}]
  %s4 = inlined_call_operand.hbm [shape: bf16[64,128], index: 4, kind: input, shape index: {}]
  %s5 = inlined_call_operand.hbm [shape: f32[1,128], index: 5, kind: input, shape index: {}]
  %s6 = inlined_call_operand.vmem [shape: bf16[128,1024], index: 6, kind: input, shape index: {}]
  %s7 = inlined_call_operand.hbm [shape: f32[1,1024], index: 7, kind: input, shape index: {}]
  %s8 = inlined_call_operand.hbm [shape: bf16[2048,256], index: 8, kind: input, shape index: {}]
  %s9 = inlined_call_operand.vmem [shape: f32[1,256], index: 9, kind: input, shape index: {}]
  %s10 = inlined_call_operand.hbm [shape: bf16[256,128], index: 10, kind: input, shape index: {}]
  %s11 = inlined_call_operand.hbm [shape: f32[1,128], index: 11, kind: input, shape index: {}]
  %s12 = inlined_call_operand.hbm [shape: bf16[128,128], index: 12, kind: input, shape index: {}]
  %s13 = inlined_call_operand.hbm [shape: f32[1,128], index: 13, kind: input, shape index: {}]
  %s14 = inlined_call_operand.vmem [shape: bf16[128,64], index: 14, kind: input, shape index: {}]
  %s15 = inlined_call_operand.hbm [shape: f32[1,64], index: 15, kind: input, shape index: {}]
  %s16 = inlined_call_operand.vmem [shape: bf16[64,128], index: 16, kind: input, shape index: {}]
  %s17 = inlined_call_operand.vmem [shape: f32[1,128], index: 17, kind: input, shape index: {}]
  %s18 = inlined_call_operand.vmem [shape: f32[8,2048], index: 18, kind: output, shape index: {0}]
  %s19 = inlined_call_operand.vmem [shape: f32[8,1024], index: 19, kind: output, shape index: {1}]
  %s20 = inlined_call_operand.vmem [shape: f32[8,128], index: 20, kind: output, shape index: {2}]
  %s21 = inlined_call_operand.vmem [shape: f32[8,128], index: 21, kind: output, shape index: {3}]
  %22 = xla_tuple %s18, %s19, %s20, %s21
  %s23 = sld [smem:[#allocation0]]
  $region150: #{agent2d_forward.1} parent=0
    _
  %s25 = ssub.s32 1, %s23
  %s26 = scalar_select 0, %s25, %s23
  $region1: #{agent2d_forward.1} parent=0
    #allocation2 [shape = 'u8[2048]{0}', space=vmem, size = 0x800, scoped, tag = 'input window, operand 2, single buffered']
    #allocation3 [shape = 's32[1]{0}', space=sflag, size = 0x4, scoped, tag = 'scoped memory for agent2d_forward.1']
    #allocation4 [shape = 'u8[512]{0}', space=vmem, size = 0x400, scoped, tag = 'input window, operand 3, single buffered']
    #allocation5 [shape = 's32[1]{0}', space=sflag, size = 0x4, scoped, tag = 'scoped memory for agent2d_forward.1']
    #allocation6 [shape = 'u8[16384]{0}', space=vmem, size = 0x4000, scoped, tag = 'input window, operand 4, single buffered']
    #allocation7 [shape = 'u8[512]{0}', space=vmem, size = 0x400, scoped, tag = 'input window, operand 5, single buffered']
    #allocation8 [shape = 's32[1]{0}', space=sflag, size = 0x4, scoped, tag = 'scoped memory for agent2d_forward.1']
    #allocation9 [shape = 'u8[4096]{0}', space=vmem, size = 0x1000, scoped, tag = 'input window, operand 7, single buffered']
    #allocation10 [shape = 'u8[1048576]{0}', space=vmem, size = 0x100000, scoped, tag = 'input window, operand 8, single buffered']
    #allocation11 [shape = 's32[1]{0}', space=sflag, size = 0x4, scoped, tag = 'scoped memory for agent2d_forward.1']
    #allocation12 [shape = 'u8[65536]{0}', space=vmem, size = 0x10000, scoped, tag = 'input window, operand 10, single buffered']
    #allocation13 [shape = 'u8[512]{0}', space=vmem, size = 0x400, scoped, tag = 'input window, operand 11, single buffered']
    #allocation14 [shape = 's32[1]{0}', space=sflag, size = 0x4, scoped, tag = 'scoped memory for agent2d_forward.1']
    #allocation15 [shape = 'u8[32768]{0}', space=vmem, size = 0x8000, scoped, tag = 'input window, operand 12, single buffered']
    #allocation16 [shape = 'u8[512]{0}', space=vmem, size = 0x400, scoped, tag = 'input window, operand 13, single buffered']
    #allocation17 [shape = 's32[1]{0}', space=sflag, size = 0x4, scoped, tag = 'scoped memory for agent2d_forward.1']
    #allocation18 [shape = 'u8[512]{0}', space=vmem, size = 0x400, scoped, tag = 'input window, operand 15, single buffered']
    %27 = vsyncpa [#allocation3], 0
    %28 = vsyncpa [#allocation5], 0
    %29 = vsyncpa [#allocation8], 0
    %30 = vsyncpa [#allocation11], 0
    %31 = vsyncpa [#allocation14], 0
    %32 = vsyncpa [#allocation17], 0
    // Predicated region
    $region2: #{agent2d_forward.1} parent=1 // pred_check
      _
    $region3: #{agent2d_forward.1} parent=1 // pred_check_branch
      %34 = sbr.rel (0) target = $region5
    $region4: #{agent2d_forward.1} parent=1 // pred_region
      _
    $region5: #{agent2d_forward.1} parent=1 // pred_fallthru
      _
    // Predicated region
    $region6: #{agent2d_forward.1} parent=1 // pred_check
      _
    $region7: #{agent2d_forward.1} parent=1 // pred_check_branch
      %36 = sbr.rel (0) target = $region9
    $region8: #{agent2d_forward.1} parent=1 // pred_region
      _
    $region9: #{agent2d_forward.1} parent=1 // pred_fallthru
      _
    // Predicated region
    $region10: #{agent2d_forward.1} parent=1 // pred_check
      _
    $region11: #{agent2d_forward.1} parent=1 // pred_check_branch
      %38 = sbr.rel (0) target = $region13
    $region12: #{agent2d_forward.1} parent=1 // pred_region
      %s40 = ssub.s32 64, 64
      %41 = vsyncadd [#allocation3], %s40
      %s43 = sshll.u32 [#allocation2], 4
      %s44 = int_to_ptr.vmem [resolvable:$true] %s43
      %46 = dma.hbm_to_vmem [thread:$0]  %s2, 64, %s44, [#allocation3]
    $region13: #{agent2d_forward.1} parent=1 // pred_fallthru
      _
    // Predicated region
    $region14: #{agent2d_forward.1} parent=1 // pred_check
      _
    $region15: #{agent2d_forward.1} parent=1 // pred_check_branch
      %48 = sbr.rel (0) target = $region17
    $region16: #{agent2d_forward.1} parent=1 // pred_region
      %s50 = ssub.s32 16, 16
      %51 = vsyncadd [#allocation5], %s50
      %s53 = sshll.u32 [#allocation4], 4
      %s54 = int_to_ptr.vmem [resolvable:$true] %s53
      %56 = dma.hbm_to_vmem [thread:$0]  %s3, 16, %s54, [#allocation5]
    $region17: #{agent2d_forward.1} parent=1 // pred_fallthru
      _
    // Predicated region
    $region18: #{agent2d_forward.1} parent=1 // pred_check
      _
    $region19: #{agent2d_forward.1} parent=1 // pred_check_branch
      %58 = sbr.rel (0) target = $region21
    $region20: #{agent2d_forward.1} parent=1 // pred_region
      %s60 = ssub.s32 512, 512
      %61 = vsyncadd [#allocation5], %s60
      %s62 = sshll.u32 [#allocation6], 4
      %s63 = int_to_ptr.vmem [resolvable:$true] %s62
      %68 = dma.hbm_to_vmem [thread:$0]  %s4, 512, %s63, [#allocation5], 64, 64, 4
    $region21: #{agent2d_forward.1} parent=1 // pred_fallthru
      _
    // Predicated region
    $region22: #{agent2d_forward.1} parent=1 // pred_check
      _
    $region23: #{agent2d_forward.1} parent=1 // pred_check_branch
      %70 = sbr.rel (0) target = $region25
    $region24: #{agent2d_forward.1} parent=1 // pred_region
      %s72 = ssub.s32 16, 16
      %73 = vsyncadd [#allocation8], %s72
      %s75 = sshll.u32 [#allocation7], 4
      %s76 = int_to_ptr.vmem [resolvable:$true] %s75
      %78 = dma.hbm_to_vmem [thread:$0]  %s5, 16, %s76, [#allocation8]
    $region25: #{agent2d_forward.1} parent=1 // pred_fallthru
      _
    // Predicated region
    $region26: #{agent2d_forward.1} parent=1 // pred_check
      _
    $region27: #{agent2d_forward.1} parent=1 // pred_check_branch
      %80 = sbr.rel (0) target = $region29
    $region28: #{agent2d_forward.1} parent=1 // pred_region
      _
    $region29: #{agent2d_forward.1} parent=1 // pred_fallthru
      _
    // Predicated region
    $region30: #{agent2d_forward.1} parent=1 // pred_check
      _
    $region31: #{agent2d_forward.1} parent=1 // pred_check_branch
      %82 = sbr.rel (0) target = $region33
    $region32: #{agent2d_forward.1} parent=1 // pred_region
      %s84 = ssub.s32 128, 128
      %85 = vsyncadd [#allocation8], %s84
      %s87 = sshll.u32 [#allocation9], 4
      %s88 = int_to_ptr.vmem [resolvable:$true] %s87
      %90 = dma.hbm_to_vmem [thread:$0]  %s7, 128, %s88, [#allocation8]
    $region33: #{agent2d_forward.1} parent=1 // pred_fallthru
      _
    // Predicated region
    $region34: #{agent2d_forward.1} parent=1 // pred_check
      _
    $region35: #{agent2d_forward.1} parent=1 // pred_check_branch
      %92 = sbr.rel (0) target = $region37
    $region36: #{agent2d_forward.1} parent=1 // pred_region
      %s94 = ssub.s32 32768, 32768
      %95 = vsyncadd [#allocation11], %s94
      %s96 = sshll.u32 [#allocation10], 4
      %s97 = int_to_ptr.vmem [resolvable:$true] %s96
      %102 = dma.hbm_to_vmem [thread:$0]  %s8, 32768, %s97, [#allocation11], 128, 128, 8
    $region37: #{agent2d_forward.1} parent=1 // pred_fallthru
      _
    // Predicated region
    $region38: #{agent2d_forward.1} parent=1 // pred_check
      _
    $region39: #{agent2d_forward.1} parent=1 // pred_check_branch
      %104 = sbr.rel (0) target = $region41
    $region40: #{agent2d_forward.1} parent=1 // pred_region
      _
    $region41: #{agent2d_forward.1} parent=1 // pred_fallthru
      _
    // Predicated region
    $region42: #{agent2d_forward.1} parent=1 // pred_check
      _
    $region43: #{agent2d_forward.1} parent=1 // pred_check_branch
      %106 = sbr.rel (0) target = $region45
    $region44: #{agent2d_forward.1} parent=1 // pred_region
      %s108 = ssub.s32 2048, 2048
      %109 = vsyncadd [#allocation11], %s108
      %s110 = sshll.u32 [#allocation12], 4
      %s111 = int_to_ptr.vmem [resolvable:$true] %s110
      %116 = dma.hbm_to_vmem [thread:$0]  %s10, 2048, %s111, [#allocation11], 64, 64, 4
    $region45: #{agent2d_forward.1} parent=1 // pred_fallthru
      _
    // Predicated region
    $region46: #{agent2d_forward.1} parent=1 // pred_check
      _
    $region47: #{agent2d_forward.1} parent=1 // pred_check_branch
      %118 = sbr.rel (0) target = $region49
    $region48: #{agent2d_forward.1} parent=1 // pred_region
      %s120 = ssub.s32 16, 16
      %121 = vsyncadd [#allocation14], %s120
      %s123 = sshll.u32 [#allocation13], 4
      %s124 = int_to_ptr.vmem [resolvable:$true] %s123
      %126 = dma.hbm_to_vmem [thread:$0]  %s11, 16, %s124, [#allocation14]
    $region49: #{agent2d_forward.1} parent=1 // pred_fallthru
      _
    // Predicated region
    $region50: #{agent2d_forward.1} parent=1 // pred_check
      _
    $region51: #{agent2d_forward.1} parent=1 // pred_check_branch
      %128 = sbr.rel (0) target = $region53
    $region52: #{agent2d_forward.1} parent=1 // pred_region
      %s130 = ssub.s32 1024, 1024
      %131 = vsyncadd [#allocation14], %s130
      %s132 = sshll.u32 [#allocation15], 4
      %s133 = int_to_ptr.vmem [resolvable:$true] %s132
      %138 = dma.hbm_to_vmem [thread:$0]  %s12, 1024, %s133, [#allocation14], 64, 64, 4
    $region53: #{agent2d_forward.1} parent=1 // pred_fallthru
      _
    // Predicated region
    $region54: #{agent2d_forward.1} parent=1 // pred_check
      _
    $region55: #{agent2d_forward.1} parent=1 // pred_check_branch
      %140 = sbr.rel (0) target = $region57
    $region56: #{agent2d_forward.1} parent=1 // pred_region
      %s142 = ssub.s32 16, 16
      %143 = vsyncadd [#allocation17], %s142
      %s145 = sshll.u32 [#allocation16], 4
      %s146 = int_to_ptr.vmem [resolvable:$true] %s145
      %148 = dma.hbm_to_vmem [thread:$0]  %s13, 16, %s146, [#allocation17]
    $region57: #{agent2d_forward.1} parent=1 // pred_fallthru
      _
    // Predicated region
    $region58: #{agent2d_forward.1} parent=1 // pred_check
      _
    $region59: #{agent2d_forward.1} parent=1 // pred_check_branch
      %150 = sbr.rel (0) target = $region61
    $region60: #{agent2d_forward.1} parent=1 // pred_region
      _
    $region61: #{agent2d_forward.1} parent=1 // pred_fallthru
      _
    // Predicated region
    $region62: #{agent2d_forward.1} parent=1 // pred_check
      _
    $region63: #{agent2d_forward.1} parent=1 // pred_check_branch
      %152 = sbr.rel (0) target = $region65
    $region64: #{agent2d_forward.1} parent=1 // pred_region
      %s154 = ssub.s32 16, 16
      %155 = vsyncadd [#allocation17], %s154
      %s157 = sshll.u32 [#allocation18], 4
      %s158 = int_to_ptr.vmem [resolvable:$true] %s157
      %160 = dma.hbm_to_vmem [thread:$0]  %s15, 16, %s158, [#allocation17]
    $region65: #{agent2d_forward.1} parent=1 // pred_fallthru
      _
    // Predicated region
    $region66: #{agent2d_forward.1} parent=1 // pred_check
      _
    $region67: #{agent2d_forward.1} parent=1 // pred_check_branch
      %162 = sbr.rel (0) target = $region69
    $region68: #{agent2d_forward.1} parent=1 // pred_region
      _
    $region69: #{agent2d_forward.1} parent=1 // pred_fallthru
      _
    // Predicated region
    $region70: #{agent2d_forward.1} parent=1 // pred_check
      _
    $region71: #{agent2d_forward.1} parent=1 // pred_check_branch
      %164 = sbr.rel (0) target = $region73
    $region72: #{agent2d_forward.1} parent=1 // pred_region
      _
    $region73: #{agent2d_forward.1} parent=1 // pred_fallthru
      _
    // Predicated region
    $region74: #{agent2d_forward.1} parent=1 // pred_check
      _
    $region75: #{agent2d_forward.1} parent=1 // pred_check_branch
      %166 = sbr.rel (0) target = $region77
    $region76: #{agent2d_forward.1} parent=1 // pred_region
      %167 = dma.done [#allocation3], 64
    $region77: #{agent2d_forward.1} parent=1 // pred_fallthru
      _
    // Predicated region
    $region78: #{agent2d_forward.1} parent=1 // pred_check
      _
    $region79: #{agent2d_forward.1} parent=1 // pred_check_branch
      %169 = sbr.rel (0) target = $region81
    $region80: #{agent2d_forward.1} parent=1 // pred_region
      %170 = dma.done [#allocation5], 16
    $region81: #{agent2d_forward.1} parent=1 // pred_fallthru
      _
    // Predicated region
    $region82: #{agent2d_forward.1} parent=1 // pred_check
      _
    $region83: #{agent2d_forward.1} parent=1 // pred_check_branch
      %172 = sbr.rel (0) target = $region85
    $region84: #{agent2d_forward.1} parent=1 // pred_region
      %173 = dma.done [#allocation5], 512
    $region85: #{agent2d_forward.1} parent=1 // pred_fallthru
      _
    // Predicated region
    $region86: #{agent2d_forward.1} parent=1 // pred_check
      _
    $region87: #{agent2d_forward.1} parent=1 // pred_check_branch
      %175 = sbr.rel (0) target = $region89
    $region88: #{agent2d_forward.1} parent=1 // pred_region
      %176 = dma.done [#allocation8], 16
    $region89: #{agent2d_forward.1} parent=1 // pred_fallthru
      _
    // Predicated region
    $region90: #{agent2d_forward.1} parent=1 // pred_check
      _
    $region91: #{agent2d_forward.1} parent=1 // pred_check_branch
      %178 = sbr.rel (0) target = $region93
    $region92: #{agent2d_forward.1} parent=1 // pred_region
      %179 = dma.done [#allocation8], 128
    $region93: #{agent2d_forward.1} parent=1 // pred_fallthru
      _
    // Predicated region
    $region94: #{agent2d_forward.1} parent=1 // pred_check
      _
    $region95: #{agent2d_forward.1} parent=1 // pred_check_branch
      %181 = sbr.rel (0) target = $region97
    $region96: #{agent2d_forward.1} parent=1 // pred_region
      %182 = dma.done [#allocation11], 32768
    $region97: #{agent2d_forward.1} parent=1 // pred_fallthru
      _
    // Predicated region
    $region98: #{agent2d_forward.1} parent=1 // pred_check
      _
    $region99: #{agent2d_forward.1} parent=1 // pred_check_branch
      %184 = sbr.rel (0) target = $region101
    $region100: #{agent2d_forward.1} parent=1 // pred_region
      %185 = dma.done [#allocation11], 2048
    $region101: #{agent2d_forward.1} parent=1 // pred_fallthru
      _
    // Predicated region
    $region102: #{agent2d_forward.1} parent=1 // pred_check
      _
    $region103: #{agent2d_forward.1} parent=1 // pred_check_branch
      %187 = sbr.rel (0) target = $region105
    $region104: #{agent2d_forward.1} parent=1 // pred_region
      %188 = dma.done [#allocation14], 16
    $region105: #{agent2d_forward.1} parent=1 // pred_fallthru
      _
    // Predicated region
    $region106: #{agent2d_forward.1} parent=1 // pred_check
      _
    $region107: #{agent2d_forward.1} parent=1 // pred_check_branch
      %190 = sbr.rel (0) target = $region109
    $region108: #{agent2d_forward.1} parent=1 // pred_region
      %191 = dma.done [#allocation14], 1024
    $region109: #{agent2d_forward.1} parent=1 // pred_fallthru
      _
    // Predicated region
    $region110: #{agent2d_forward.1} parent=1 // pred_check
      _
    $region111: #{agent2d_forward.1} parent=1 // pred_check_branch
      %193 = sbr.rel (0) target = $region113
    $region112: #{agent2d_forward.1} parent=1 // pred_region
      %194 = dma.done [#allocation17], 16
    $region113: #{agent2d_forward.1} parent=1 // pred_fallthru
      _
    // Predicated region
    $region114: #{agent2d_forward.1} parent=1 // pred_check
      _
    $region115: #{agent2d_forward.1} parent=1 // pred_check_branch
      %196 = sbr.rel (0) target = $region117
    $region116: #{agent2d_forward.1} parent=1 // pred_region
      %197 = dma.done [#allocation17], 16
    $region117: #{agent2d_forward.1} parent=1 // pred_fallthru
      _
    %v199 = vld [vmem:[%s0] sm:$0xff]
    %v200 = vld [vmem:[%s0 + $0x8] sm:$0xff]
    %v201 = vld [vmem:[%s0 + $0x10] sm:$0xff]
    %v202 = vld [vmem:[%s0 + $0x18] sm:$0xff]
    %v203 = vld [vmem:[%s0 + $0x20] sm:$0xff]
    %v204 = vld [vmem:[%s0 + $0x28] sm:$0xff]
    %v205 = vld [vmem:[%s0 + $0x30] sm:$0xff]
    %v206 = vld [vmem:[%s0 + $0x38] sm:$0xff]
    %v207 = vld [vmem:[%s0 + $0x40] sm:$0xff]
    %v208 = vld [vmem:[%s0 + $0x48] sm:$0xff]
    %v209 = vld [vmem:[%s0 + $0x50] sm:$0xff]
    %v210 = vld [vmem:[%s0 + $0x58] sm:$0xff]
    %v211 = vld [vmem:[%s0 + $0x60] sm:$0xff]
    %v212 = vld [vmem:[%s0 + $0x68] sm:$0xff]
    %v213 = vld [vmem:[%s0 + $0x70] sm:$0xff]
    %v214 = vld [vmem:[%s0 + $0x78] sm:$0xff]
    %v215 = vld [vmem:[%s1] sm:$0xff]
    %v216 = vld [vmem:[%s1 + $0x8] sm:$0xff]
    %v217 = vld [vmem:[%s1 + $0x10] sm:$0xff]
    %v218 = vld [vmem:[%s1 + $0x18] sm:$0xff]
    %v219 = vld [vmem:[%s1 + $0x20] sm:$0xff]
    %v220 = vld [vmem:[%s1 + $0x28] sm:$0xff]
    %v221 = vld [vmem:[%s1 + $0x30] sm:$0xff]
    %v222 = vld [vmem:[%s1 + $0x38] sm:$0xff]
    %v223 = vld [vmem:[%s1 + $0x40] sm:$0xff]
    %v224 = vld [vmem:[%s1 + $0x48] sm:$0xff]
    %v225 = vld [vmem:[%s1 + $0x50] sm:$0xff]
    %v226 = vld [vmem:[%s1 + $0x58] sm:$0xff]
    %v227 = vld [vmem:[%s1 + $0x60] sm:$0xff]
    %v228 = vld [vmem:[%s1 + $0x68] sm:$0xff]
    %v229 = vld [vmem:[%s1 + $0x70] sm:$0xff]
    %v230 = vld [vmem:[%s1 + $0x78] sm:$0xff]
    %v231 = vld [vmem:[#allocation2] sm:$0x7]
    %233 = vset.pattern.permute.xlu0 0
    %234 = vperm.xlu0 %233, %v199
    %v235 = vpop.permute.xlu0 %234
    %238 = vset.pattern.permute.xlu0 0
    %239 = vperm.xlu0 %238, %v200
    %v240 = vpop.permute.xlu0 %239
    %243 = vset.pattern.permute.xlu0 0
    %244 = vperm.xlu0 %243, %v201
    %v245 = vpop.permute.xlu0 %244
    %248 = vset.pattern.permute.xlu0 0
    %249 = vperm.xlu0 %248, %v202
    %v250 = vpop.permute.xlu0 %249
    %253 = vset.pattern.permute.xlu0 0
    %254 = vperm.xlu0 %253, %v203
    %v255 = vpop.permute.xlu0 %254
    %258 = vset.pattern.permute.xlu0 0
    %259 = vperm.xlu0 %258, %v204
    %v260 = vpop.permute.xlu0 %259
    %263 = vset.pattern.permute.xlu0 0
    %264 = vperm.xlu0 %263, %v205
    %v265 = vpop.permute.xlu0 %264
    %268 = vset.pattern.permute.xlu0 0
    %269 = vperm.xlu0 %268, %v206
    %v270 = vpop.permute.xlu0 %269
    %273 = vset.pattern.permute.xlu0 0
    %274 = vperm.xlu0 %273, %v207
    %v275 = vpop.permute.xlu0 %274
    %278 = vset.pattern.permute.xlu0 0
    %279 = vperm.xlu0 %278, %v208
    %v280 = vpop.permute.xlu0 %279
    %283 = vset.pattern.permute.xlu0 0
    %284 = vperm.xlu0 %283, %v209
    %v285 = vpop.permute.xlu0 %284
    %288 = vset.pattern.permute.xlu0 0
    %289 = vperm.xlu0 %288, %v210
    %v290 = vpop.permute.xlu0 %289
    %293 = vset.pattern.permute.xlu0 0
    %294 = vperm.xlu0 %293, %v211
    %v295 = vpop.permute.xlu0 %294
    %298 = vset.pattern.permute.xlu0 0
    %299 = vperm.xlu0 %298, %v212
    %v300 = vpop.permute.xlu0 %299
    %303 = vset.pattern.permute.xlu0 0
    %304 = vperm.xlu0 %303, %v213
    %v305 = vpop.permute.xlu0 %304
    %308 = vset.pattern.permute.xlu0 0
    %309 = vperm.xlu0 %308, %v214
    %v310 = vpop.permute.xlu0 %309
    %313 = vset.pattern.permute.xlu0 0
    %314 = vperm.xlu0 %313, %v215
    %v315 = vpop.permute.xlu0 %314
    %318 = vset.pattern.permute.xlu0 0
    %319 = vperm.xlu0 %318, %v216
    %v320 = vpop.permute.xlu0 %319
    %323 = vset.pattern.permute.xlu0 0
    %324 = vperm.xlu0 %323, %v217
    %v325 = vpop.permute.xlu0 %324
    %328 = vset.pattern.permute.xlu0 0
    %329 = vperm.xlu0 %328, %v218
    %v330 = vpop.permute.xlu0 %329
    %333 = vset.pattern.permute.xlu0 0
    %334 = vperm.xlu0 %333, %v219
    %v335 = vpop.permute.xlu0 %334
    %338 = vset.pattern.permute.xlu0 0
    %339 = vperm.xlu0 %338, %v220
    %v340 = vpop.permute.xlu0 %339
    %343 = vset.pattern.permute.xlu0 0
    %344 = vperm.xlu0 %343, %v221
    %v345 = vpop.permute.xlu0 %344
    %348 = vset.pattern.permute.xlu0 0
    %349 = vperm.xlu0 %348, %v222
    %v350 = vpop.permute.xlu0 %349
    %353 = vset.pattern.permute.xlu0 0
    %354 = vperm.xlu0 %353, %v223
    %v355 = vpop.permute.xlu0 %354
    %358 = vset.pattern.permute.xlu0 0
    %359 = vperm.xlu0 %358, %v224
    %v360 = vpop.permute.xlu0 %359
    %363 = vset.pattern.permute.xlu0 0
    %364 = vperm.xlu0 %363, %v225
    %v365 = vpop.permute.xlu0 %364
    %368 = vset.pattern.permute.xlu0 0
    %369 = vperm.xlu0 %368, %v226
    %v370 = vpop.permute.xlu0 %369
    %373 = vset.pattern.permute.xlu0 0
    %374 = vperm.xlu0 %373, %v227
    %v375 = vpop.permute.xlu0 %374
    %378 = vset.pattern.permute.xlu0 0
    %379 = vperm.xlu0 %378, %v228
    %v380 = vpop.permute.xlu0 %379
    %383 = vset.pattern.permute.xlu0 0
    %384 = vperm.xlu0 %383, %v229
    %v385 = vpop.permute.xlu0 %384
    %388 = vset.pattern.permute.xlu0 0
    %389 = vperm.xlu0 %388, %v230
    %v390 = vpop.permute.xlu0 %389
    %v392 = vlaneseq
    %v393 = vshrl.u32 %v392, 7
    %v394 = vsub.s32 0, %v393
    %v395 = vrot.slane %v231, %v394
    %v396 = vmul.f32 %v235, %v395
    %v397 = vmul.f32 %v240, %v395
    %v398 = vmul.f32 %v245, %v395
    %v399 = vmul.f32 %v250, %v395
    %v400 = vmul.f32 %v255, %v395
    %v401 = vmul.f32 %v260, %v395
    %v402 = vmul.f32 %v265, %v395
    %v403 = vmul.f32 %v270, %v395
    %v404 = vmul.f32 %v275, %v395
    %v405 = vmul.f32 %v280, %v395
    %v406 = vmul.f32 %v285, %v395
    %v407 = vmul.f32 %v290, %v395
    %v408 = vmul.f32 %v295, %v395
    %v409 = vmul.f32 %v300, %v395
    %v410 = vmul.f32 %v305, %v395
    %v411 = vmul.f32 %v310, %v395
    %v412 = vmul.f32 %v315, %v395
    %v413 = vmul.f32 %v320, %v395
    %v414 = vmul.f32 %v325, %v395
    %v415 = vmul.f32 %v330, %v395
    %v416 = vmul.f32 %v335, %v395
    %v417 = vmul.f32 %v340, %v395
    %v418 = vmul.f32 %v345, %v395
    %v419 = vmul.f32 %v350, %v395
    %v420 = vmul.f32 %v355, %v395
    %v421 = vmul.f32 %v360, %v395
    %v422 = vmul.f32 %v365, %v395
    %v423 = vmul.f32 %v370, %v395
    %v424 = vmul.f32 %v375, %v395
    %v425 = vmul.f32 %v380, %v395
    %v426 = vmul.f32 %v385, %v395
    %v427 = vmul.f32 %v390, %v395
    %428 = vset.pattern.permute.xlu0 1
    %429 = vperm.xlu0 %428, %v199
    %v430 = vpop.permute.xlu0 %429
    %432 = vset.pattern.permute.xlu0 1
    %433 = vperm.xlu0 %432, %v200
    %v434 = vpop.permute.xlu0 %433
    %436 = vset.pattern.permute.xlu0 1
    %437 = vperm.xlu0 %436, %v201
    %v438 = vpop.permute.xlu0 %437
    %440 = vset.pattern.permute.xlu0 1
    %441 = vperm.xlu0 %440, %v202
    %v442 = vpop.permute.xlu0 %441
    %444 = vset.pattern.permute.xlu0 1
    %445 = vperm.xlu0 %444, %v203
    %v446 = vpop.permute.xlu0 %445
    %448 = vset.pattern.permute.xlu0 1
    %449 = vperm.xlu0 %448, %v204
    %v450 = vpop.permute.xlu0 %449
    %452 = vset.pattern.permute.xlu0 1
    %453 = vperm.xlu0 %452, %v205
    %v454 = vpop.permute.xlu0 %453
    %456 = vset.pattern.permute.xlu0 1
    %457 = vperm.xlu0 %456, %v206
    %v458 = vpop.permute.xlu0 %457
    %460 = vset.pattern.permute.xlu0 1
    %461 = vperm.xlu0 %460, %v207
    %v462 = vpop.permute.xlu0 %461
    %464 = vset.pattern.permute.xlu0 1
    %465 = vperm.xlu0 %464, %v208
    %v466 = vpop.permute.xlu0 %465
    %468 = vset.pattern.permute.xlu0 1
    %469 = vperm.xlu0 %468, %v209
    %v470 = vpop.permute.xlu0 %469
    %472 = vset.pattern.permute.xlu0 1
    %473 = vperm.xlu0 %472, %v210
    %v474 = vpop.permute.xlu0 %473
    %476 = vset.pattern.permute.xlu0 1
    %477 = vperm.xlu0 %476, %v211
    %v478 = vpop.permute.xlu0 %477
    %480 = vset.pattern.permute.xlu0 1
    %481 = vperm.xlu0 %480, %v212
    %v482 = vpop.permute.xlu0 %481
    %484 = vset.pattern.permute.xlu0 1
    %485 = vperm.xlu0 %484, %v213
    %v486 = vpop.permute.xlu0 %485
    %488 = vset.pattern.permute.xlu0 1
    %489 = vperm.xlu0 %488, %v214
    %v490 = vpop.permute.xlu0 %489
    %492 = vset.pattern.permute.xlu0 1
    %493 = vperm.xlu0 %492, %v215
    %v494 = vpop.permute.xlu0 %493
    %496 = vset.pattern.permute.xlu0 1
    %497 = vperm.xlu0 %496, %v216
    %v498 = vpop.permute.xlu0 %497
    %500 = vset.pattern.permute.xlu0 1
    %501 = vperm.xlu0 %500, %v217
    %v502 = vpop.permute.xlu0 %501
    %504 = vset.pattern.permute.xlu0 1
    %505 = vperm.xlu0 %504, %v218
    %v506 = vpop.permute.xlu0 %505
    %508 = vset.pattern.permute.xlu0 1
    %509 = vperm.xlu0 %508, %v219
    %v510 = vpop.permute.xlu0 %509
    %512 = vset.pattern.permute.xlu0 1
    %513 = vperm.xlu0 %512, %v220
    %v514 = vpop.permute.xlu0 %513
    %516 = vset.pattern.permute.xlu0 1
    %517 = vperm.xlu0 %516, %v221
    %v518 = vpop.permute.xlu0 %517
    %520 = vset.pattern.permute.xlu0 1
    %521 = vperm.xlu0 %520, %v222
    %v522 = vpop.permute.xlu0 %521
    %524 = vset.pattern.permute.xlu0 1
    %525 = vperm.xlu0 %524, %v223
    %v526 = vpop.permute.xlu0 %525
    %528 = vset.pattern.permute.xlu0 1
    %529 = vperm.xlu0 %528, %v224
    %v530 = vpop.permute.xlu0 %529
    %532 = vset.pattern.permute.xlu0 1
    %533 = vperm.xlu0 %532, %v225
    %v534 = vpop.permute.xlu0 %533
    %536 = vset.pattern.permute.xlu0 1
    %537 = vperm.xlu0 %536, %v226
    %v538 = vpop.permute.xlu0 %537
    %540 = vset.pattern.permute.xlu0 1
    %541 = vperm.xlu0 %540, %v227
    %v542 = vpop.permute.xlu0 %541
    %544 = vset.pattern.permute.xlu0 1
    %545 = vperm.xlu0 %544, %v228
    %v546 = vpop.permute.xlu0 %545
    %548 = vset.pattern.permute.xlu0 1
    %549 = vperm.xlu0 %548, %v229
    %v550 = vpop.permute.xlu0 %549
    %552 = vset.pattern.permute.xlu0 1
    %553 = vperm.xlu0 %552, %v230
    %v554 = vpop.permute.xlu0 %553
    %v556 = vlaneseq
    %v557 = vshrl.u32 %v556, 7
    %v558 = vsub.s32 1, %v557
    %v559 = vrot.slane %v231, %v558
    %v560 = vmul.f32 %v430, %v559
    %v561 = vmul.f32 %v434, %v559
    %v562 = vmul.f32 %v438, %v559
    %v563 = vmul.f32 %v442, %v559
    %v564 = vmul.f32 %v446, %v559
    %v565 = vmul.f32 %v450, %v559
    %v566 = vmul.f32 %v454, %v559
    %v567 = vmul.f32 %v458, %v559
    %v568 = vmul.f32 %v462, %v559
    %v569 = vmul.f32 %v466, %v559
    %v570 = vmul.f32 %v470, %v559
    %v571 = vmul.f32 %v474, %v559
    %v572 = vmul.f32 %v478, %v559
    %v573 = vmul.f32 %v482, %v559
    %v574 = vmul.f32 %v486, %v559
    %v575 = vmul.f32 %v490, %v559
    %v576 = vmul.f32 %v494, %v559
    %v577 = vmul.f32 %v498, %v559
    %v578 = vmul.f32 %v502, %v559
    %v579 = vmul.f32 %v506, %v559
    %v580 = vmul.f32 %v510, %v559
    %v581 = vmul.f32 %v514, %v559
    %v582 = vmul.f32 %v518, %v559
    %v583 = vmul.f32 %v522, %v559
    %v584 = vmul.f32 %v526, %v559
    %v585 = vmul.f32 %v530, %v559
    %v586 = vmul.f32 %v534, %v559
    %v587 = vmul.f32 %v538, %v559
    %v588 = vmul.f32 %v542, %v559
    %v589 = vmul.f32 %v546, %v559
    %v590 = vmul.f32 %v550, %v559
    %v591 = vmul.f32 %v554, %v559
    %v592 = vadd.f32 %v396, %v560
    %v593 = vadd.f32 %v397, %v561
    %v594 = vadd.f32 %v398, %v562
    %v595 = vadd.f32 %v399, %v563
    %v596 = vadd.f32 %v400, %v564
    %v597 = vadd.f32 %v401, %v565
    %v598 = vadd.f32 %v402, %v566
    %v599 = vadd.f32 %v403, %v567
    %v600 = vadd.f32 %v404, %v568
    %v601 = vadd.f32 %v405, %v569
    %v602 = vadd.f32 %v406, %v570
    %v603 = vadd.f32 %v407, %v571
    %v604 = vadd.f32 %v408, %v572
    %v605 = vadd.f32 %v409, %v573
    %v606 = vadd.f32 %v410, %v574
    %v607 = vadd.f32 %v411, %v575
    %v608 = vadd.f32 %v412, %v576
    %v609 = vadd.f32 %v413, %v577
    %v610 = vadd.f32 %v414, %v578
    %v611 = vadd.f32 %v415, %v579
    %v612 = vadd.f32 %v416, %v580
    %v613 = vadd.f32 %v417, %v581
    %v614 = vadd.f32 %v418, %v582
    %v615 = vadd.f32 %v419, %v583
    %v616 = vadd.f32 %v420, %v584
    %v617 = vadd.f32 %v421, %v585
    %v618 = vadd.f32 %v422, %v586
    %v619 = vadd.f32 %v423, %v587
    %v620 = vadd.f32 %v424, %v588
    %v621 = vadd.f32 %v425, %v589
    %v622 = vadd.f32 %v426, %v590
    %v623 = vadd.f32 %v427, %v591
    %624 = vset.pattern.permute.xlu0 2
    %625 = vperm.xlu0 %624, %v199
    %v626 = vpop.permute.xlu0 %625
    %628 = vset.pattern.permute.xlu0 2
    %629 = vperm.xlu0 %628, %v200
    %v630 = vpop.permute.xlu0 %629
    %632 = vset.pattern.permute.xlu0 2
    %633 = vperm.xlu0 %632, %v201
    %v634 = vpop.permute.xlu0 %633
    %636 = vset.pattern.permute.xlu0 2
    %637 = vperm.xlu0 %636, %v202
    %v638 = vpop.permute.xlu0 %637
    %640 = vset.pattern.permute.xlu0 2
    %641 = vperm.xlu0 %640, %v203
    %v642 = vpop.permute.xlu0 %641
    %644 = vset.pattern.permute.xlu0 2
    %645 = vperm.xlu0 %644, %v204
    %v646 = vpop.permute.xlu0 %645
    %648 = vset.pattern.permute.xlu0 2
    %649 = vperm.xlu0 %648, %v205
    %v650 = vpop.permute.xlu0 %649
    %652 = vset.pattern.permute.xlu0 2
    %653 = vperm.xlu0 %652, %v206
    %v654 = vpop.permute.xlu0 %653
    %656 = vset.pattern.permute.xlu0 2
    %657 = vperm.xlu0 %656, %v207
    %v658 = vpop.permute.xlu0 %657
    %660 = vset.pattern.permute.xlu0 2
    %661 = vperm.xlu0 %660, %v208
    %v662 = vpop.permute.xlu0 %661
    %664 = vset.pattern.permute.xlu0 2
    %665 = vperm.xlu0 %664, %v209
    %v666 = vpop.permute.xlu0 %665
    %668 = vset.pattern.permute.xlu0 2
    %669 = vperm.xlu0 %668, %v210
    %v670 = vpop.permute.xlu0 %669
    %672 = vset.pattern.permute.xlu0 2
    %673 = vperm.xlu0 %672, %v211
    %v674 = vpop.permute.xlu0 %673
    %676 = vset.pattern.permute.xlu0 2
    %677 = vperm.xlu0 %676, %v212
    %v678 = vpop.permute.xlu0 %677
    %680 = vset.pattern.permute.xlu0 2
    %681 = vperm.xlu0 %680, %v213
    %v682 = vpop.permute.xlu0 %681
    %684 = vset.pattern.permute.xlu0 2
    %685 = vperm.xlu0 %684, %v214
    %v686 = vpop.permute.xlu0 %685
    %688 = vset.pattern.permute.xlu0 2
    %689 = vperm.xlu0 %688, %v215
    %v690 = vpop.permute.xlu0 %689
    %692 = vset.pattern.permute.xlu0 2
    %693 = vperm.xlu0 %692, %v216
    %v694 = vpop.permute.xlu0 %693
    %696 = vset.pattern.permute.xlu0 2
    %697 = vperm.xlu0 %696, %v217
    %v698 = vpop.permute.xlu0 %697
    %700 = vset.pattern.permute.xlu0 2
    %701 = vperm.xlu0 %700, %v218
    %v702 = vpop.permute.xlu0 %701
    %704 = vset.pattern.permute.xlu0 2
    %705 = vperm.xlu0 %704, %v219
    %v706 = vpop.permute.xlu0 %705
    %708 = vset.pattern.permute.xlu0 2
    %709 = vperm.xlu0 %708, %v220
    %v710 = vpop.permute.xlu0 %709
    %712 = vset.pattern.permute.xlu0 2
    %713 = vperm.xlu0 %712, %v221
    %v714 = vpop.permute.xlu0 %713
    %716 = vset.pattern.permute.xlu0 2
    %717 = vperm.xlu0 %716, %v222
    %v718 = vpop.permute.xlu0 %717
    %720 = vset.pattern.permute.xlu0 2
    %721 = vperm.xlu0 %720, %v223
    %v722 = vpop.permute.xlu0 %721
    %724 = vset.pattern.permute.xlu0 2
    %725 = vperm.xlu0 %724, %v224
    %v726 = vpop.permute.xlu0 %725
    %728 = vset.pattern.permute.xlu0 2
    %729 = vperm.xlu0 %728, %v225
    %v730 = vpop.permute.xlu0 %729
    %732 = vset.pattern.permute.xlu0 2
    %733 = vperm.xlu0 %732, %v226
    %v734 = vpop.permute.xlu0 %733
    %736 = vset.pattern.permute.xlu0 2
    %737 = vperm.xlu0 %736, %v227
    %v738 = vpop.permute.xlu0 %737
    %740 = vset.pattern.permute.xlu0 2
    %741 = vperm.xlu0 %740, %v228
    %v742 = vpop.permute.xlu0 %741
    %744 = vset.pattern.permute.xlu0 2
    %745 = vperm.xlu0 %744, %v229
    %v746 = vpop.permute.xlu0 %745
    %748 = vset.pattern.permute.xlu0 2
    %749 = vperm.xlu0 %748, %v230
    %v750 = vpop.permute.xlu0 %749
    %v752 = vlaneseq
    %v753 = vshrl.u32 %v752, 7
    %v754 = vsub.s32 2, %v753
    %v755 = vrot.slane %v231, %v754
    %v756 = vmul.f32 %v626, %v755
    %v757 = vmul.f32 %v630, %v755
    %v758 = vmul.f32 %v634, %v755
    %v759 = vmul.f32 %v638, %v755
    %v760 = vmul.f32 %v642, %v755
    %v761 = vmul.f32 %v646, %v755
    %v762 = vmul.f32 %v650, %v755
    %v763 = vmul.f32 %v654, %v755
    %v764 = vmul.f32 %v658, %v755
    %v765 = vmul.f32 %v662, %v755
    %v766 = vmul.f32 %v666, %v755
    %v767 = vmul.f32 %v670, %v755
    %v768 = vmul.f32 %v674, %v755
    %v769 = vmul.f32 %v678, %v755
    %v770 = vmul.f32 %v682, %v755
    %v771 = vmul.f32 %v686, %v755
    %v772 = vmul.f32 %v690, %v755
    %v773 = vmul.f32 %v694, %v755
    %v774 = vmul.f32 %v698, %v755
    %v775 = vmul.f32 %v702, %v755
    %v776 = vmul.f32 %v706, %v755
    %v777 = vmul.f32 %v710, %v755
    %v778 = vmul.f32 %v714, %v755
    %v779 = vmul.f32 %v718, %v755
    %v780 = vmul.f32 %v722, %v755
    %v781 = vmul.f32 %v726, %v755
    %v782 = vmul.f32 %v730, %v755
    %v783 = vmul.f32 %v734, %v755
    %v784 = vmul.f32 %v738, %v755
    %v785 = vmul.f32 %v742, %v755
    %v786 = vmul.f32 %v746, %v755
    %v787 = vmul.f32 %v750, %v755
    %v788 = vadd.f32 %v592, %v756
    %v789 = vadd.f32 %v593, %v757
    %v790 = vadd.f32 %v594, %v758
    %v791 = vadd.f32 %v595, %v759
    %v792 = vadd.f32 %v596, %v760
    %v793 = vadd.f32 %v597, %v761
    %v794 = vadd.f32 %v598, %v762
    %v795 = vadd.f32 %v599, %v763
    %v796 = vadd.f32 %v600, %v764
    %v797 = vadd.f32 %v601, %v765
    %v798 = vadd.f32 %v602, %v766
    %v799 = vadd.f32 %v603, %v767
    %v800 = vadd.f32 %v604, %v768
    %v801 = vadd.f32 %v605, %v769
    %v802 = vadd.f32 %v606, %v770
    %v803 = vadd.f32 %v607, %v771
    %v804 = vadd.f32 %v608, %v772
    %v805 = vadd.f32 %v609, %v773
    %v806 = vadd.f32 %v610, %v774
    %v807 = vadd.f32 %v611, %v775
    %v808 = vadd.f32 %v612, %v776
    %v809 = vadd.f32 %v613, %v777
    %v810 = vadd.f32 %v614, %v778
    %v811 = vadd.f32 %v615, %v779
    %v812 = vadd.f32 %v616, %v780
    %v813 = vadd.f32 %v617, %v781
    %v814 = vadd.f32 %v618, %v782
    %v815 = vadd.f32 %v619, %v783
    %v816 = vadd.f32 %v620, %v784
    %v817 = vadd.f32 %v621, %v785
    %v818 = vadd.f32 %v622, %v786
    %v819 = vadd.f32 %v623, %v787
    %v820 = vld [vmem:[#allocation4] sm:$0x1]
    %v822 = vlaneseq
    %v823 = vshrl.u32 %v822, 7
    %v824 = vsub.s32 0, %v823
    %v825 = vrot.slane %v820, %v824
    %v827 = vadd.f32 %v788, %v825
    %v828 = vadd.f32 %v789, %v825
    %v829 = vadd.f32 %v790, %v825
    %v830 = vadd.f32 %v791, %v825
    %v831 = vadd.f32 %v792, %v825
    %v832 = vadd.f32 %v793, %v825
    %v833 = vadd.f32 %v794, %v825
    %v834 = vadd.f32 %v795, %v825
    %v835 = vadd.f32 %v796, %v825
    %v836 = vadd.f32 %v797, %v825
    %v837 = vadd.f32 %v798, %v825
    %v838 = vadd.f32 %v799, %v825
    %v839 = vadd.f32 %v800, %v825
    %v840 = vadd.f32 %v801, %v825
    %v841 = vadd.f32 %v802, %v825
    %v842 = vadd.f32 %v803, %v825
    %v843 = vadd.f32 %v804, %v825
    %v844 = vadd.f32 %v805, %v825
    %v845 = vadd.f32 %v806, %v825
    %v846 = vadd.f32 %v807, %v825
    %v847 = vadd.f32 %v808, %v825
    %v848 = vadd.f32 %v809, %v825
    %v849 = vadd.f32 %v810, %v825
    %v850 = vadd.f32 %v811, %v825
    %v851 = vadd.f32 %v812, %v825
    %v852 = vadd.f32 %v813, %v825
    %v853 = vadd.f32 %v814, %v825
    %v854 = vadd.f32 %v815, %v825
    %v855 = vadd.f32 %v816, %v825
    %v856 = vadd.f32 %v817, %v825
    %v857 = vadd.f32 %v818, %v825
    %v858 = vadd.f32 %v819, %v825
    %v859 = vmax.f32 %v827, 0.0
    %v860 = vmax.f32 %v828, 0.0
    %v861 = vmax.f32 %v829, 0.0
    %v862 = vmax.f32 %v830, 0.0
    %v863 = vmax.f32 %v831, 0.0
    %v864 = vmax.f32 %v832, 0.0
    %v865 = vmax.f32 %v833, 0.0
    %v866 = vmax.f32 %v834, 0.0
    %v867 = vmax.f32 %v835, 0.0
    %v868 = vmax.f32 %v836, 0.0
    %v869 = vmax.f32 %v837, 0.0
    %v870 = vmax.f32 %v838, 0.0
    %v871 = vmax.f32 %v839, 0.0
    %v872 = vmax.f32 %v840, 0.0
    %v873 = vmax.f32 %v841, 0.0
    %v874 = vmax.f32 %v842, 0.0
    %v875 = vmax.f32 %v843, 0.0
    %v876 = vmax.f32 %v844, 0.0
    %v877 = vmax.f32 %v845, 0.0
    %v878 = vmax.f32 %v846, 0.0
    %v879 = vmax.f32 %v847, 0.0
    %v880 = vmax.f32 %v848, 0.0
    %v881 = vmax.f32 %v849, 0.0
    %v882 = vmax.f32 %v850, 0.0
    %v883 = vmax.f32 %v851, 0.0
    %v884 = vmax.f32 %v852, 0.0
    %v885 = vmax.f32 %v853, 0.0
    %v886 = vmax.f32 %v854, 0.0
    %v887 = vmax.f32 %v855, 0.0
    %v888 = vmax.f32 %v856, 0.0
    %v889 = vmax.f32 %v857, 0.0
    %v890 = vmax.f32 %v858, 0.0
    %v891 = vpack.c.bf16 %v860, %v859
    %v892 = vpack.c.bf16 %v862, %v861
    %v893 = vpack.c.bf16 %v864, %v863
    %v894 = vpack.c.bf16 %v866, %v865
    %v895 = vpack.c.bf16 %v868, %v867
    %v896 = vpack.c.bf16 %v870, %v869
    %v897 = vpack.c.bf16 %v872, %v871
    %v898 = vpack.c.bf16 %v874, %v873
    %v899 = vpack.c.bf16 %v876, %v875
    %v900 = vpack.c.bf16 %v878, %v877
    %v901 = vpack.c.bf16 %v880, %v879
    %v902 = vpack.c.bf16 %v882, %v881
    %v903 = vpack.c.bf16 %v884, %v883
    %v904 = vpack.c.bf16 %v886, %v885
    %v905 = vpack.c.bf16 %v888, %v887
    %v906 = vpack.c.bf16 %v890, %v889
    %v907 = vld [vmem:[#allocation6] sm:$0xf]
    %v908 = vld [vmem:[#allocation6 + $0x4] sm:$0xf]
    %v909 = vld [vmem:[#allocation6 + $0x8] sm:$0xf]
    %v910 = vld [vmem:[#allocation6 + $0xc] sm:$0xf]
    %v911 = vld [vmem:[#allocation6 + $0x10] sm:$0xf]
    %v912 = vld [vmem:[#allocation6 + $0x14] sm:$0xf]
    %v913 = vld [vmem:[#allocation6 + $0x18] sm:$0xf]
    %v914 = vld [vmem:[#allocation6 + $0x1c] sm:$0xf]
    %v915 = vld [vmem:[#allocation7] sm:$0x1]
    %v917 = vlaneseq
    %v918 = vshrl.u32 %v917, 7
    %v919 = vsub.s32 0, %v918
    %v920 = vrot.slane %v915, %v919
    %v930 = vunpack.c.l.b16 %v907
    %v931 = vunpack.c.l.b16 %v908
    %v932 = vunpack.c.l.b16 %v909
    %v933 = vunpack.c.l.b16 %v910
    %v934 = vunpack.c.l.b16 %v911
    %v935 = vunpack.c.l.b16 %v912
    %v936 = vunpack.c.l.b16 %v913
    %v937 = vunpack.c.l.b16 %v914
    %v938 = vpack.c.b16 %v931, %v930
    %v939 = vpack.c.b16 %v933, %v932
    %v940 = vpack.c.b16 %v935, %v934
    %v941 = vpack.c.b16 %v937, %v936
    %vm946 = vcmask 523264
    %v948 = vsel %vm946, %v891, 0
    %v951 = vsel %vm946, %v892, 0
    %v954 = vsel %vm946, %v893, 0
    %v957 = vsel %vm946, %v894, 0
    %v960 = vsel %vm946, %v895, 0
    %v963 = vsel %vm946, %v896, 0
    %v966 = vsel %vm946, %v897, 0
    %v969 = vsel %vm946, %v898, 0
    %v972 = vsel %vm946, %v899, 0
    %v975 = vsel %vm946, %v900, 0
    %v978 = vsel %vm946, %v901, 0
    %v981 = vsel %vm946, %v902, 0
    %v984 = vsel %vm946, %v903, 0
    %v987 = vsel %vm946, %v904, 0
    %v990 = vsel %vm946, %v905, 0
    %v993 = vsel %vm946, %v906, 0
    %995 = vmatprep.subr.bf16.mxu0 0
    %996 = vmatpush1.bf16.msra.mxu0 %v938
    %997 = vmatprep.subr.bf16.mxu0 0
    %998 = vmatpush1.bf16.msra.mxu0 %v939
    %999 = vmatprep.subr.bf16.mxu0 0
    %1000 = vmatpush1.bf16.msra.mxu0 %v940
    %1001 = vmatprep.subr.bf16.mxu0 0
    %1002 = vmatpush1.bf16.msra.mxu0 %v941
    %1003 = vmatprep.subr.bf16.mxu0 0
    %1004 = vmatpush1.bf16.msra.mxu0 0
    %1005 = vmatprep.subr.bf16.mxu0 0
    %1006 = vmatpush1.bf16.msra.mxu0 0
    %1007 = vmatprep.subr.bf16.mxu0 0
    %1008 = vmatpush1.bf16.msra.mxu0 0
    %1009 = vmatprep.subr.bf16.mxu0 0
    %1010 = vmatpush1.bf16.msra.mxu0 0
    %1011 = vmatprep.subr.bf16.mxu0 0
    %1012 = vmatpush1.bf16.msra.mxu0 0
    %1013 = vmatprep.subr.bf16.mxu0 0
    %1014 = vmatpush1.bf16.msra.mxu0 0
    %1015 = vmatprep.subr.bf16.mxu0 0
    %1016 = vmatpush1.bf16.msra.mxu0 0
    %1017 = vmatprep.subr.bf16.mxu0 0
    %1018 = vmatpush1.bf16.msra.mxu0 0
    %1019 = vmatprep.subr.bf16.mxu0 0
    %1020 = vmatpush1.bf16.msra.mxu0 0
    %1021 = vmatprep.subr.bf16.mxu0 0
    %1022 = vmatpush1.bf16.msra.mxu0 0
    %1023 = vmatprep.subr.bf16.mxu0 0
    %1024 = vmatpush1.bf16.msra.mxu0 0
    %1025 = vmatprep.subr.bf16.mxu0 0
    %1026 = vmatpush1.bf16.msra.mxu0 0
    %1027 = vmatprep.mubr.bf16.mxu0 0
    %1028 = vmatmul.mubr.bf16.gmra.mrb[0].mxu0 %v948
    %v1029 = vpop.f32.mrb[0].mxu0
    %v1030 = vadd.f32 %v920, %v1029
    %v1031 = vpop.f32.mrb[0].mxu0
    %v1032 = vpop.f32.mrb[0].mxu0
    %v1033 = vadd.f32 %v920, %v1032
    %v1034 = vpop.f32.mrb[0].mxu0
    %1035 = vmatprep.mubr.bf16.mxu0 0
    %1036 = vmatmul.mubr.bf16.gmra.mrb[0].mxu0 %v951
    %v1037 = vpop.f32.mrb[0].mxu0
    %v1038 = vadd.f32 %v920, %v1037
    %v1039 = vpop.f32.mrb[0].mxu0
    %v1040 = vpop.f32.mrb[0].mxu0
    %v1041 = vadd.f32 %v920, %v1040
    %v1042 = vpop.f32.mrb[0].mxu0
    %1043 = vmatprep.mubr.bf16.mxu0 0
    %1044 = vmatmul.mubr.bf16.gmra.mrb[0].mxu0 %v954
    %v1045 = vpop.f32.mrb[0].mxu0
    %v1046 = vadd.f32 %v920, %v1045
    %v1047 = vpop.f32.mrb[0].mxu0
    %v1048 = vpop.f32.mrb[0].mxu0
    %v1049 = vadd.f32 %v920, %v1048
    %v1050 = vpop.f32.mrb[0].mxu0
    %1051 = vmatprep.mubr.bf16.mxu0 0
    %1052 = vmatmul.mubr.bf16.gmra.mrb[0].mxu0 %v957
    %v1053 = vpop.f32.mrb[0].mxu0
    %v1054 = vadd.f32 %v920, %v1053
    %v1055 = vpop.f32.mrb[0].mxu0
    %v1056 = vpop.f32.mrb[0].mxu0
    %v1057 = vadd.f32 %v920, %v1056
    %v1058 = vpop.f32.mrb[0].mxu0
    %1059 = vmatprep.mubr.bf16.mxu0 0
    %1060 = vmatmul.mubr.bf16.gmra.mrb[0].mxu0 %v960
    %v1061 = vpop.f32.mrb[0].mxu0
    %v1062 = vadd.f32 %v920, %v1061
    %v1063 = vpop.f32.mrb[0].mxu0
    %v1064 = vpop.f32.mrb[0].mxu0
    %v1065 = vadd.f32 %v920, %v1064
    %v1066 = vpop.f32.mrb[0].mxu0
    %1067 = vmatprep.mubr.bf16.mxu0 0
    %1068 = vmatmul.mubr.bf16.gmra.mrb[0].mxu0 %v963
    %v1069 = vpop.f32.mrb[0].mxu0
    %v1070 = vadd.f32 %v920, %v1069
    %v1071 = vpop.f32.mrb[0].mxu0
    %v1072 = vpop.f32.mrb[0].mxu0
    %v1073 = vadd.f32 %v920, %v1072
    %v1074 = vpop.f32.mrb[0].mxu0
    %1075 = vmatprep.mubr.bf16.mxu0 0
    %1076 = vmatmul.mubr.bf16.gmra.mrb[0].mxu0 %v966
    %v1077 = vpop.f32.mrb[0].mxu0
    %v1078 = vadd.f32 %v920, %v1077
    %v1079 = vpop.f32.mrb[0].mxu0
    %v1080 = vpop.f32.mrb[0].mxu0
    %v1081 = vadd.f32 %v920, %v1080
    %v1082 = vpop.f32.mrb[0].mxu0
    %1083 = vmatprep.mubr.bf16.mxu0 0
    %1084 = vmatmul.mubr.bf16.gmra.mrb[0].mxu0 %v969
    %v1085 = vpop.f32.mrb[0].mxu0
    %v1086 = vadd.f32 %v920, %v1085
    %v1087 = vpop.f32.mrb[0].mxu0
    %v1088 = vpop.f32.mrb[0].mxu0
    %v1089 = vadd.f32 %v920, %v1088
    %v1090 = vpop.f32.mrb[0].mxu0
    %1091 = vmatprep.mubr.bf16.mxu0 0
    %1092 = vmatmul.mubr.bf16.gmra.mrb[0].mxu0 %v972
    %v1093 = vpop.f32.mrb[0].mxu0
    %v1094 = vadd.f32 %v920, %v1093
    %v1095 = vpop.f32.mrb[0].mxu0
    %v1096 = vpop.f32.mrb[0].mxu0
    %v1097 = vadd.f32 %v920, %v1096
    %v1098 = vpop.f32.mrb[0].mxu0
    %1099 = vmatprep.mubr.bf16.mxu0 0
    %1100 = vmatmul.mubr.bf16.gmra.mrb[0].mxu0 %v975
    %v1101 = vpop.f32.mrb[0].mxu0
    %v1102 = vadd.f32 %v920, %v1101
    %v1103 = vpop.f32.mrb[0].mxu0
    %v1104 = vpop.f32.mrb[0].mxu0
    %v1105 = vadd.f32 %v920, %v1104
    %v1106 = vpop.f32.mrb[0].mxu0
    %1107 = vmatprep.mubr.bf16.mxu0 0
    %1108 = vmatmul.mubr.bf16.gmra.mrb[0].mxu0 %v978
    %v1109 = vpop.f32.mrb[0].mxu0
    %v1110 = vadd.f32 %v920, %v1109
    %v1111 = vpop.f32.mrb[0].mxu0
    %v1112 = vpop.f32.mrb[0].mxu0
    %v1113 = vadd.f32 %v920, %v1112
    %v1114 = vpop.f32.mrb[0].mxu0
    %1115 = vmatprep.mubr.bf16.mxu0 0
    %1116 = vmatmul.mubr.bf16.gmra.mrb[0].mxu0 %v981
    %v1117 = vpop.f32.mrb[0].mxu0
    %v1118 = vadd.f32 %v920, %v1117
    %v1119 = vpop.f32.mrb[0].mxu0
    %v1120 = vpop.f32.mrb[0].mxu0
    %v1121 = vadd.f32 %v920, %v1120
    %v1122 = vpop.f32.mrb[0].mxu0
    %1123 = vmatprep.mubr.bf16.mxu0 0
    %1124 = vmatmul.mubr.bf16.gmra.mrb[0].mxu0 %v984
    %v1125 = vpop.f32.mrb[0].mxu0
    %v1126 = vadd.f32 %v920, %v1125
    %v1127 = vpop.f32.mrb[0].mxu0
    %v1128 = vpop.f32.mrb[0].mxu0
    %v1129 = vadd.f32 %v920, %v1128
    %v1130 = vpop.f32.mrb[0].mxu0
    %1131 = vmatprep.mubr.bf16.mxu0 0
    %1132 = vmatmul.mubr.bf16.gmra.mrb[0].mxu0 %v987
    %v1133 = vpop.f32.mrb[0].mxu0
    %v1134 = vadd.f32 %v920, %v1133
    %v1135 = vpop.f32.mrb[0].mxu0
    %v1136 = vpop.f32.mrb[0].mxu0
    %v1137 = vadd.f32 %v920, %v1136
    %v1138 = vpop.f32.mrb[0].mxu0
    %1139 = vmatprep.mubr.bf16.mxu0 0
    %1140 = vmatmul.mubr.bf16.gmra.mrb[0].mxu0 %v990
    %v1141 = vpop.f32.mrb[0].mxu0
    %v1142 = vadd.f32 %v920, %v1141
    %v1143 = vpop.f32.mrb[0].mxu0
    %v1144 = vpop.f32.mrb[0].mxu0
    %v1145 = vadd.f32 %v920, %v1144
    %v1146 = vpop.f32.mrb[0].mxu0
    %1147 = vmatprep.mubr.bf16.mxu0 0
    %1148 = vmatmul.mubr.bf16.gmra.mrb[0].mxu0 %v993
    %v1149 = vpop.f32.mrb[0].mxu0
    %v1150 = vadd.f32 %v920, %v1149
    %v1151 = vpop.f32.mrb[0].mxu0
    %v1152 = vpop.f32.mrb[0].mxu0
    %v1153 = vadd.f32 %v920, %v1152
    %v1154 = vpop.f32.mrb[0].mxu0
    %1155 = vdwg.mxu0
    %v1156 = vmax.f32 %v1030, 0.0
    %v1157 = vmax.f32 %v1033, 0.0
    %v1158 = vmax.f32 %v1038, 0.0
    %v1159 = vmax.f32 %v1041, 0.0
    %v1160 = vmax.f32 %v1046, 0.0
    %v1161 = vmax.f32 %v1049, 0.0
    %v1162 = vmax.f32 %v1054, 0.0
    %v1163 = vmax.f32 %v1057, 0.0
    %v1164 = vmax.f32 %v1062, 0.0
    %v1165 = vmax.f32 %v1065, 0.0
    %v1166 = vmax.f32 %v1070, 0.0
    %v1167 = vmax.f32 %v1073, 0.0
    %v1168 = vmax.f32 %v1078, 0.0
    %v1169 = vmax.f32 %v1081, 0.0
    %v1170 = vmax.f32 %v1086, 0.0
    %v1171 = vmax.f32 %v1089, 0.0
    %v1172 = vmax.f32 %v1094, 0.0
    %v1173 = vmax.f32 %v1097, 0.0
    %v1174 = vmax.f32 %v1102, 0.0
    %v1175 = vmax.f32 %v1105, 0.0
    %v1176 = vmax.f32 %v1110, 0.0
    %v1177 = vmax.f32 %v1113, 0.0
    %v1178 = vmax.f32 %v1118, 0.0
    %v1179 = vmax.f32 %v1121, 0.0
    %v1180 = vmax.f32 %v1126, 0.0
    %v1181 = vmax.f32 %v1129, 0.0
    %v1182 = vmax.f32 %v1134, 0.0
    %v1183 = vmax.f32 %v1137, 0.0
    %v1184 = vmax.f32 %v1142, 0.0
    %v1185 = vmax.f32 %v1145, 0.0
    %v1186 = vmax.f32 %v1150, 0.0
    %v1187 = vmax.f32 %v1153, 0.0
    %v1188 = vpack.c.bf16 %v1157, %v1156
    %v1189 = vpack.c.bf16 %v1159, %v1158
    %v1190 = vpack.c.bf16 %v1161, %v1160
    %v1191 = vpack.c.bf16 %v1163, %v1162
    %v1192 = vpack.c.bf16 %v1165, %v1164
    %v1193 = vpack.c.bf16 %v1167, %v1166
    %v1194 = vpack.c.bf16 %v1169, %v1168
    %v1195 = vpack.c.bf16 %v1171, %v1170
    %v1196 = vpack.c.bf16 %v1173, %v1172
    %v1197 = vpack.c.bf16 %v1175, %v1174
    %v1198 = vpack.c.bf16 %v1177, %v1176
    %v1199 = vpack.c.bf16 %v1179, %v1178
    %v1200 = vpack.c.bf16 %v1181, %v1180
    %v1201 = vpack.c.bf16 %v1183, %v1182
    %v1202 = vpack.c.bf16 %v1185, %v1184
    %v1203 = vpack.c.bf16 %v1187, %v1186
    %v1204 = vld [vmem:[%s6] sm:$0xff]
    %v1205 = vld [vmem:[%s6 + $0x8] sm:$0xff]
    %v1206 = vld [vmem:[%s6 + $0x10] sm:$0xff]
    %v1207 = vld [vmem:[%s6 + $0x18] sm:$0xff]
    %v1208 = vld [vmem:[%s6 + $0x20] sm:$0xff]
    %v1209 = vld [vmem:[%s6 + $0x28] sm:$0xff]
    %v1210 = vld [vmem:[%s6 + $0x30] sm:$0xff]
    %v1211 = vld [vmem:[%s6 + $0x38] sm:$0xff]
    %v1212 = vld [vmem:[%s6 + $0x40] sm:$0xff]
    %v1213 = vld [vmem:[%s6 + $0x48] sm:$0xff]
    %v1214 = vld [vmem:[%s6 + $0x50] sm:$0xff]
    %v1215 = vld [vmem:[%s6 + $0x58] sm:$0xff]
    %v1216 = vld [vmem:[%s6 + $0x60] sm:$0xff]
    %v1217 = vld [vmem:[%s6 + $0x68] sm:$0xff]
    %v1218 = vld [vmem:[%s6 + $0x70] sm:$0xff]
    %v1219 = vld [vmem:[%s6 + $0x78] sm:$0xff]
    %v1220 = vld [vmem:[%s6 + $0x80] sm:$0xff]
    %v1221 = vld [vmem:[%s6 + $0x88] sm:$0xff]
    %v1222 = vld [vmem:[%s6 + $0x90] sm:$0xff]
    %v1223 = vld [vmem:[%s6 + $0x98] sm:$0xff]
    %v1224 = vld [vmem:[%s6 + $0xa0] sm:$0xff]
    %v1225 = vld [vmem:[%s6 + $0xa8] sm:$0xff]
    %v1226 = vld [vmem:[%s6 + $0xb0] sm:$0xff]
    %v1227 = vld [vmem:[%s6 + $0xb8] sm:$0xff]
    %v1228 = vld [vmem:[%s6 + $0xc0] sm:$0xff]
    %v1229 = vld [vmem:[%s6 + $0xc8] sm:$0xff]
    %v1230 = vld [vmem:[%s6 + $0xd0] sm:$0xff]
    %v1231 = vld [vmem:[%s6 + $0xd8] sm:$0xff]
    %v1232 = vld [vmem:[%s6 + $0xe0] sm:$0xff]
    %v1233 = vld [vmem:[%s6 + $0xe8] sm:$0xff]
    %v1234 = vld [vmem:[%s6 + $0xf0] sm:$0xff]
    %v1235 = vld [vmem:[%s6 + $0xf8] sm:$0xff]
    %v1236 = vld [vmem:[%s6 + $0x100] sm:$0xff]
    %v1237 = vld [vmem:[%s6 + $0x108] sm:$0xff]
    %v1238 = vld [vmem:[%s6 + $0x110] sm:$0xff]
    %v1239 = vld [vmem:[%s6 + $0x118] sm:$0xff]
    %v1240 = vld [vmem:[%s6 + $0x120] sm:$0xff]
    %v1241 = vld [vmem:[%s6 + $0x128] sm:$0xff]
    %v1242 = vld [vmem:[%s6 + $0x130] sm:$0xff]
    %v1243 = vld [vmem:[%s6 + $0x138] sm:$0xff]
    %v1244 = vld [vmem:[%s6 + $0x140] sm:$0xff]
    %v1245 = vld [vmem:[%s6 + $0x148] sm:$0xff]
    %v1246 = vld [vmem:[%s6 + $0x150] sm:$0xff]
    %v1247 = vld [vmem:[%s6 + $0x158] sm:$0xff]
    %v1248 = vld [vmem:[%s6 + $0x160] sm:$0xff]
    %v1249 = vld [vmem:[%s6 + $0x168] sm:$0xff]
    %v1250 = vld [vmem:[%s6 + $0x170] sm:$0xff]
    %v1251 = vld [vmem:[%s6 + $0x178] sm:$0xff]
    %v1252 = vld [vmem:[%s6 + $0x180] sm:$0xff]
    %v1253 = vld [vmem:[%s6 + $0x188] sm:$0xff]
    %v1254 = vld [vmem:[%s6 + $0x190] sm:$0xff]
    %v1255 = vld [vmem:[%s6 + $0x198] sm:$0xff]
    %v1256 = vld [vmem:[%s6 + $0x1a0] sm:$0xff]
    %v1257 = vld [vmem:[%s6 + $0x1a8] sm:$0xff]
    %v1258 = vld [vmem:[%s6 + $0x1b0] sm:$0xff]
    %v1259 = vld [vmem:[%s6 + $0x1b8] sm:$0xff]
    %v1260 = vld [vmem:[%s6 + $0x1c0] sm:$0xff]
    %v1261 = vld [vmem:[%s6 + $0x1c8] sm:$0xff]
    %v1262 = vld [vmem:[%s6 + $0x1d0] sm:$0xff]
    %v1263 = vld [vmem:[%s6 + $0x1d8] sm:$0xff]
    %v1264 = vld [vmem:[%s6 + $0x1e0] sm:$0xff]
    %v1265 = vld [vmem:[%s6 + $0x1e8] sm:$0xff]
    %v1266 = vld [vmem:[%s6 + $0x1f0] sm:$0xff]
    %v1267 = vld [vmem:[%s6 + $0x1f8] sm:$0xff]
    %v1268 = vld [vmem:[#allocation9] sm:$0xff]
    %v1270 = vlaneseq
    %v1271 = vshrl.u32 %v1270, 7
    %v1272 = vsub.s32 0, %v1271
    %v1273 = vrot.slane %v1268, %v1272
    %v1274 = vlaneseq
    %v1275 = vshrl.u32 %v1274, 7
    %v1276 = vsub.s32 1, %v1275
    %v1277 = vrot.slane %v1268, %v1276
    %v1278 = vlaneseq
    %v1279 = vshrl.u32 %v1278, 7
    %v1280 = vsub.s32 2, %v1279
    %v1281 = vrot.slane %v1268, %v1280
    %v1282 = vlaneseq
    %v1283 = vshrl.u32 %v1282, 7
    %v1284 = vsub.s32 3, %v1283
    %v1285 = vrot.slane %v1268, %v1284
    %v1286 = vlaneseq
    %v1287 = vshrl.u32 %v1286, 7
    %v1288 = vsub.s32 4, %v1287
    %v1289 = vrot.slane %v1268, %v1288
    %v1290 = vlaneseq
    %v1291 = vshrl.u32 %v1290, 7
    %v1292 = vsub.s32 5, %v1291
    %v1293 = vrot.slane %v1268, %v1292
    %v1294 = vlaneseq
    %v1295 = vshrl.u32 %v1294, 7
    %v1296 = vsub.s32 6, %v1295
    %v1297 = vrot.slane %v1268, %v1296
    %v1298 = vlaneseq
    %v1299 = vshrl.u32 %v1298, 7
    %v1300 = vsub.s32 7, %v1299
    %v1301 = vrot.slane %v1268, %v1300
    %v1374 = vunpack.c.l.b16 %v1204
    %v1375 = vunpack.c.h.b16 %v1204
    %v1376 = vunpack.c.l.b16 %v1205
    %v1377 = vunpack.c.h.b16 %v1205
    %v1378 = vunpack.c.l.b16 %v1206
    %v1379 = vunpack.c.h.b16 %v1206
    %v1380 = vunpack.c.l.b16 %v1207
    %v1381 = vunpack.c.h.b16 %v1207
    %v1382 = vunpack.c.l.b16 %v1208
    %v1383 = vunpack.c.h.b16 %v1208
    %v1384 = vunpack.c.l.b16 %v1209
    %v1385 = vunpack.c.h.b16 %v1209
    %v1386 = vunpack.c.l.b16 %v1210
    %v1387 = vunpack.c.h.b16 %v1210
    %v1388 = vunpack.c.l.b16 %v1211
    %v1389 = vunpack.c.h.b16 %v1211
    %v1390 = vunpack.c.l.b16 %v1212
    %v1391 = vunpack.c.h.b16 %v1212
    %v1392 = vunpack.c.l.b16 %v1213
    %v1393 = vunpack.c.h.b16 %v1213
    %v1394 = vunpack.c.l.b16 %v1214
    %v1395 = vunpack.c.h.b16 %v1214
    %v1396 = vunpack.c.l.b16 %v1215
    %v1397 = vunpack.c.h.b16 %v1215
    %v1398 = vunpack.c.l.b16 %v1216
    %v1399 = vunpack.c.h.b16 %v1216
    %v1400 = vunpack.c.l.b16 %v1217
    %v1401 = vunpack.c.h.b16 %v1217
    %v1402 = vunpack.c.l.b16 %v1218
    %v1403 = vunpack.c.h.b16 %v1218
    %v1404 = vunpack.c.l.b16 %v1219
    %v1405 = vunpack.c.h.b16 %v1219
    %v1406 = vunpack.c.l.b16 %v1220
    %v1407 = vunpack.c.h.b16 %v1220
    %v1408 = vunpack.c.l.b16 %v1221
    %v1409 = vunpack.c.h.b16 %v1221
    %v1410 = vunpack.c.l.b16 %v1222
    %v1411 = vunpack.c.h.b16 %v1222
    %v1412 = vunpack.c.l.b16 %v1223
    %v1413 = vunpack.c.h.b16 %v1223
    %v1414 = vunpack.c.l.b16 %v1224
    %v1415 = vunpack.c.h.b16 %v1224
    %v1416 = vunpack.c.l.b16 %v1225
    %v1417 = vunpack.c.h.b16 %v1225
    %v1418 = vunpack.c.l.b16 %v1226
    %v1419 = vunpack.c.h.b16 %v1226
    %v1420 = vunpack.c.l.b16 %v1227
    %v1421 = vunpack.c.h.b16 %v1227
    %v1422 = vunpack.c.l.b16 %v1228
    %v1423 = vunpack.c.h.b16 %v1228
    %v1424 = vunpack.c.l.b16 %v1229
    %v1425 = vunpack.c.h.b16 %v1229
    %v1426 = vunpack.c.l.b16 %v1230
    %v1427 = vunpack.c.h.b16 %v1230
    %v1428 = vunpack.c.l.b16 %v1231
    %v1429 = vunpack.c.h.b16 %v1231
    %v1430 = vunpack.c.l.b16 %v1232
    %v1431 = vunpack.c.h.b16 %v1232
    %v1432 = vunpack.c.l.b16 %v1233
    %v1433 = vunpack.c.h.b16 %v1233
    %v1434 = vunpack.c.l.b16 %v1234
    %v1435 = vunpack.c.h.b16 %v1234
    %v1436 = vunpack.c.l.b16 %v1235
    %v1437 = vunpack.c.h.b16 %v1235
    %v1438 = vunpack.c.l.b16 %v1236
    %v1439 = vunpack.c.h.b16 %v1236
    %v1440 = vunpack.c.l.b16 %v1237
    %v1441 = vunpack.c.h.b16 %v1237
    %v1442 = vunpack.c.l.b16 %v1238
    %v1443 = vunpack.c.h.b16 %v1238
    %v1444 = vunpack.c.l.b16 %v1239
    %v1445 = vunpack.c.h.b16 %v1239
    %v1446 = vunpack.c.l.b16 %v1240
    %v1447 = vunpack.c.h.b16 %v1240
    %v1448 = vunpack.c.l.b16 %v1241
    %v1449 = vunpack.c.h.b16 %v1241
    %v1450 = vunpack.c.l.b16 %v1242
    %v1451 = vunpack.c.h.b16 %v1242
    %v1452 = vunpack.c.l.b16 %v1243
    %v1453 = vunpack.c.h.b16 %v1243
    %v1454 = vunpack.c.l.b16 %v1244
    %v1455 = vunpack.c.h.b16 %v1244
    %v1456 = vunpack.c.l.b16 %v1245
    %v1457 = vunpack.c.h.b16 %v1245
    %v1458 = vunpack.c.l.b16 %v1246
    %v1459 = vunpack.c.h.b16 %v1246
    %v1460 = vunpack.c.l.b16 %v1247
    %v1461 = vunpack.c.h.b16 %v1247
    %v1462 = vunpack.c.l.b16 %v1248
    %v1463 = vunpack.c.h.b16 %v1248
    %v1464 = vunpack.c.l.b16 %v1249
    %v1465 = vunpack.c.h.b16 %v1249
    %v1466 = vunpack.c.l.b16 %v1250
    %v1467 = vunpack.c.h.b16 %v1250
    %v1468 = vunpack.c.l.b16 %v1251
    %v1469 = vunpack.c.h.b16 %v1251
    %v1470 = vunpack.c.l.b16 %v1252
    %v1471 = vunpack.c.h.b16 %v1252
    %v1472 = vunpack.c.l.b16 %v1253
    %v1473 = vunpack.c.h.b16 %v1253
    %v1474 = vunpack.c.l.b16 %v1254
    %v1475 = vunpack.c.h.b16 %v1254
    %v1476 = vunpack.c.l.b16 %v1255
    %v1477 = vunpack.c.h.b16 %v1255
    %v1478 = vunpack.c.l.b16 %v1256
    %v1479 = vunpack.c.h.b16 %v1256
    %v1480 = vunpack.c.l.b16 %v1257
    %v1481 = vunpack.c.h.b16 %v1257
    %v1482 = vunpack.c.l.b16 %v1258
    %v1483 = vunpack.c.h.b16 %v1258
    %v1484 = vunpack.c.l.b16 %v1259
    %v1485 = vunpack.c.h.b16 %v1259
    %v1486 = vunpack.c.l.b16 %v1260
    %v1487 = vunpack.c.h.b16 %v1260
    %v1488 = vunpack.c.l.b16 %v1261
    %v1489 = vunpack.c.h.b16 %v1261
    %v1490 = vunpack.c.l.b16 %v1262
    %v1491 = vunpack.c.h.b16 %v1262
    %v1492 = vunpack.c.l.b16 %v1263
    %v1493 = vunpack.c.h.b16 %v1263
    %v1494 = vunpack.c.l.b16 %v1264
    %v1495 = vunpack.c.h.b16 %v1264
    %v1496 = vunpack.c.l.b16 %v1265
    %v1497 = vunpack.c.h.b16 %v1265
    %v1498 = vunpack.c.l.b16 %v1266
    %v1499 = vunpack.c.h.b16 %v1266
    %v1500 = vunpack.c.l.b16 %v1267
    %v1501 = vunpack.c.h.b16 %v1267
    %v1502 = vpack.c.b16 %v1382, %v1374
    %v1503 = vpack.c.b16 %v1383, %v1375
    %v1504 = vpack.c.b16 %v1384, %v1376
    %v1505 = vpack.c.b16 %v1385, %v1377
    %v1506 = vpack.c.b16 %v1386, %v1378
    %v1507 = vpack.c.b16 %v1387, %v1379
    %v1508 = vpack.c.b16 %v1388, %v1380
    %v1509 = vpack.c.b16 %v1389, %v1381
    %v1510 = vpack.c.b16 %v1398, %v1390
    %v1511 = vpack.c.b16 %v1399, %v1391
    %v1512 = vpack.c.b16 %v1400, %v1392
    %v1513 = vpack.c.b16 %v1401, %v1393
    %v1514 = vpack.c.b16 %v1402, %v1394
    %v1515 = vpack.c.b16 %v1403, %v1395
    %v1516 = vpack.c.b16 %v1404, %v1396
    %v1517 = vpack.c.b16 %v1405, %v1397
    %v1518 = vpack.c.b16 %v1414, %v1406
    %v1519 = vpack.c.b16 %v1415, %v1407
    %v1520 = vpack.c.b16 %v1416, %v1408
    %v1521 = vpack.c.b16 %v1417, %v1409
    %v1522 = vpack.c.b16 %v1418, %v1410
    %v1523 = vpack.c.b16 %v1419, %v1411
    %v1524 = vpack.c.b16 %v1420, %v1412
    %v1525 = vpack.c.b16 %v1421, %v1413
    %v1526 = vpack.c.b16 %v1430, %v1422
    %v1527 = vpack.c.b16 %v1431, %v1423
    %v1528 = vpack.c.b16 %v1432, %v1424
    %v1529 = vpack.c.b16 %v1433, %v1425
    %v1530 = vpack.c.b16 %v1434, %v1426
    %v1531 = vpack.c.b16 %v1435, %v1427
    %v1532 = vpack.c.b16 %v1436, %v1428
    %v1533 = vpack.c.b16 %v1437, %v1429
    %v1534 = vpack.c.b16 %v1446, %v1438
    %v1535 = vpack.c.b16 %v1447, %v1439
    %v1536 = vpack.c.b16 %v1448, %v1440
    %v1537 = vpack.c.b16 %v1449, %v1441
    %v1538 = vpack.c.b16 %v1450, %v1442
    %v1539 = vpack.c.b16 %v1451, %v1443
    %v1540 = vpack.c.b16 %v1452, %v1444
    %v1541 = vpack.c.b16 %v1453, %v1445
    %v1542 = vpack.c.b16 %v1462, %v1454
    %v1543 = vpack.c.b16 %v1463, %v1455
    %v1544 = vpack.c.b16 %v1464, %v1456
    %v1545 = vpack.c.b16 %v1465, %v1457
    %v1546 = vpack.c.b16 %v1466, %v1458
    %v1547 = vpack.c.b16 %v1467, %v1459
    %v1548 = vpack.c.b16 %v1468, %v1460
    %v1549 = vpack.c.b16 %v1469, %v1461
    %v1550 = vpack.c.b16 %v1478, %v1470
    %v1551 = vpack.c.b16 %v1479, %v1471
    %v1552 = vpack.c.b16 %v1480, %v1472
    %v1553 = vpack.c.b16 %v1481, %v1473
    %v1554 = vpack.c.b16 %v1482, %v1474
    %v1555 = vpack.c.b16 %v1483, %v1475
    %v1556 = vpack.c.b16 %v1484, %v1476
    %v1557 = vpack.c.b16 %v1485, %v1477
    %v1558 = vpack.c.b16 %v1494, %v1486
    %v1559 = vpack.c.b16 %v1495, %v1487
    %v1560 = vpack.c.b16 %v1496, %v1488
    %v1561 = vpack.c.b16 %v1497, %v1489
    %v1562 = vpack.c.b16 %v1498, %v1490
    %v1563 = vpack.c.b16 %v1499, %v1491
    %v1564 = vpack.c.b16 %v1500, %v1492
    %v1565 = vpack.c.b16 %v1501, %v1493
    %1630 = vmatprep.subr.bf16.mxu0 %v1503
    %1631 = vmatpush1.bf16.msra.mxu0 %v1502
    %1632 = vmatprep.subr.bf16.mxu0 %v1511
    %1633 = vmatpush1.bf16.msra.mxu0 %v1510
    %1634 = vmatprep.subr.bf16.mxu0 %v1519
    %1635 = vmatpush1.bf16.msra.mxu0 %v1518
    %1636 = vmatprep.subr.bf16.mxu0 %v1527
    %1637 = vmatpush1.bf16.msra.mxu0 %v1526
    %1638 = vmatprep.subr.bf16.mxu0 %v1535
    %1639 = vmatpush1.bf16.msra.mxu0 %v1534
    %1640 = vmatprep.subr.bf16.mxu0 %v1543
    %1641 = vmatpush1.bf16.msra.mxu0 %v1542
    %1642 = vmatprep.subr.bf16.mxu0 %v1551
    %1643 = vmatpush1.bf16.msra.mxu0 %v1550
    %1644 = vmatprep.subr.bf16.mxu0 %v1559
    %1645 = vmatpush1.bf16.msra.mxu0 %v1558
    %1646 = vmatprep.subr.bf16.mxu0 0
    %1647 = vmatpush1.bf16.msra.mxu0 0
    %1648 = vmatprep.subr.bf16.mxu0 0
    %1649 = vmatpush1.bf16.msra.mxu0 0
    %1650 = vmatprep.subr.bf16.mxu0 0
    %1651 = vmatpush1.bf16.msra.mxu0 0
    %1652 = vmatprep.subr.bf16.mxu0 0
    %1653 = vmatpush1.bf16.msra.mxu0 0
    %1654 = vmatprep.subr.bf16.mxu0 0
    %1655 = vmatpush1.bf16.msra.mxu0 0
    %1656 = vmatprep.subr.bf16.mxu0 0
    %1657 = vmatpush1.bf16.msra.mxu0 0
    %1658 = vmatprep.subr.bf16.mxu0 0
    %1659 = vmatpush1.bf16.msra.mxu0 0
    %1660 = vmatprep.subr.bf16.mxu0 0
    %1661 = vmatpush1.bf16.msra.mxu0 0
    %1662 = vmatprep.mubr.bf16.mxu0 0
    %1663 = vmatmul.mubr.bf16.gmra.mrb[0].mxu0 %v1188
    %v1664 = vpop.f32.mrb[0].mxu0
    %v1665 = vadd.f32 %v1273, %v1664
    %v1666 = vpop.f32.mrb[0].mxu0
    %v1667 = vadd.f32 %v1277, %v1666
    %v1668 = vpop.f32.mrb[0].mxu0
    %v1669 = vadd.f32 %v1273, %v1668
    %v1670 = vpop.f32.mrb[0].mxu0
    %v1671 = vadd.f32 %v1277, %v1670
    %1672 = vmatprep.mubr.bf16.mxu0 0
    %1673 = vmatmul.mubr.bf16.gmra.mrb[0].mxu0 %v1189
    %v1674 = vpop.f32.mrb[0].mxu0
    %v1675 = vadd.f32 %v1273, %v1674
    %v1676 = vpop.f32.mrb[0].mxu0
    %v1677 = vadd.f32 %v1277, %v1676
    %v1678 = vpop.f32.mrb[0].mxu0
    %v1679 = vadd.f32 %v1273, %v1678
    %v1680 = vpop.f32.mrb[0].mxu0
    %v1681 = vadd.f32 %v1277, %v1680
    %1682 = vmatprep.mubr.bf16.mxu0 0
    %1683 = vmatmul.mubr.bf16.gmra.mrb[0].mxu0 %v1190
    %v1684 = vpop.f32.mrb[0].mxu0
    %v1685 = vadd.f32 %v1273, %v1684
    %v1686 = vpop.f32.mrb[0].mxu0
    %v1687 = vadd.f32 %v1277, %v1686
    %v1688 = vpop.f32.mrb[0].mxu0
    %v1689 = vadd.f32 %v1273, %v1688
    %v1690 = vpop.f32.mrb[0].mxu0
    %v1691 = vadd.f32 %v1277, %v1690
    %1692 = vmatprep.mubr.bf16.mxu0 0
    %1693 = vmatmul.mubr.bf16.gmra.mrb[0].mxu0 %v1191
    %v1694 = vpop.f32.mrb[0].mxu0
    %v1695 = vadd.f32 %v1273, %v1694
    %v1696 = vpop.f32.mrb[0].mxu0
    %v1697 = vadd.f32 %v1277, %v1696
    %v1698 = vpop.f32.mrb[0].mxu0
    %v1699 = vadd.f32 %v1273, %v1698
    %v1700 = vpop.f32.mrb[0].mxu0
    %v1701 = vadd.f32 %v1277, %v1700
    %1702 = vmatprep.mubr.bf16.mxu0 0
    %1703 = vmatmul.mubr.bf16.gmra.mrb[0].mxu0 %v1192
    %v1704 = vpop.f32.mrb[0].mxu0
    %v1705 = vadd.f32 %v1273, %v1704
    %v1706 = vpop.f32.mrb[0].mxu0
    %v1707 = vadd.f32 %v1277, %v1706
    %v1708 = vpop.f32.mrb[0].mxu0
    %v1709 = vadd.f32 %v1273, %v1708
    %v1710 = vpop.f32.mrb[0].mxu0
    %v1711 = vadd.f32 %v1277, %v1710
    %1712 = vmatprep.mubr.bf16.mxu0 0
    %1713 = vmatmul.mubr.bf16.gmra.mrb[0].mxu0 %v1193
    %v1714 = vpop.f32.mrb[0].mxu0
    %v1715 = vadd.f32 %v1273, %v1714
    %v1716 = vpop.f32.mrb[0].mxu0
    %v1717 = vadd.f32 %v1277, %v1716
    %v1718 = vpop.f32.mrb[0].mxu0
    %v1719 = vadd.f32 %v1273, %v1718
    %v1720 = vpop.f32.mrb[0].mxu0
    %v1721 = vadd.f32 %v1277, %v1720
    %1722 = vmatprep.mubr.bf16.mxu0 0
    %1723 = vmatmul.mubr.bf16.gmra.mrb[0].mxu0 %v1194
    %v1724 = vpop.f32.mrb[0].mxu0
    %v1725 = vadd.f32 %v1273, %v1724
    %v1726 = vpop.f32.mrb[0].mxu0
    %v1727 = vadd.f32 %v1277, %v1726
    %v1728 = vpop.f32.mrb[0].mxu0
    %v1729 = vadd.f32 %v1273, %v1728
    %v1730 = vpop.f32.mrb[0].mxu0
    %v1731 = vadd.f32 %v1277, %v1730
    %1732 = vmatprep.mubr.bf16.mxu0 0
    %1733 = vmatmul.mubr.bf16.gmra.mrb[0].mxu0 %v1195
    %v1734 = vpop.f32.mrb[0].mxu0
    %v1735 = vadd.f32 %v1273, %v1734
    %v1736 = vpop.f32.mrb[0].mxu0
    %v1737 = vadd.f32 %v1277, %v1736
    %v1738 = vpop.f32.mrb[0].mxu0
    %v1739 = vadd.f32 %v1273, %v1738
    %v1740 = vpop.f32.mrb[0].mxu0
    %v1741 = vadd.f32 %v1277, %v1740
    %1742 = vmatprep.mubr.bf16.mxu0 0
    %1743 = vmatmul.mubr.bf16.gmra.mrb[0].mxu0 %v1196
    %v1744 = vpop.f32.mrb[0].mxu0
    %v1745 = vadd.f32 %v1273, %v1744
    %v1746 = vpop.f32.mrb[0].mxu0
    %v1747 = vadd.f32 %v1277, %v1746
    %v1748 = vpop.f32.mrb[0].mxu0
    %v1749 = vadd.f32 %v1273, %v1748
    %v1750 = vpop.f32.mrb[0].mxu0
    %v1751 = vadd.f32 %v1277, %v1750
    %1752 = vmatprep.mubr.bf16.mxu0 0
    %1753 = vmatmul.mubr.bf16.gmra.mrb[0].mxu0 %v1197
    %v1754 = vpop.f32.mrb[0].mxu0
    %v1755 = vadd.f32 %v1273, %v1754
    %v1756 = vpop.f32.mrb[0].mxu0
    %v1757 = vadd.f32 %v1277, %v1756
    %v1758 = vpop.f32.mrb[0].mxu0
    %v1759 = vadd.f32 %v1273, %v1758
    %v1760 = vpop.f32.mrb[0].mxu0
    %v1761 = vadd.f32 %v1277, %v1760
    %1762 = vmatprep.mubr.bf16.mxu0 0
    %1763 = vmatmul.mubr.bf16.gmra.mrb[0].mxu0 %v1198
    %v1764 = vpop.f32.mrb[0].mxu0
    %v1765 = vadd.f32 %v1273, %v1764
    %v1766 = vpop.f32.mrb[0].mxu0
    %v1767 = vadd.f32 %v1277, %v1766
    %v1768 = vpop.f32.mrb[0].mxu0
    %v1769 = vadd.f32 %v1273, %v1768
    %v1770 = vpop.f32.mrb[0].mxu0
    %v1771 = vadd.f32 %v1277, %v1770
    %1772 = vmatprep.mubr.bf16.mxu0 0
    %1773 = vmatmul.mubr.bf16.gmra.mrb[0].mxu0 %v1199
    %v1774 = vpop.f32.mrb[0].mxu0
    %v1775 = vadd.f32 %v1273, %v1774
    %v1776 = vpop.f32.mrb[0].mxu0
    %v1777 = vadd.f32 %v1277, %v1776
    %v1778 = vpop.f32.mrb[0].mxu0
    %v1779 = vadd.f32 %v1273, %v1778
    %v1780 = vpop.f32.mrb[0].mxu0
    %v1781 = vadd.f32 %v1277, %v1780
    %1782 = vmatprep.mubr.bf16.mxu0 0
    %1783 = vmatmul.mubr.bf16.gmra.mrb[0].mxu0 %v1200
    %v1784 = vpop.f32.mrb[0].mxu0
    %v1785 = vadd.f32 %v1273, %v1784
    %v1786 = vpop.f32.mrb[0].mxu0
    %v1787 = vadd.f32 %v1277, %v1786
    %v1788 = vpop.f32.mrb[0].mxu0
    %v1789 = vadd.f32 %v1273, %v1788
    %v1790 = vpop.f32.mrb[0].mxu0
    %v1791 = vadd.f32 %v1277, %v1790
    %1792 = vmatprep.mubr.bf16.mxu0 0
    %1793 = vmatmul.mubr.bf16.gmra.mrb[0].mxu0 %v1201
    %v1794 = vpop.f32.mrb[0].mxu0
    %v1795 = vadd.f32 %v1273, %v1794
    %v1796 = vpop.f32.mrb[0].mxu0
    %v1797 = vadd.f32 %v1277, %v1796
    %v1798 = vpop.f32.mrb[0].mxu0
    %v1799 = vadd.f32 %v1273, %v1798
    %v1800 = vpop.f32.mrb[0].mxu0
    %v1801 = vadd.f32 %v1277, %v1800
    %1802 = vmatprep.mubr.bf16.mxu0 0
    %1803 = vmatmul.mubr.bf16.gmra.mrb[0].mxu0 %v1202
    %v1804 = vpop.f32.mrb[0].mxu0
    %v1805 = vadd.f32 %v1273, %v1804
    %v1806 = vpop.f32.mrb[0].mxu0
    %v1807 = vadd.f32 %v1277, %v1806
    %v1808 = vpop.f32.mrb[0].mxu0
    %v1809 = vadd.f32 %v1273, %v1808
    %v1810 = vpop.f32.mrb[0].mxu0
    %v1811 = vadd.f32 %v1277, %v1810
    %1812 = vmatprep.mubr.bf16.mxu0 0
    %1813 = vmatmul.mubr.bf16.gmra.mrb[0].mxu0 %v1203
    %v1814 = vpop.f32.mrb[0].mxu0
    %v1815 = vadd.f32 %v1273, %v1814
    %v1816 = vpop.f32.mrb[0].mxu0
    %v1817 = vadd.f32 %v1277, %v1816
    %v1818 = vpop.f32.mrb[0].mxu0
    %v1819 = vadd.f32 %v1273, %v1818
    %v1820 = vpop.f32.mrb[0].mxu0
    %v1821 = vadd.f32 %v1277, %v1820
    %1822 = vdwg.mxu0
    %1823 = vmatprep.subr.bf16.mxu0 %v1505
    %1824 = vmatpush1.bf16.msra.mxu0 %v1504
    %1825 = vmatprep.subr.bf16.mxu0 %v1513
    %1826 = vmatpush1.bf16.msra.mxu0 %v1512
    %1827 = vmatprep.subr.bf16.mxu0 %v1521
    %1828 = vmatpush1.bf16.msra.mxu0 %v1520
    %1829 = vmatprep.subr.bf16.mxu0 %v1529
    %1830 = vmatpush1.bf16.msra.mxu0 %v1528
    %1831 = vmatprep.subr.bf16.mxu0 %v1537
    %1832 = vmatpush1.bf16.msra.mxu0 %v1536
    %1833 = vmatprep.subr.bf16.mxu0 %v1545
    %1834 = vmatpush1.bf16.msra.mxu0 %v1544
    %1835 = vmatprep.subr.bf16.mxu0 %v1553
    %1836 = vmatpush1.bf16.msra.mxu0 %v1552
    %1837 = vmatprep.subr.bf16.mxu0 %v1561
    %1838 = vmatpush1.bf16.msra.mxu0 %v1560
    %1839 = vmatprep.subr.bf16.mxu0 0
    %1840 = vmatpush1.bf16.msra.mxu0 0
    %1841 = vmatprep.subr.bf16.mxu0 0
    %1842 = vmatpush1.bf16.msra.mxu0 0
    %1843 = vmatprep.subr.bf16.mxu0 0
    %1844 = vmatpush1.bf16.msra.mxu0 0
    %1845 = vmatprep.subr.bf16.mxu0 0
    %1846 = vmatpush1.bf16.msra.mxu0 0
    %1847 = vmatprep.subr.bf16.mxu0 0
    %1848 = vmatpush1.bf16.msra.mxu0 0
    %1849 = vmatprep.subr.bf16.mxu0 0
    %1850 = vmatpush1.bf16.msra.mxu0 0
    %1851 = vmatprep.subr.bf16.mxu0 0
    %1852 = vmatpush1.bf16.msra.mxu0 0
    %1853 = vmatprep.subr.bf16.mxu0 0
    %1854 = vmatpush1.bf16.msra.mxu0 0
    %1855 = vmatprep.mubr.bf16.mxu0 0
    %1856 = vmatmul.mubr.bf16.gmra.mrb[0].mxu0 %v1188
    %v1857 = vpop.f32.mrb[0].mxu0
    %v1858 = vadd.f32 %v1281, %v1857
    %v1859 = vpop.f32.mrb[0].mxu0
    %v1860 = vadd.f32 %v1285, %v1859
    %v1861 = vpop.f32.mrb[0].mxu0
    %v1862 = vadd.f32 %v1281, %v1861
    %v1863 = vpop.f32.mrb[0].mxu0
    %v1864 = vadd.f32 %v1285, %v1863
    %1865 = vmatprep.mubr.bf16.mxu0 0
    %1866 = vmatmul.mubr.bf16.gmra.mrb[0].mxu0 %v1189
    %v1867 = vpop.f32.mrb[0].mxu0
    %v1868 = vadd.f32 %v1281, %v1867
    %v1869 = vpop.f32.mrb[0].mxu0
    %v1870 = vadd.f32 %v1285, %v1869
    %v1871 = vpop.f32.mrb[0].mxu0
    %v1872 = vadd.f32 %v1281, %v1871
    %v1873 = vpop.f32.mrb[0].mxu0
    %v1874 = vadd.f32 %v1285, %v1873
    %1875 = vmatprep.mubr.bf16.mxu0 0
    %1876 = vmatmul.mubr.bf16.gmra.mrb[0].mxu0 %v1190
    %v1877 = vpop.f32.mrb[0].mxu0
    %v1878 = vadd.f32 %v1281, %v1877
    %v1879 = vpop.f32.mrb[0].mxu0
    %v1880 = vadd.f32 %v1285, %v1879
    %v1881 = vpop.f32.mrb[0].mxu0
    %v1882 = vadd.f32 %v1281, %v1881
    %v1883 = vpop.f32.mrb[0].mxu0
    %v1884 = vadd.f32 %v1285, %v1883
    %1885 = vmatprep.mubr.bf16.mxu0 0
    %1886 = vmatmul.mubr.bf16.gmra.mrb[0].mxu0 %v1191
    %v1887 = vpop.f32.mrb[0].mxu0
    %v1888 = vadd.f32 %v1281, %v1887
    %v1889 = vpop.f32.mrb[0].mxu0
    %v1890 = vadd.f32 %v1285, %v1889
    %v1891 = vpop.f32.mrb[0].mxu0
    %v1892 = vadd.f32 %v1281, %v1891
    %v1893 = vpop.f32.mrb[0].mxu0
    %v1894 = vadd.f32 %v1285, %v1893
    %1895 = vmatprep.mubr.bf16.mxu0 0
    %1896 = vmatmul.mubr.bf16.gmra.mrb[0].mxu0 %v1192
    %v1897 = vpop.f32.mrb[0].mxu0
    %v1898 = vadd.f32 %v1281, %v1897
    %v1899 = vpop.f32.mrb[0].mxu0
    %v1900 = vadd.f32 %v1285, %v1899
    %v1901 = vpop.f32.mrb[0].mxu0
    %v1902 = vadd.f32 %v1281, %v1901
    %v1903 = vpop.f32.mrb[0].mxu0
    %v1904 = vadd.f32 %v1285, %v1903
    %1905 = vmatprep.mubr.bf16.mxu0 0
    %1906 = vmatmul.mubr.bf16.gmra.mrb[0].mxu0 %v1193
    %v1907 = vpop.f32.mrb[0].mxu0
    %v1908 = vadd.f32 %v1281, %v1907
    %v1909 = vpop.f32.mrb[0].mxu0
    %v1910 = vadd.f32 %v1285, %v1909
    %v1911 = vpop.f32.mrb[0].mxu0
    %v1912 = vadd.f32 %v1281, %v1911
    %v1913 = vpop.f32.mrb[0].mxu0
    %v1914 = vadd.f32 %v1285, %v1913
    %1915 = vmatprep.mubr.bf16.mxu0 0
    %1916 = vmatmul.mubr.bf16.gmra.mrb[0].mxu0 %v1194
    %v1917 = vpop.f32.mrb[0].mxu0
    %v1918 = vadd.f32 %v1281, %v1917
    %v1919 = vpop.f32.mrb[0].mxu0
    %v1920 = vadd.f32 %v1285, %v1919
    %v1921 = vpop.f32.mrb[0].mxu0
    %v1922 = vadd.f32 %v1281, %v1921
    %v1923 = vpop.f32.mrb[0].mxu0
    %v1924 = vadd.f32 %v1285, %v1923
    %1925 = vmatprep.mubr.bf16.mxu0 0
    %1926 = vmatmul.mubr.bf16.gmra.mrb[0].mxu0 %v1195
    %v1927 = vpop.f32.mrb[0].mxu0
    %v1928 = vadd.f32 %v1281, %v1927
    %v1929 = vpop.f32.mrb[0].mxu0
    %v1930 = vadd.f32 %v1285, %v1929
    %v1931 = vpop.f32.mrb[0].mxu0
    %v1932 = vadd.f32 %v1281, %v1931
    %v1933 = vpop.f32.mrb[0].mxu0
    %v1934 = vadd.f32 %v1285, %v1933
    %1935 = vmatprep.mubr.bf16.mxu0 0
    %1936 = vmatmul.mubr.bf16.gmra.mrb[0].mxu0 %v1196
    %v1937 = vpop.f32.mrb[0].mxu0
    %v1938 = vadd.f32 %v1281, %v1937
    %v1939 = vpop.f32.mrb[0].mxu0
    %v1940 = vadd.f32 %v1285, %v1939
    %v1941 = vpop.f32.mrb[0].mxu0
    %v1942 = vadd.f32 %v1281, %v1941
    %v1943 = vpop.f32.mrb[0].mxu0
    %v1944 = vadd.f32 %v1285, %v1943
    %1945 = vmatprep.mubr.bf16.mxu0 0
    %1946 = vmatmul.mubr.bf16.gmra.mrb[0].mxu0 %v1197
    %v1947 = vpop.f32.mrb[0].mxu0
    %v1948 = vadd.f32 %v1281, %v1947
    %v1949 = vpop.f32.mrb[0].mxu0
    %v1950 = vadd.f32 %v1285, %v1949
    %v1951 = vpop.f32.mrb[0].mxu0
    %v1952 = vadd.f32 %v1281, %v1951
    %v1953 = vpop.f32.mrb[0].mxu0
    %v1954 = vadd.f32 %v1285, %v1953
    %1955 = vmatprep.mubr.bf16.mxu0 0
    %1956 = vmatmul.mubr.bf16.gmra.mrb[0].mxu0 %v1198
    %v1957 = vpop.f32.mrb[0].mxu0
    %v1958 = vadd.f32 %v1281, %v1957
    %v1959 = vpop.f32.mrb[0].mxu0
    %v1960 = vadd.f32 %v1285, %v1959
    %v1961 = vpop.f32.mrb[0].mxu0
    %v1962 = vadd.f32 %v1281, %v1961
    %v1963 = vpop.f32.mrb[0].mxu0
    %v1964 = vadd.f32 %v1285, %v1963
    %1965 = vmatprep.mubr.bf16.mxu0 0
    %1966 = vmatmul.mubr.bf16.gmra.mrb[0].mxu0 %v1199
    %v1967 = vpop.f32.mrb[0].mxu0
    %v1968 = vadd.f32 %v1281, %v1967
    %v1969 = vpop.f32.mrb[0].mxu0
    %v1970 = vadd.f32 %v1285, %v1969
    %v1971 = vpop.f32.mrb[0].mxu0
    %v1972 = vadd.f32 %v1281, %v1971
    %v1973 = vpop.f32.mrb[0].mxu0
    %v1974 = vadd.f32 %v1285, %v1973
    %1975 = vmatprep.mubr.bf16.mxu0 0
    %1976 = vmatmul.mubr.bf16.gmra.mrb[0].mxu0 %v1200
    %v1977 = vpop.f32.mrb[0].mxu0
    %v1978 = vadd.f32 %v1281, %v1977
    %v1979 = vpop.f32.mrb[0].mxu0
    %v1980 = vadd.f32 %v1285, %v1979
    %v1981 = vpop.f32.mrb[0].mxu0
    %v1982 = vadd.f32 %v1281, %v1981
    %v1983 = vpop.f32.mrb[0].mxu0
    %v1984 = vadd.f32 %v1285, %v1983
    %1985 = vmatprep.mubr.bf16.mxu0 0
    %1986 = vmatmul.mubr.bf16.gmra.mrb[0].mxu0 %v1201
    %v1987 = vpop.f32.mrb[0].mxu0
    %v1988 = vadd.f32 %v1281, %v1987
    %v1989 = vpop.f32.mrb[0].mxu0
    %v1990 = vadd.f32 %v1285, %v1989
    %v1991 = vpop.f32.mrb[0].mxu0
    %v1992 = vadd.f32 %v1281, %v1991
    %v1993 = vpop.f32.mrb[0].mxu0
    %v1994 = vadd.f32 %v1285, %v1993
    %1995 = vmatprep.mubr.bf16.mxu0 0
    %1996 = vmatmul.mubr.bf16.gmra.mrb[0].mxu0 %v1202
    %v1997 = vpop.f32.mrb[0].mxu0
    %v1998 = vadd.f32 %v1281, %v1997
    %v1999 = vpop.f32.mrb[0].mxu0
    %v2000 = vadd.f32 %v1285, %v1999
    %v2001 = vpop.f32.mrb[0].mxu0
    %v2002 = vadd.f32 %v1281, %v2001
    %v2003 = vpop.f32.mrb[0].mxu0
    %v2004 = vadd.f32 %v1285, %v2003
    %2005 = vmatprep.mubr.bf16.mxu0 0
    %2006 = vmatmul.mubr.bf16.gmra.mrb[0].mxu0 %v1203
    %v2007 = vpop.f32.mrb[0].mxu0
    %v2008 = vadd.f32 %v1281, %v2007
    %v2009 = vpop.f32.mrb[0].mxu0
    %v2010 = vadd.f32 %v1285, %v2009
    %v2011 = vpop.f32.mrb[0].mxu0
    %v2012 = vadd.f32 %v1281, %v2011
    %v2013 = vpop.f32.mrb[0].mxu0
    %v2014 = vadd.f32 %v1285, %v2013
    %2015 = vdwg.mxu0
    %2016 = vmatprep.subr.bf16.mxu0 %v1507
    %2017 = vmatpush1.bf16.msra.mxu0 %v1506
    %2018 = vmatprep.subr.bf16.mxu0 %v1515
    %2019 = vmatpush1.bf16.msra.mxu0 %v1514
    %2020 = vmatprep.subr.bf16.mxu0 %v1523
    %2021 = vmatpush1.bf16.msra.mxu0 %v1522
    %2022 = vmatprep.subr.bf16.mxu0 %v1531
    %2023 = vmatpush1.bf16.msra.mxu0 %v1530
    %2024 = vmatprep.subr.bf16.mxu0 %v1539
    %2025 = vmatpush1.bf16.msra.mxu0 %v1538
    %2026 = vmatprep.subr.bf16.mxu0 %v1547
    %2027 = vmatpush1.bf16.msra.mxu0 %v1546
    %2028 = vmatprep.subr.bf16.mxu0 %v1555
    %2029 = vmatpush1.bf16.msra.mxu0 %v1554
    %2030 = vmatprep.subr.bf16.mxu0 %v1563
    %2031 = vmatpush1.bf16.msra.mxu0 %v1562
    %2032 = vmatprep.subr.bf16.mxu0 0
    %2033 = vmatpush1.bf16.msra.mxu0 0
    %2034 = vmatprep.subr.bf16.mxu0 0
    %2035 = vmatpush1.bf16.msra.mxu0 0
    %2036 = vmatprep.subr.bf16.mxu0 0
    %2037 = vmatpush1.bf16.msra.mxu0 0
    %2038 = vmatprep.subr.bf16.mxu0 0
    %2039 = vmatpush1.bf16.msra.mxu0 0
    %2040 = vmatprep.subr.bf16.mxu0 0
    %2041 = vmatpush1.bf16.msra.mxu0 0
    %2042 = vmatprep.subr.bf16.mxu0 0
    %2043 = vmatpush1.bf16.msra.mxu0 0
    %2044 = vmatprep.subr.bf16.mxu0 0
    %2045 = vmatpush1.bf16.msra.mxu0 0
    %2046 = vmatprep.subr.bf16.mxu0 0
    %2047 = vmatpush1.bf16.msra.mxu0 0
    %2048 = vmatprep.mubr.bf16.mxu0 0
    %2049 = vmatmul.mubr.bf16.gmra.mrb[0].mxu0 %v1188
    %v2050 = vpop.f32.mrb[0].mxu0
    %v2051 = vadd.f32 %v1289, %v2050
    %v2052 = vpop.f32.mrb[0].mxu0
    %v2053 = vadd.f32 %v1293, %v2052
    %v2054 = vpop.f32.mrb[0].mxu0
    %v2055 = vadd.f32 %v1289, %v2054
    %v2056 = vpop.f32.mrb[0].mxu0
    %v2057 = vadd.f32 %v1293, %v2056
    %2058 = vmatprep.mubr.bf16.mxu0 0
    %2059 = vmatmul.mubr.bf16.gmra.mrb[0].mxu0 %v1189
    %v2060 = vpop.f32.mrb[0].mxu0
    %v2061 = vadd.f32 %v1289, %v2060
    %v2062 = vpop.f32.mrb[0].mxu0
    %v2063 = vadd.f32 %v1293, %v2062
    %v2064 = vpop.f32.mrb[0].mxu0
    %v2065 = vadd.f32 %v1289, %v2064
    %v2066 = vpop.f32.mrb[0].mxu0
    %v2067 = vadd.f32 %v1293, %v2066
    %2068 = vmatprep.mubr.bf16.mxu0 0
    %2069 = vmatmul.mubr.bf16.gmra.mrb[0].mxu0 %v1190
    %v2070 = vpop.f32.mrb[0].mxu0
    %v2071 = vadd.f32 %v1289, %v2070
    %v2072 = vpop.f32.mrb[0].mxu0
    %v2073 = vadd.f32 %v1293, %v2072
    %v2074 = vpop.f32.mrb[0].mxu0
    %v2075 = vadd.f32 %v1289, %v2074
    %v2076 = vpop.f32.mrb[0].mxu0
    %v2077 = vadd.f32 %v1293, %v2076
    %2078 = vmatprep.mubr.bf16.mxu0 0
    %2079 = vmatmul.mubr.bf16.gmra.mrb[0].mxu0 %v1191
    %v2080 = vpop.f32.mrb[0].mxu0
    %v2081 = vadd.f32 %v1289, %v2080
    %v2082 = vpop.f32.mrb[0].mxu0
    %v2083 = vadd.f32 %v1293, %v2082
    %v2084 = vpop.f32.mrb[0].mxu0
    %v2085 = vadd.f32 %v1289, %v2084
    %v2086 = vpop.f32.mrb[0].mxu0
    %v2087 = vadd.f32 %v1293, %v2086
    %2088 = vmatprep.mubr.bf16.mxu0 0
    %2089 = vmatmul.mubr.bf16.gmra.mrb[0].mxu0 %v1192
    %v2090 = vpop.f32.mrb[0].mxu0
    %v2091 = vadd.f32 %v1289, %v2090
    %v2092 = vpop.f32.mrb[0].mxu0
    %v2093 = vadd.f32 %v1293, %v2092
    %v2094 = vpop.f32.mrb[0].mxu0
    %v2095 = vadd.f32 %v1289, %v2094
    %v2096 = vpop.f32.mrb[0].mxu0
    %v2097 = vadd.f32 %v1293, %v2096
    %2098 = vmatprep.mubr.bf16.mxu0 0
    %2099 = vmatmul.mubr.bf16.gmra.mrb[0].mxu0 %v1193
    %v2100 = vpop.f32.mrb[0].mxu0
    %v2101 = vadd.f32 %v1289, %v2100
    %v2102 = vpop.f32.mrb[0].mxu0
    %v2103 = vadd.f32 %v1293, %v2102
    %v2104 = vpop.f32.mrb[0].mxu0
    %v2105 = vadd.f32 %v1289, %v2104
    %v2106 = vpop.f32.mrb[0].mxu0
    %v2107 = vadd.f32 %v1293, %v2106
    %2108 = vmatprep.mubr.bf16.mxu0 0
    %2109 = vmatmul.mubr.bf16.gmra.mrb[0].mxu0 %v1194
    %v2110 = vpop.f32.mrb[0].mxu0
    %v2111 = vadd.f32 %v1289, %v2110
    %v2112 = vpop.f32.mrb[0].mxu0
    %v2113 = vadd.f32 %v1293, %v2112
    %v2114 = vpop.f32.mrb[0].mxu0
    %v2115 = vadd.f32 %v1289, %v2114
    %v2116 = vpop.f32.mrb[0].mxu0
    %v2117 = vadd.f32 %v1293, %v2116
    %2118 = vmatprep.mubr.bf16.mxu0 0
    %2119 = vmatmul.mubr.bf16.gmra.mrb[0].mxu0 %v1195
    %v2120 = vpop.f32.mrb[0].mxu0
    %v2121 = vadd.f32 %v1289, %v2120
    %v2122 = vpop.f32.mrb[0].mxu0
    %v2123 = vadd.f32 %v1293, %v2122
    %v2124 = vpop.f32.mrb[0].mxu0
    %v2125 = vadd.f32 %v1289, %v2124
    %v2126 = vpop.f32.mrb[0].mxu0
    %v2127 = vadd.f32 %v1293, %v2126
    %2128 = vmatprep.mubr.bf16.mxu0 0
    %2129 = vmatmul.mubr.bf16.gmra.mrb[0].mxu0 %v1196
    %v2130 = vpop.f32.mrb[0].mxu0
    %v2131 = vadd.f32 %v1289, %v2130
    %v2132 = vpop.f32.mrb[0].mxu0
    %v2133 = vadd.f32 %v1293, %v2132
    %v2134 = vpop.f32.mrb[0].mxu0
    %v2135 = vadd.f32 %v1289, %v2134
    %v2136 = vpop.f32.mrb[0].mxu0
    %v2137 = vadd.f32 %v1293, %v2136
    %2138 = vmatprep.mubr.bf16.mxu0 0
    %2139 = vmatmul.mubr.bf16.gmra.mrb[0].mxu0 %v1197
    %v2140 = vpop.f32.mrb[0].mxu0
    %v2141 = vadd.f32 %v1289, %v2140
    %v2142 = vpop.f32.mrb[0].mxu0
    %v2143 = vadd.f32 %v1293, %v2142
    %v2144 = vpop.f32.mrb[0].mxu0
    %v2145 = vadd.f32 %v1289, %v2144
    %v2146 = vpop.f32.mrb[0].mxu0
    %v2147 = vadd.f32 %v1293, %v2146
    %2148 = vmatprep.mubr.bf16.mxu0 0
    %2149 = vmatmul.mubr.bf16.gmra.mrb[0].mxu0 %v1198
    %v2150 = vpop.f32.mrb[0].mxu0
    %v2151 = vadd.f32 %v1289, %v2150
    %v2152 = vpop.f32.mrb[0].mxu0
    %v2153 = vadd.f32 %v1293, %v2152
    %v2154 = vpop.f32.mrb[0].mxu0
    %v2155 = vadd.f32 %v1289, %v2154
    %v2156 = vpop.f32.mrb[0].mxu0
    %v2157 = vadd.f32 %v1293, %v2156
    %2158 = vmatprep.mubr.bf16.mxu0 0
    %2159 = vmatmul.mubr.bf16.gmra.mrb[0].mxu0 %v1199
    %v2160 = vpop.f32.mrb[0].mxu0
    %v2161 = vadd.f32 %v1289, %v2160
    %v2162 = vpop.f32.mrb[0].mxu0
    %v2163 = vadd.f32 %v1293, %v2162
    %v2164 = vpop.f32.mrb[0].mxu0
    %v2165 = vadd.f32 %v1289, %v2164
    %v2166 = vpop.f32.mrb[0].mxu0
    %v2167 = vadd.f32 %v1293, %v2166
    %2168 = vmatprep.mubr.bf16.mxu0 0
    %2169 = vmatmul.mubr.bf16.gmra.mrb[0].mxu0 %v1200
    %v2170 = vpop.f32.mrb[0].mxu0
    %v2171 = vadd.f32 %v1289, %v2170
    %v2172 = vpop.f32.mrb[0].mxu0
    %v2173 = vadd.f32 %v1293, %v2172
    %v2174 = vpop.f32.mrb[0].mxu0
    %v2175 = vadd.f32 %v1289, %v2174
    %v2176 = vpop.f32.mrb[0].mxu0
    %v2177 = vadd.f32 %v1293, %v2176
    %2178 = vmatprep.mubr.bf16.mxu0 0
    %2179 = vmatmul.mubr.bf16.gmra.mrb[0].mxu0 %v1201
    %v2180 = vpop.f32.mrb[0].mxu0
    %v2181 = vadd.f32 %v1289, %v2180
    %v2182 = vpop.f32.mrb[0].mxu0
    %v2183 = vadd.f32 %v1293, %v2182
    %v2184 = vpop.f32.mrb[0].mxu0
    %v2185 = vadd.f32 %v1289, %v2184
    %v2186 = vpop.f32.mrb[0].mxu0
    %v2187 = vadd.f32 %v1293, %v2186
    %2188 = vmatprep.mubr.bf16.mxu0 0
    %2189 = vmatmul.mubr.bf16.gmra.mrb[0].mxu0 %v1202
    %v2190 = vpop.f32.mrb[0].mxu0
    %v2191 = vadd.f32 %v1289, %v2190
    %v2192 = vpop.f32.mrb[0].mxu0
    %v2193 = vadd.f32 %v1293, %v2192
    %v2194 = vpop.f32.mrb[0].mxu0
    %v2195 = vadd.f32 %v1289, %v2194
    %v2196 = vpop.f32.mrb[0].mxu0
    %v2197 = vadd.f32 %v1293, %v2196
    %2198 = vmatprep.mubr.bf16.mxu0 0
    %2199 = vmatmul.mubr.bf16.gmra.mrb[0].mxu0 %v1203
    %v2200 = vpop.f32.mrb[0].mxu0
    %v2201 = vadd.f32 %v1289, %v2200
    %v2202 = vpop.f32.mrb[0].mxu0
    %v2203 = vadd.f32 %v1293, %v2202
    %v2204 = vpop.f32.mrb[0].mxu0
    %v2205 = vadd.f32 %v1289, %v2204
    %v2206 = vpop.f32.mrb[0].mxu0
    %v2207 = vadd.f32 %v1293, %v2206
    %2208 = vdwg.mxu0
    %2209 = vmatprep.subr.bf16.mxu0 %v1509
    %2210 = vmatpush1.bf16.msra.mxu0 %v1508
    %2211 = vmatprep.subr.bf16.mxu0 %v1517
    %2212 = vmatpush1.bf16.msra.mxu0 %v1516
    %2213 = vmatprep.subr.bf16.mxu0 %v1525
    %2214 = vmatpush1.bf16.msra.mxu0 %v1524
    %2215 = vmatprep.subr.bf16.mxu0 %v1533
    %2216 = vmatpush1.bf16.msra.mxu0 %v1532
    %2217 = vmatprep.subr.bf16.mxu0 %v1541
    %2218 = vmatpush1.bf16.msra.mxu0 %v1540
    %2219 = vmatprep.subr.bf16.mxu0 %v1549
    %2220 = vmatpush1.bf16.msra.mxu0 %v1548
    %2221 = vmatprep.subr.bf16.mxu0 %v1557
    %2222 = vmatpush1.bf16.msra.mxu0 %v1556
    %2223 = vmatprep.subr.bf16.mxu0 %v1565
    %2224 = vmatpush1.bf16.msra.mxu0 %v1564
    %2225 = vmatprep.subr.bf16.mxu0 0
    %2226 = vmatpush1.bf16.msra.mxu0 0
    %2227 = vmatprep.subr.bf16.mxu0 0
    %2228 = vmatpush1.bf16.msra.mxu0 0
    %2229 = vmatprep.subr.bf16.mxu0 0
    %2230 = vmatpush1.bf16.msra.mxu0 0
    %2231 = vmatprep.subr.bf16.mxu0 0
    %2232 = vmatpush1.bf16.msra.mxu0 0
    %2233 = vmatprep.subr.bf16.mxu0 0
    %2234 = vmatpush1.bf16.msra.mxu0 0
    %2235 = vmatprep.subr.bf16.mxu0 0
    %2236 = vmatpush1.bf16.msra.mxu0 0
    %2237 = vmatprep.subr.bf16.mxu0 0
    %2238 = vmatpush1.bf16.msra.mxu0 0
    %2239 = vmatprep.subr.bf16.mxu0 0
    %2240 = vmatpush1.bf16.msra.mxu0 0
    %2241 = vmatprep.mubr.bf16.mxu0 0
    %2242 = vmatmul.mubr.bf16.gmra.mrb[0].mxu0 %v1188
    %v2243 = vpop.f32.mrb[0].mxu0
    %v2244 = vadd.f32 %v1297, %v2243
    %v2245 = vpop.f32.mrb[0].mxu0
    %v2246 = vadd.f32 %v1301, %v2245
    %v2247 = vpop.f32.mrb[0].mxu0
    %v2248 = vadd.f32 %v1297, %v2247
    %v2249 = vpop.f32.mrb[0].mxu0
    %v2250 = vadd.f32 %v1301, %v2249
    %2251 = vmatprep.mubr.bf16.mxu0 0
    %2252 = vmatmul.mubr.bf16.gmra.mrb[0].mxu0 %v1189
    %v2253 = vpop.f32.mrb[0].mxu0
    %v2254 = vadd.f32 %v1297, %v2253
    %v2255 = vpop.f32.mrb[0].mxu0
    %v2256 = vadd.f32 %v1301, %v2255
    %v2257 = vpop.f32.mrb[0].mxu0
    %v2258 = vadd.f32 %v1297, %v2257
    %v2259 = vpop.f32.mrb[0].mxu0
    %v2260 = vadd.f32 %v1301, %v2259
    %2261 = vmatprep.mubr.bf16.mxu0 0
    %2262 = vmatmul.mubr.bf16.gmra.mrb[0].mxu0 %v1190
    %v2263 = vpop.f32.mrb[0].mxu0
    %v2264 = vadd.f32 %v1297, %v2263
    %v2265 = vpop.f32.mrb[0].mxu0
    %v2266 = vadd.f32 %v1301, %v2265
    %v2267 = vpop.f32.mrb[0].mxu0
    %v2268 = vadd.f32 %v1297, %v2267
    %v2269 = vpop.f32.mrb[0].mxu0
    %v2270 = vadd.f32 %v1301, %v2269
    %2271 = vmatprep.mubr.bf16.mxu0 0
    %2272 = vmatmul.mubr.bf16.gmra.mrb[0].mxu0 %v1191
    %v2273 = vpop.f32.mrb[0].mxu0
    %v2274 = vadd.f32 %v1297, %v2273
    %v2275 = vpop.f32.mrb[0].mxu0
    %v2276 = vadd.f32 %v1301, %v2275
    %v2277 = vpop.f32.mrb[0].mxu0
    %v2278 = vadd.f32 %v1297, %v2277
    %v2279 = vpop.f32.mrb[0].mxu0
    %v2280 = vadd.f32 %v1301, %v2279
    %2281 = vmatprep.mubr.bf16.mxu0 0
    %2282 = vmatmul.mubr.bf16.gmra.mrb[0].mxu0 %v1192
    %v2283 = vpop.f32.mrb[0].mxu0
    %v2284 = vadd.f32 %v1297, %v2283
    %v2285 = vpop.f32.mrb[0].mxu0
    %v2286 = vadd.f32 %v1301, %v2285
    %v2287 = vpop.f32.mrb[0].mxu0
    %v2288 = vadd.f32 %v1297, %v2287
    %v2289 = vpop.f32.mrb[0].mxu0
    %v2290 = vadd.f32 %v1301, %v2289
    %2291 = vmatprep.mubr.bf16.mxu0 0
    %2292 = vmatmul.mubr.bf16.gmra.mrb[0].mxu0 %v1193
    %v2293 = vpop.f32.mrb[0].mxu0
    %v2294 = vadd.f32 %v1297, %v2293
    %v2295 = vpop.f32.mrb[0].mxu0
    %v2296 = vadd.f32 %v1301, %v2295
    %v2297 = vpop.f32.mrb[0].mxu0
    %v2298 = vadd.f32 %v1297, %v2297
    %v2299 = vpop.f32.mrb[0].mxu0
    %v2300 = vadd.f32 %v1301, %v2299
    %2301 = vmatprep.mubr.bf16.mxu0 0
    %2302 = vmatmul.mubr.bf16.gmra.mrb[0].mxu0 %v1194
    %v2303 = vpop.f32.mrb[0].mxu0
    %v2304 = vadd.f32 %v1297, %v2303
    %v2305 = vpop.f32.mrb[0].mxu0
    %v2306 = vadd.f32 %v1301, %v2305
    %v2307 = vpop.f32.mrb[0].mxu0
    %v2308 = vadd.f32 %v1297, %v2307
    %v2309 = vpop.f32.mrb[0].mxu0
    %v2310 = vadd.f32 %v1301, %v2309
    %2311 = vmatprep.mubr.bf16.mxu0 0
    %2312 = vmatmul.mubr.bf16.gmra.mrb[0].mxu0 %v1195
    %v2313 = vpop.f32.mrb[0].mxu0
    %v2314 = vadd.f32 %v1297, %v2313
    %v2315 = vpop.f32.mrb[0].mxu0
    %v2316 = vadd.f32 %v1301, %v2315
    %v2317 = vpop.f32.mrb[0].mxu0
    %v2318 = vadd.f32 %v1297, %v2317
    %v2319 = vpop.f32.mrb[0].mxu0
    %v2320 = vadd.f32 %v1301, %v2319
    %2321 = vmatprep.mubr.bf16.mxu0 0
    %2322 = vmatmul.mubr.bf16.gmra.mrb[0].mxu0 %v1196
    %v2323 = vpop.f32.mrb[0].mxu0
    %v2324 = vadd.f32 %v1297, %v2323
    %v2325 = vpop.f32.mrb[0].mxu0
    %v2326 = vadd.f32 %v1301, %v2325
    %v2327 = vpop.f32.mrb[0].mxu0
    %v2328 = vadd.f32 %v1297, %v2327
    %v2329 = vpop.f32.mrb[0].mxu0
    %v2330 = vadd.f32 %v1301, %v2329
    %2331 = vmatprep.mubr.bf16.mxu0 0
    %2332 = vmatmul.mubr.bf16.gmra.mrb[0].mxu0 %v1197
    %v2333 = vpop.f32.mrb[0].mxu0
    %v2334 = vadd.f32 %v1297, %v2333
    %v2335 = vpop.f32.mrb[0].mxu0
    %v2336 = vadd.f32 %v1301, %v2335
    %v2337 = vpop.f32.mrb[0].mxu0
    %v2338 = vadd.f32 %v1297, %v2337
    %v2339 = vpop.f32.mrb[0].mxu0
    %v2340 = vadd.f32 %v1301, %v2339
    %2341 = vmatprep.mubr.bf16.mxu0 0
    %2342 = vmatmul.mubr.bf16.gmra.mrb[0].mxu0 %v1198
    %v2343 = vpop.f32.mrb[0].mxu0
    %v2344 = vadd.f32 %v1297, %v2343
    %v2345 = vpop.f32.mrb[0].mxu0
    %v2346 = vadd.f32 %v1301, %v2345
    %v2347 = vpop.f32.mrb[0].mxu0
    %v2348 = vadd.f32 %v1297, %v2347
    %v2349 = vpop.f32.mrb[0].mxu0
    %v2350 = vadd.f32 %v1301, %v2349
    %2351 = vmatprep.mubr.bf16.mxu0 0
    %2352 = vmatmul.mubr.bf16.gmra.mrb[0].mxu0 %v1199
    %v2353 = vpop.f32.mrb[0].mxu0
    %v2354 = vadd.f32 %v1297, %v2353
    %v2355 = vpop.f32.mrb[0].mxu0
    %v2356 = vadd.f32 %v1301, %v2355
    %v2357 = vpop.f32.mrb[0].mxu0
    %v2358 = vadd.f32 %v1297, %v2357
    %v2359 = vpop.f32.mrb[0].mxu0
    %v2360 = vadd.f32 %v1301, %v2359
    %2361 = vmatprep.mubr.bf16.mxu0 0
    %2362 = vmatmul.mubr.bf16.gmra.mrb[0].mxu0 %v1200
    %v2363 = vpop.f32.mrb[0].mxu0
    %v2364 = vadd.f32 %v1297, %v2363
    %v2365 = vpop.f32.mrb[0].mxu0
    %v2366 = vadd.f32 %v1301, %v2365
    %v2367 = vpop.f32.mrb[0].mxu0
    %v2368 = vadd.f32 %v1297, %v2367
    %v2369 = vpop.f32.mrb[0].mxu0
    %v2370 = vadd.f32 %v1301, %v2369
    %2371 = vmatprep.mubr.bf16.mxu0 0
    %2372 = vmatmul.mubr.bf16.gmra.mrb[0].mxu0 %v1201
    %v2373 = vpop.f32.mrb[0].mxu0
    %v2374 = vadd.f32 %v1297, %v2373
    %v2375 = vpop.f32.mrb[0].mxu0
    %v2376 = vadd.f32 %v1301, %v2375
    %v2377 = vpop.f32.mrb[0].mxu0
    %v2378 = vadd.f32 %v1297, %v2377
    %v2379 = vpop.f32.mrb[0].mxu0
    %v2380 = vadd.f32 %v1301, %v2379
    %2381 = vmatprep.mubr.bf16.mxu0 0
    %2382 = vmatmul.mubr.bf16.gmra.mrb[0].mxu0 %v1202
    %v2383 = vpop.f32.mrb[0].mxu0
    %v2384 = vadd.f32 %v1297, %v2383
    %v2385 = vpop.f32.mrb[0].mxu0
    %v2386 = vadd.f32 %v1301, %v2385
    %v2387 = vpop.f32.mrb[0].mxu0
    %v2388 = vadd.f32 %v1297, %v2387
    %v2389 = vpop.f32.mrb[0].mxu0
    %v2390 = vadd.f32 %v1301, %v2389
    %2391 = vmatprep.mubr.bf16.mxu0 0
    %2392 = vmatmul.mubr.bf16.gmra.mrb[0].mxu0 %v1203
    %v2393 = vpop.f32.mrb[0].mxu0
    %v2394 = vadd.f32 %v1297, %v2393
    %v2395 = vpop.f32.mrb[0].mxu0
    %v2396 = vadd.f32 %v1301, %v2395
    %v2397 = vpop.f32.mrb[0].mxu0
    %v2398 = vadd.f32 %v1297, %v2397
    %v2399 = vpop.f32.mrb[0].mxu0
    %v2400 = vadd.f32 %v1301, %v2399
    %2401 = vdwg.mxu0
    %v2402 = vmax.f32 %v1665, %v1669
    %v2403 = vrot.slane %v2402, 4
    %v2404 = vmax.f32 %v2402, %v2403
    %v2405 = vrot.slane %v2404, 2
    %v2406 = vmax.f32 %v2404, %v2405
    %v2407 = vrot.slane %v2406, 1
    %v2408 = vmax.f32 %v2406, %v2407
    %v2409 = vmax.f32 %v1667, %v1671
    %v2410 = vrot.slane %v2409, 4
    %v2411 = vmax.f32 %v2409, %v2410
    %v2412 = vrot.slane %v2411, 2
    %v2413 = vmax.f32 %v2411, %v2412
    %v2414 = vrot.slane %v2413, 1
    %v2415 = vmax.f32 %v2413, %v2414
    %v2416 = vmax.f32 %v1858, %v1862
    %v2417 = vrot.slane %v2416, 4
    %v2418 = vmax.f32 %v2416, %v2417
    %v2419 = vrot.slane %v2418, 2
    %v2420 = vmax.f32 %v2418, %v2419
    %v2421 = vrot.slane %v2420, 1
    %v2422 = vmax.f32 %v2420, %v2421
    %v2423 = vmax.f32 %v1860, %v1864
    %v2424 = vrot.slane %v2423, 4
    %v2425 = vmax.f32 %v2423, %v2424
    %v2426 = vrot.slane %v2425, 2
    %v2427 = vmax.f32 %v2425, %v2426
    %v2428 = vrot.slane %v2427, 1
    %v2429 = vmax.f32 %v2427, %v2428
    %v2430 = vmax.f32 %v2051, %v2055
    %v2431 = vrot.slane %v2430, 4
    %v2432 = vmax.f32 %v2430, %v2431
    %v2433 = vrot.slane %v2432, 2
    %v2434 = vmax.f32 %v2432, %v2433
    %v2435 = vrot.slane %v2434, 1
    %v2436 = vmax.f32 %v2434, %v2435
    %v2437 = vmax.f32 %v2053, %v2057
    %v2438 = vrot.slane %v2437, 4
    %v2439 = vmax.f32 %v2437, %v2438
    %v2440 = vrot.slane %v2439, 2
    %v2441 = vmax.f32 %v2439, %v2440
    %v2442 = vrot.slane %v2441, 1
    %v2443 = vmax.f32 %v2441, %v2442
    %v2444 = vmax.f32 %v2244, %v2248
    %v2445 = vrot.slane %v2444, 4
    %v2446 = vmax.f32 %v2444, %v2445
    %v2447 = vrot.slane %v2446, 2
    %v2448 = vmax.f32 %v2446, %v2447
    %v2449 = vrot.slane %v2448, 1
    %v2450 = vmax.f32 %v2448, %v2449
    %v2451 = vmax.f32 %v2246, %v2250
    %v2452 = vrot.slane %v2451, 4
    %v2453 = vmax.f32 %v2451, %v2452
    %v2454 = vrot.slane %v2453, 2
    %v2455 = vmax.f32 %v2453, %v2454
    %v2456 = vrot.slane %v2455, 1
    %v2457 = vmax.f32 %v2455, %v2456
    %v2458 = vmax.f32 %v1675, %v1679
    %v2459 = vrot.slane %v2458, 4
    %v2460 = vmax.f32 %v2458, %v2459
    %v2461 = vrot.slane %v2460, 2
    %v2462 = vmax.f32 %v2460, %v2461
    %v2463 = vrot.slane %v2462, 1
    %v2464 = vmax.f32 %v2462, %v2463
    %v2465 = vmax.f32 %v1677, %v1681
    %v2466 = vrot.slane %v2465, 4
    %v2467 = vmax.f32 %v2465, %v2466
    %v2468 = vrot.slane %v2467, 2
    %v2469 = vmax.f32 %v2467, %v2468
    %v2470 = vrot.slane %v2469, 1
    %v2471 = vmax.f32 %v2469, %v2470
    %v2472 = vmax.f32 %v1868, %v1872
    %v2473 = vrot.slane %v2472, 4
    %v2474 = vmax.f32 %v2472, %v2473
    %v2475 = vrot.slane %v2474, 2
    %v2476 = vmax.f32 %v2474, %v2475
    %v2477 = vrot.slane %v2476, 1
    %v2478 = vmax.f32 %v2476, %v2477
    %v2479 = vmax.f32 %v1870, %v1874
    %v2480 = vrot.slane %v2479, 4
    %v2481 = vmax.f32 %v2479, %v2480
    %v2482 = vrot.slane %v2481, 2
    %v2483 = vmax.f32 %v2481, %v2482
    %v2484 = vrot.slane %v2483, 1
    %v2485 = vmax.f32 %v2483, %v2484
    %v2486 = vmax.f32 %v2061, %v2065
    %v2487 = vrot.slane %v2486, 4
    %v2488 = vmax.f32 %v2486, %v2487
    %v2489 = vrot.slane %v2488, 2
    %v2490 = vmax.f32 %v2488, %v2489
    %v2491 = vrot.slane %v2490, 1
    %v2492 = vmax.f32 %v2490, %v2491
    %v2493 = vmax.f32 %v2063, %v2067
    %v2494 = vrot.slane %v2493, 4
    %v2495 = vmax.f32 %v2493, %v2494
    %v2496 = vrot.slane %v2495, 2
    %v2497 = vmax.f32 %v2495, %v2496
    %v2498 = vrot.slane %v2497, 1
    %v2499 = vmax.f32 %v2497, %v2498
    %v2500 = vmax.f32 %v2254, %v2258
    %v2501 = vrot.slane %v2500, 4
    %v2502 = vmax.f32 %v2500, %v2501
    %v2503 = vrot.slane %v2502, 2
    %v2504 = vmax.f32 %v2502, %v2503
    %v2505 = vrot.slane %v2504, 1
    %v2506 = vmax.f32 %v2504, %v2505
    %v2507 = vmax.f32 %v2256, %v2260
    %v2508 = vrot.slane %v2507, 4
    %v2509 = vmax.f32 %v2507, %v2508
    %v2510 = vrot.slane %v2509, 2
    %v2511 = vmax.f32 %v2509, %v2510
    %v2512 = vrot.slane %v2511, 1
    %v2513 = vmax.f32 %v2511, %v2512
    %v2514 = vmax.f32 %v1685, %v1689
    %v2515 = vrot.slane %v2514, 4
    %v2516 = vmax.f32 %v2514, %v2515
    %v2517 = vrot.slane %v2516, 2
    %v2518 = vmax.f32 %v2516, %v2517
    %v2519 = vrot.slane %v2518, 1
    %v2520 = vmax.f32 %v2518, %v2519
    %v2521 = vmax.f32 %v1687, %v1691
    %v2522 = vrot.slane %v2521, 4
    %v2523 = vmax.f32 %v2521, %v2522
    %v2524 = vrot.slane %v2523, 2
    %v2525 = vmax.f32 %v2523, %v2524
    %v2526 = vrot.slane %v2525, 1
    %v2527 = vmax.f32 %v2525, %v2526
    %v2528 = vmax.f32 %v1878, %v1882
    %v2529 = vrot.slane %v2528, 4
    %v2530 = vmax.f32 %v2528, %v2529
    %v2531 = vrot.slane %v2530, 2
    %v2532 = vmax.f32 %v2530, %v2531
    %v2533 = vrot.slane %v2532, 1
    %v2534 = vmax.f32 %v2532, %v2533
    %v2535 = vmax.f32 %v1880, %v1884
    %v2536 = vrot.slane %v2535, 4
    %v2537 = vmax.f32 %v2535, %v2536
    %v2538 = vrot.slane %v2537, 2
    %v2539 = vmax.f32 %v2537, %v2538
    %v2540 = vrot.slane %v2539, 1
    %v2541 = vmax.f32 %v2539, %v2540
    %v2542 = vmax.f32 %v2071, %v2075
    %v2543 = vrot.slane %v2542, 4
    %v2544 = vmax.f32 %v2542, %v2543
    %v2545 = vrot.slane %v2544, 2
    %v2546 = vmax.f32 %v2544, %v2545
    %v2547 = vrot.slane %v2546, 1
    %v2548 = vmax.f32 %v2546, %v2547
    %v2549 = vmax.f32 %v2073, %v2077
    %v2550 = vrot.slane %v2549, 4
    %v2551 = vmax.f32 %v2549, %v2550
    %v2552 = vrot.slane %v2551, 2
    %v2553 = vmax.f32 %v2551, %v2552
    %v2554 = vrot.slane %v2553, 1
    %v2555 = vmax.f32 %v2553, %v2554
    %v2556 = vmax.f32 %v2264, %v2268
    %v2557 = vrot.slane %v2556, 4
    %v2558 = vmax.f32 %v2556, %v2557
    %v2559 = vrot.slane %v2558, 2
    %v2560 = vmax.f32 %v2558, %v2559
    %v2561 = vrot.slane %v2560, 1
    %v2562 = vmax.f32 %v2560, %v2561
    %v2563 = vmax.f32 %v2266, %v2270
    %v2564 = vrot.slane %v2563, 4
    %v2565 = vmax.f32 %v2563, %v2564
    %v2566 = vrot.slane %v2565, 2
    %v2567 = vmax.f32 %v2565, %v2566
    %v2568 = vrot.slane %v2567, 1
    %v2569 = vmax.f32 %v2567, %v2568
    %v2570 = vmax.f32 %v1695, %v1699
    %v2571 = vrot.slane %v2570, 4
    %v2572 = vmax.f32 %v2570, %v2571
    %v2573 = vrot.slane %v2572, 2
    %v2574 = vmax.f32 %v2572, %v2573
    %v2575 = vrot.slane %v2574, 1
    %v2576 = vmax.f32 %v2574, %v2575
    %v2577 = vmax.f32 %v1697, %v1701
    %v2578 = vrot.slane %v2577, 4
    %v2579 = vmax.f32 %v2577, %v2578
    %v2580 = vrot.slane %v2579, 2
    %v2581 = vmax.f32 %v2579, %v2580
    %v2582 = vrot.slane %v2581, 1
    %v2583 = vmax.f32 %v2581, %v2582
    %v2584 = vmax.f32 %v1888, %v1892
    %v2585 = vrot.slane %v2584, 4
    %v2586 = vmax.f32 %v2584, %v2585
    %v2587 = vrot.slane %v2586, 2
    %v2588 = vmax.f32 %v2586, %v2587
    %v2589 = vrot.slane %v2588, 1
    %v2590 = vmax.f32 %v2588, %v2589
    %v2591 = vmax.f32 %v1890, %v1894
    %v2592 = vrot.slane %v2591, 4
    %v2593 = vmax.f32 %v2591, %v2592
    %v2594 = vrot.slane %v2593, 2
    %v2595 = vmax.f32 %v2593, %v2594
    %v2596 = vrot.slane %v2595, 1
    %v2597 = vmax.f32 %v2595, %v2596
    %v2598 = vmax.f32 %v2081, %v2085
    %v2599 = vrot.slane %v2598, 4
    %v2600 = vmax.f32 %v2598, %v2599
    %v2601 = vrot.slane %v2600, 2
    %v2602 = vmax.f32 %v2600, %v2601
    %v2603 = vrot.slane %v2602, 1
    %v2604 = vmax.f32 %v2602, %v2603
    %v2605 = vmax.f32 %v2083, %v2087
    %v2606 = vrot.slane %v2605, 4
    %v2607 = vmax.f32 %v2605, %v2606
    %v2608 = vrot.slane %v2607, 2
    %v2609 = vmax.f32 %v2607, %v2608
    %v2610 = vrot.slane %v2609, 1
    %v2611 = vmax.f32 %v2609, %v2610
    %v2612 = vmax.f32 %v2274, %v2278
    %v2613 = vrot.slane %v2612, 4
    %v2614 = vmax.f32 %v2612, %v2613
    %v2615 = vrot.slane %v2614, 2
    %v2616 = vmax.f32 %v2614, %v2615
    %v2617 = vrot.slane %v2616, 1
    %v2618 = vmax.f32 %v2616, %v2617
    %v2619 = vmax.f32 %v2276, %v2280
    %v2620 = vrot.slane %v2619, 4
    %v2621 = vmax.f32 %v2619, %v2620
    %v2622 = vrot.slane %v2621, 2
    %v2623 = vmax.f32 %v2621, %v2622
    %v2624 = vrot.slane %v2623, 1
    %v2625 = vmax.f32 %v2623, %v2624
    %v2626 = vmax.f32 %v1705, %v1709
    %v2627 = vrot.slane %v2626, 4
    %v2628 = vmax.f32 %v2626, %v2627
    %v2629 = vrot.slane %v2628, 2
    %v2630 = vmax.f32 %v2628, %v2629
    %v2631 = vrot.slane %v2630, 1
    %v2632 = vmax.f32 %v2630, %v2631
    %v2633 = vmax.f32 %v1707, %v1711
    %v2634 = vrot.slane %v2633, 4
    %v2635 = vmax.f32 %v2633, %v2634
    %v2636 = vrot.slane %v2635, 2
    %v2637 = vmax.f32 %v2635, %v2636
    %v2638 = vrot.slane %v2637, 1
    %v2639 = vmax.f32 %v2637, %v2638
    %v2640 = vmax.f32 %v1898, %v1902
    %v2641 = vrot.slane %v2640, 4
    %v2642 = vmax.f32 %v2640, %v2641
    %v2643 = vrot.slane %v2642, 2
    %v2644 = vmax.f32 %v2642, %v2643
    %v2645 = vrot.slane %v2644, 1
    %v2646 = vmax.f32 %v2644, %v2645
    %v2647 = vmax.f32 %v1900, %v1904
    %v2648 = vrot.slane %v2647, 4
    %v2649 = vmax.f32 %v2647, %v2648
    %v2650 = vrot.slane %v2649, 2
    %v2651 = vmax.f32 %v2649, %v2650
    %v2652 = vrot.slane %v2651, 1
    %v2653 = vmax.f32 %v2651, %v2652
    %v2654 = vmax.f32 %v2091, %v2095
    %v2655 = vrot.slane %v2654, 4
    %v2656 = vmax.f32 %v2654, %v2655
    %v2657 = vrot.slane %v2656, 2
    %v2658 = vmax.f32 %v2656, %v2657
    %v2659 = vrot.slane %v2658, 1
    %v2660 = vmax.f32 %v2658, %v2659
    %v2661 = vmax.f32 %v2093, %v2097
    %v2662 = vrot.slane %v2661, 4
    %v2663 = vmax.f32 %v2661, %v2662
    %v2664 = vrot.slane %v2663, 2
    %v2665 = vmax.f32 %v2663, %v2664
    %v2666 = vrot.slane %v2665, 1
    %v2667 = vmax.f32 %v2665, %v2666
    %v2668 = vmax.f32 %v2284, %v2288
    %v2669 = vrot.slane %v2668, 4
    %v2670 = vmax.f32 %v2668, %v2669
    %v2671 = vrot.slane %v2670, 2
    %v2672 = vmax.f32 %v2670, %v2671
    %v2673 = vrot.slane %v2672, 1
    %v2674 = vmax.f32 %v2672, %v2673
    %v2675 = vmax.f32 %v2286, %v2290
    %v2676 = vrot.slane %v2675, 4
    %v2677 = vmax.f32 %v2675, %v2676
    %v2678 = vrot.slane %v2677, 2
    %v2679 = vmax.f32 %v2677, %v2678
    %v2680 = vrot.slane %v2679, 1
    %v2681 = vmax.f32 %v2679, %v2680
    %v2682 = vmax.f32 %v1715, %v1719
    %v2683 = vrot.slane %v2682, 4
    %v2684 = vmax.f32 %v2682, %v2683
    %v2685 = vrot.slane %v2684, 2
    %v2686 = vmax.f32 %v2684, %v2685
    %v2687 = vrot.slane %v2686, 1
    %v2688 = vmax.f32 %v2686, %v2687
    %v2689 = vmax.f32 %v1717, %v1721
    %v2690 = vrot.slane %v2689, 4
    %v2691 = vmax.f32 %v2689, %v2690
    %v2692 = vrot.slane %v2691, 2
    %v2693 = vmax.f32 %v2691, %v2692
    %v2694 = vrot.slane %v2693, 1
    %v2695 = vmax.f32 %v2693, %v2694
    %v2696 = vmax.f32 %v1908, %v1912
    %v2697 = vrot.slane %v2696, 4
    %v2698 = vmax.f32 %v2696, %v2697
    %v2699 = vrot.slane %v2698, 2
    %v2700 = vmax.f32 %v2698, %v2699
    %v2701 = vrot.slane %v2700, 1
    %v2702 = vmax.f32 %v2700, %v2701
    %v2703 = vmax.f32 %v1910, %v1914
    %v2704 = vrot.slane %v2703, 4
    %v2705 = vmax.f32 %v2703, %v2704
    %v2706 = vrot.slane %v2705, 2
    %v2707 = vmax.f32 %v2705, %v2706
    %v2708 = vrot.slane %v2707, 1
    %v2709 = vmax.f32 %v2707, %v2708
    %v2710 = vmax.f32 %v2101, %v2105
    %v2711 = vrot.slane %v2710, 4
    %v2712 = vmax.f32 %v2710, %v2711
    %v2713 = vrot.slane %v2712, 2
    %v2714 = vmax.f32 %v2712, %v2713
    %v2715 = vrot.slane %v2714, 1
    %v2716 = vmax.f32 %v2714, %v2715
    %v2717 = vmax.f32 %v2103, %v2107
    %v2718 = vrot.slane %v2717, 4
    %v2719 = vmax.f32 %v2717, %v2718
    %v2720 = vrot.slane %v2719, 2
    %v2721 = vmax.f32 %v2719, %v2720
    %v2722 = vrot.slane %v2721, 1
    %v2723 = vmax.f32 %v2721, %v2722
    %v2724 = vmax.f32 %v2294, %v2298
    %v2725 = vrot.slane %v2724, 4
    %v2726 = vmax.f32 %v2724, %v2725
    %v2727 = vrot.slane %v2726, 2
    %v2728 = vmax.f32 %v2726, %v2727
    %v2729 = vrot.slane %v2728, 1
    %v2730 = vmax.f32 %v2728, %v2729
    %v2731 = vmax.f32 %v2296, %v2300
    %v2732 = vrot.slane %v2731, 4
    %v2733 = vmax.f32 %v2731, %v2732
    %v2734 = vrot.slane %v2733, 2
    %v2735 = vmax.f32 %v2733, %v2734
    %v2736 = vrot.slane %v2735, 1
    %v2737 = vmax.f32 %v2735, %v2736
    %v2738 = vmax.f32 %v1725, %v1729
    %v2739 = vrot.slane %v2738, 4
    %v2740 = vmax.f32 %v2738, %v2739
    %v2741 = vrot.slane %v2740, 2
    %v2742 = vmax.f32 %v2740, %v2741
    %v2743 = vrot.slane %v2742, 1
    %v2744 = vmax.f32 %v2742, %v2743
    %v2745 = vmax.f32 %v1727, %v1731
    %v2746 = vrot.slane %v2745, 4
    %v2747 = vmax.f32 %v2745, %v2746
    %v2748 = vrot.slane %v2747, 2
    %v2749 = vmax.f32 %v2747, %v2748
    %v2750 = vrot.slane %v2749, 1
    %v2751 = vmax.f32 %v2749, %v2750
    %v2752 = vmax.f32 %v1918, %v1922
    %v2753 = vrot.slane %v2752, 4
    %v2754 = vmax.f32 %v2752, %v2753
    %v2755 = vrot.slane %v2754, 2
    %v2756 = vmax.f32 %v2754, %v2755
    %v2757 = vrot.slane %v2756, 1
    %v2758 = vmax.f32 %v2756, %v2757
    %v2759 = vmax.f32 %v1920, %v1924
    %v2760 = vrot.slane %v2759, 4
    %v2761 = vmax.f32 %v2759, %v2760
    %v2762 = vrot.slane %v2761, 2
    %v2763 = vmax.f32 %v2761, %v2762
    %v2764 = vrot.slane %v2763, 1
    %v2765 = vmax.f32 %v2763, %v2764
    %v2766 = vmax.f32 %v2111, %v2115
    %v2767 = vrot.slane %v2766, 4
    %v2768 = vmax.f32 %v2766, %v2767
    %v2769 = vrot.slane %v2768, 2
    %v2770 = vmax.f32 %v2768, %v2769
    %v2771 = vrot.slane %v2770, 1
    %v2772 = vmax.f32 %v2770, %v2771
    %v2773 = vmax.f32 %v2113, %v2117
    %v2774 = vrot.slane %v2773, 4
    %v2775 = vmax.f32 %v2773, %v2774
    %v2776 = vrot.slane %v2775, 2
    %v2777 = vmax.f32 %v2775, %v2776
    %v2778 = vrot.slane %v2777, 1
    %v2779 = vmax.f32 %v2777, %v2778
    %v2780 = vmax.f32 %v2304, %v2308
    %v2781 = vrot.slane %v2780, 4
    %v2782 = vmax.f32 %v2780, %v2781
    %v2783 = vrot.slane %v2782, 2
    %v2784 = vmax.f32 %v2782, %v2783
    %v2785 = vrot.slane %v2784, 1
    %v2786 = vmax.f32 %v2784, %v2785
    %v2787 = vmax.f32 %v2306, %v2310
    %v2788 = vrot.slane %v2787, 4
    %v2789 = vmax.f32 %v2787, %v2788
    %v2790 = vrot.slane %v2789, 2
    %v2791 = vmax.f32 %v2789, %v2790
    %v2792 = vrot.slane %v2791, 1
    %v2793 = vmax.f32 %v2791, %v2792
    %v2794 = vmax.f32 %v1735, %v1739
    %v2795 = vrot.slane %v2794, 4
    %v2796 = vmax.f32 %v2794, %v2795
    %v2797 = vrot.slane %v2796, 2
    %v2798 = vmax.f32 %v2796, %v2797
    %v2799 = vrot.slane %v2798, 1
    %v2800 = vmax.f32 %v2798, %v2799
    %v2801 = vmax.f32 %v1737, %v1741
    %v2802 = vrot.slane %v2801, 4
    %v2803 = vmax.f32 %v2801, %v2802
    %v2804 = vrot.slane %v2803, 2
    %v2805 = vmax.f32 %v2803, %v2804
    %v2806 = vrot.slane %v2805, 1
    %v2807 = vmax.f32 %v2805, %v2806
    %v2808 = vmax.f32 %v1928, %v1932
    %v2809 = vrot.slane %v2808, 4
    %v2810 = vmax.f32 %v2808, %v2809
    %v2811 = vrot.slane %v2810, 2
    %v2812 = vmax.f32 %v2810, %v2811
    %v2813 = vrot.slane %v2812, 1
    %v2814 = vmax.f32 %v2812, %v2813
    %v2815 = vmax.f32 %v1930, %v1934
    %v2816 = vrot.slane %v2815, 4
    %v2817 = vmax.f32 %v2815, %v2816
    %v2818 = vrot.slane %v2817, 2
    %v2819 = vmax.f32 %v2817, %v2818
    %v2820 = vrot.slane %v2819, 1
    %v2821 = vmax.f32 %v2819, %v2820
    %v2822 = vmax.f32 %v2121, %v2125
    %v2823 = vrot.slane %v2822, 4
    %v2824 = vmax.f32 %v2822, %v2823
    %v2825 = vrot.slane %v2824, 2
    %v2826 = vmax.f32 %v2824, %v2825
    %v2827 = vrot.slane %v2826, 1
    %v2828 = vmax.f32 %v2826, %v2827
    %v2829 = vmax.f32 %v2123, %v2127
    %v2830 = vrot.slane %v2829, 4
    %v2831 = vmax.f32 %v2829, %v2830
    %v2832 = vrot.slane %v2831, 2
    %v2833 = vmax.f32 %v2831, %v2832
    %v2834 = vrot.slane %v2833, 1
    %v2835 = vmax.f32 %v2833, %v2834
    %v2836 = vmax.f32 %v2314, %v2318
    %v2837 = vrot.slane %v2836, 4
    %v2838 = vmax.f32 %v2836, %v2837
    %v2839 = vrot.slane %v2838, 2
    %v2840 = vmax.f32 %v2838, %v2839
    %v2841 = vrot.slane %v2840, 1
    %v2842 = vmax.f32 %v2840, %v2841
    %v2843 = vmax.f32 %v2316, %v2320
    %v2844 = vrot.slane %v2843, 4
    %v2845 = vmax.f32 %v2843, %v2844
    %v2846 = vrot.slane %v2845, 2
    %v2847 = vmax.f32 %v2845, %v2846
    %v2848 = vrot.slane %v2847, 1
    %v2849 = vmax.f32 %v2847, %v2848
    %v2850 = vmax.f32 %v1745, %v1749
    %v2851 = vrot.slane %v2850, 4
    %v2852 = vmax.f32 %v2850, %v2851
    %v2853 = vrot.slane %v2852, 2
    %v2854 = vmax.f32 %v2852, %v2853
    %v2855 = vrot.slane %v2854, 1
    %v2856 = vmax.f32 %v2854, %v2855
    %v2857 = vmax.f32 %v1747, %v1751
    %v2858 = vrot.slane %v2857, 4
    %v2859 = vmax.f32 %v2857, %v2858
    %v2860 = vrot.slane %v2859, 2
    %v2861 = vmax.f32 %v2859, %v2860
    %v2862 = vrot.slane %v2861, 1
    %v2863 = vmax.f32 %v2861, %v2862
    %v2864 = vmax.f32 %v1938, %v1942
    %v2865 = vrot.slane %v2864, 4
    %v2866 = vmax.f32 %v2864, %v2865
    %v2867 = vrot.slane %v2866, 2
    %v2868 = vmax.f32 %v2866, %v2867
    %v2869 = vrot.slane %v2868, 1
    %v2870 = vmax.f32 %v2868, %v2869
    %v2871 = vmax.f32 %v1940, %v1944
    %v2872 = vrot.slane %v2871, 4
    %v2873 = vmax.f32 %v2871, %v2872
    %v2874 = vrot.slane %v2873, 2
    %v2875 = vmax.f32 %v2873, %v2874
    %v2876 = vrot.slane %v2875, 1
    %v2877 = vmax.f32 %v2875, %v2876
    %v2878 = vmax.f32 %v2131, %v2135
    %v2879 = vrot.slane %v2878, 4
    %v2880 = vmax.f32 %v2878, %v2879
    %v2881 = vrot.slane %v2880, 2
    %v2882 = vmax.f32 %v2880, %v2881
    %v2883 = vrot.slane %v2882, 1
    %v2884 = vmax.f32 %v2882, %v2883
    %v2885 = vmax.f32 %v2133, %v2137
    %v2886 = vrot.slane %v2885, 4
    %v2887 = vmax.f32 %v2885, %v2886
    %v2888 = vrot.slane %v2887, 2
    %v2889 = vmax.f32 %v2887, %v2888
    %v2890 = vrot.slane %v2889, 1
    %v2891 = vmax.f32 %v2889, %v2890
    %v2892 = vmax.f32 %v2324, %v2328
    %v2893 = vrot.slane %v2892, 4
    %v2894 = vmax.f32 %v2892, %v2893
    %v2895 = vrot.slane %v2894, 2
    %v2896 = vmax.f32 %v2894, %v2895
    %v2897 = vrot.slane %v2896, 1
    %v2898 = vmax.f32 %v2896, %v2897
    %v2899 = vmax.f32 %v2326, %v2330
    %v2900 = vrot.slane %v2899, 4
    %v2901 = vmax.f32 %v2899, %v2900
    %v2902 = vrot.slane %v2901, 2
    %v2903 = vmax.f32 %v2901, %v2902
    %v2904 = vrot.slane %v2903, 1
    %v2905 = vmax.f32 %v2903, %v2904
    %v2906 = vmax.f32 %v1755, %v1759
    %v2907 = vrot.slane %v2906, 4
    %v2908 = vmax.f32 %v2906, %v2907
    %v2909 = vrot.slane %v2908, 2
    %v2910 = vmax.f32 %v2908, %v2909
    %v2911 = vrot.slane %v2910, 1
    %v2912 = vmax.f32 %v2910, %v2911
    %v2913 = vmax.f32 %v1757, %v1761
    %v2914 = vrot.slane %v2913, 4
    %v2915 = vmax.f32 %v2913, %v2914
    %v2916 = vrot.slane %v2915, 2
    %v2917 = vmax.f32 %v2915, %v2916
    %v2918 = vrot.slane %v2917, 1
    %v2919 = vmax.f32 %v2917, %v2918
    %v2920 = vmax.f32 %v1948, %v1952
    %v2921 = vrot.slane %v2920, 4
    %v2922 = vmax.f32 %v2920, %v2921
    %v2923 = vrot.slane %v2922, 2
    %v2924 = vmax.f32 %v2922, %v2923
    %v2925 = vrot.slane %v2924, 1
    %v2926 = vmax.f32 %v2924, %v2925
    %v2927 = vmax.f32 %v1950, %v1954
    %v2928 = vrot.slane %v2927, 4
    %v2929 = vmax.f32 %v2927, %v2928
    %v2930 = vrot.slane %v2929, 2
    %v2931 = vmax.f32 %v2929, %v2930
    %v2932 = vrot.slane %v2931, 1
    %v2933 = vmax.f32 %v2931, %v2932
    %v2934 = vmax.f32 %v2141, %v2145
    %v2935 = vrot.slane %v2934, 4
    %v2936 = vmax.f32 %v2934, %v2935
    %v2937 = vrot.slane %v2936, 2
    %v2938 = vmax.f32 %v2936, %v2937
    %v2939 = vrot.slane %v2938, 1
    %v2940 = vmax.f32 %v2938, %v2939
    %v2941 = vmax.f32 %v2143, %v2147
    %v2942 = vrot.slane %v2941, 4
    %v2943 = vmax.f32 %v2941, %v2942
    %v2944 = vrot.slane %v2943, 2
    %v2945 = vmax.f32 %v2943, %v2944
    %v2946 = vrot.slane %v2945, 1
    %v2947 = vmax.f32 %v2945, %v2946
    %v2948 = vmax.f32 %v2334, %v2338
    %v2949 = vrot.slane %v2948, 4
    %v2950 = vmax.f32 %v2948, %v2949
    %v2951 = vrot.slane %v2950, 2
    %v2952 = vmax.f32 %v2950, %v2951
    %v2953 = vrot.slane %v2952, 1
    %v2954 = vmax.f32 %v2952, %v2953
    %v2955 = vmax.f32 %v2336, %v2340
    %v2956 = vrot.slane %v2955, 4
    %v2957 = vmax.f32 %v2955, %v2956
    %v2958 = vrot.slane %v2957, 2
    %v2959 = vmax.f32 %v2957, %v2958
    %v2960 = vrot.slane %v2959, 1
    %v2961 = vmax.f32 %v2959, %v2960
    %v2962 = vmax.f32 %v1765, %v1769
    %v2963 = vrot.slane %v2962, 4
    %v2964 = vmax.f32 %v2962, %v2963
    %v2965 = vrot.slane %v2964, 2
    %v2966 = vmax.f32 %v2964, %v2965
    %v2967 = vrot.slane %v2966, 1
    %v2968 = vmax.f32 %v2966, %v2967
    %v2969 = vmax.f32 %v1767, %v1771
    %v2970 = vrot.slane %v2969, 4
    %v2971 = vmax.f32 %v2969, %v2970
    %v2972 = vrot.slane %v2971, 2
    %v2973 = vmax.f32 %v2971, %v2972
    %v2974 = vrot.slane %v2973, 1
    %v2975 = vmax.f32 %v2973, %v2974
    %v2976 = vmax.f32 %v1958, %v1962
    %v2977 = vrot.slane %v2976, 4
    %v2978 = vmax.f32 %v2976, %v2977
    %v2979 = vrot.slane %v2978, 2
    %v2980 = vmax.f32 %v2978, %v2979
    %v2981 = vrot.slane %v2980, 1
    %v2982 = vmax.f32 %v2980, %v2981
    %v2983 = vmax.f32 %v1960, %v1964
    %v2984 = vrot.slane %v2983, 4
    %v2985 = vmax.f32 %v2983, %v2984
    %v2986 = vrot.slane %v2985, 2
    %v2987 = vmax.f32 %v2985, %v2986
    %v2988 = vrot.slane %v2987, 1
    %v2989 = vmax.f32 %v2987, %v2988
    %v2990 = vmax.f32 %v2151, %v2155
    %v2991 = vrot.slane %v2990, 4
    %v2992 = vmax.f32 %v2990, %v2991
    %v2993 = vrot.slane %v2992, 2
    %v2994 = vmax.f32 %v2992, %v2993
    %v2995 = vrot.slane %v2994, 1
    %v2996 = vmax.f32 %v2994, %v2995
    %v2997 = vmax.f32 %v2153, %v2157
    %v2998 = vrot.slane %v2997, 4
    %v2999 = vmax.f32 %v2997, %v2998
    %v3000 = vrot.slane %v2999, 2
    %v3001 = vmax.f32 %v2999, %v3000
    %v3002 = vrot.slane %v3001, 1
    %v3003 = vmax.f32 %v3001, %v3002
    %v3004 = vmax.f32 %v2344, %v2348
    %v3005 = vrot.slane %v3004, 4
    %v3006 = vmax.f32 %v3004, %v3005
    %v3007 = vrot.slane %v3006, 2
    %v3008 = vmax.f32 %v3006, %v3007
    %v3009 = vrot.slane %v3008, 1
    %v3010 = vmax.f32 %v3008, %v3009
    %v3011 = vmax.f32 %v2346, %v2350
    %v3012 = vrot.slane %v3011, 4
    %v3013 = vmax.f32 %v3011, %v3012
    %v3014 = vrot.slane %v3013, 2
    %v3015 = vmax.f32 %v3013, %v3014
    %v3016 = vrot.slane %v3015, 1
    %v3017 = vmax.f32 %v3015, %v3016
    %v3018 = vmax.f32 %v1775, %v1779
    %v3019 = vrot.slane %v3018, 4
    %v3020 = vmax.f32 %v3018, %v3019
    %v3021 = vrot.slane %v3020, 2
    %v3022 = vmax.f32 %v3020, %v3021
    %v3023 = vrot.slane %v3022, 1
    %v3024 = vmax.f32 %v3022, %v3023
    %v3025 = vmax.f32 %v1777, %v1781
    %v3026 = vrot.slane %v3025, 4
    %v3027 = vmax.f32 %v3025, %v3026
    %v3028 = vrot.slane %v3027, 2
    %v3029 = vmax.f32 %v3027, %v3028
    %v3030 = vrot.slane %v3029, 1
    %v3031 = vmax.f32 %v3029, %v3030
    %v3032 = vmax.f32 %v1968, %v1972
    %v3033 = vrot.slane %v3032, 4
    %v3034 = vmax.f32 %v3032, %v3033
    %v3035 = vrot.slane %v3034, 2
    %v3036 = vmax.f32 %v3034, %v3035
    %v3037 = vrot.slane %v3036, 1
    %v3038 = vmax.f32 %v3036, %v3037
    %v3039 = vmax.f32 %v1970, %v1974
    %v3040 = vrot.slane %v3039, 4
    %v3041 = vmax.f32 %v3039, %v3040
    %v3042 = vrot.slane %v3041, 2
    %v3043 = vmax.f32 %v3041, %v3042
    %v3044 = vrot.slane %v3043, 1
    %v3045 = vmax.f32 %v3043, %v3044
    %v3046 = vmax.f32 %v2161, %v2165
    %v3047 = vrot.slane %v3046, 4
    %v3048 = vmax.f32 %v3046, %v3047
    %v3049 = vrot.slane %v3048, 2
    %v3050 = vmax.f32 %v3048, %v3049
    %v3051 = vrot.slane %v3050, 1
    %v3052 = vmax.f32 %v3050, %v3051
    %v3053 = vmax.f32 %v2163, %v2167
    %v3054 = vrot.slane %v3053, 4
    %v3055 = vmax.f32 %v3053, %v3054
    %v3056 = vrot.slane %v3055, 2
    %v3057 = vmax.f32 %v3055, %v3056
    %v3058 = vrot.slane %v3057, 1
    %v3059 = vmax.f32 %v3057, %v3058
    %v3060 = vmax.f32 %v2354, %v2358
    %v3061 = vrot.slane %v3060, 4
    %v3062 = vmax.f32 %v3060, %v3061
    %v3063 = vrot.slane %v3062, 2
    %v3064 = vmax.f32 %v3062, %v3063
    %v3065 = vrot.slane %v3064, 1
    %v3066 = vmax.f32 %v3064, %v3065
    %v3067 = vmax.f32 %v2356, %v2360
    %v3068 = vrot.slane %v3067, 4
    %v3069 = vmax.f32 %v3067, %v3068
    %v3070 = vrot.slane %v3069, 2
    %v3071 = vmax.f32 %v3069, %v3070
    %v3072 = vrot.slane %v3071, 1
    %v3073 = vmax.f32 %v3071, %v3072
    %v3074 = vmax.f32 %v1785, %v1789
    %v3075 = vrot.slane %v3074, 4
    %v3076 = vmax.f32 %v3074, %v3075
    %v3077 = vrot.slane %v3076, 2
    %v3078 = vmax.f32 %v3076, %v3077
    %v3079 = vrot.slane %v3078, 1
    %v3080 = vmax.f32 %v3078, %v3079
    %v3081 = vmax.f32 %v1787, %v1791
    %v3082 = vrot.slane %v3081, 4
    %v3083 = vmax.f32 %v3081, %v3082
    %v3084 = vrot.slane %v3083, 2
    %v3085 = vmax.f32 %v3083, %v3084
    %v3086 = vrot.slane %v3085, 1
    %v3087 = vmax.f32 %v3085, %v3086
    %v3088 = vmax.f32 %v1978, %v1982
    %v3089 = vrot.slane %v3088, 4
    %v3090 = vmax.f32 %v3088, %v3089
    %v3091 = vrot.slane %v3090, 2
    %v3092 = vmax.f32 %v3090, %v3091
    %v3093 = vrot.slane %v3092, 1
    %v3094 = vmax.f32 %v3092, %v3093
    %v3095 = vmax.f32 %v1980, %v1984
    %v3096 = vrot.slane %v3095, 4
    %v3097 = vmax.f32 %v3095, %v3096
    %v3098 = vrot.slane %v3097, 2
    %v3099 = vmax.f32 %v3097, %v3098
    %v3100 = vrot.slane %v3099, 1
    %v3101 = vmax.f32 %v3099, %v3100
    %v3102 = vmax.f32 %v2171, %v2175
    %v3103 = vrot.slane %v3102, 4
    %v3104 = vmax.f32 %v3102, %v3103
    %v3105 = vrot.slane %v3104, 2
    %v3106 = vmax.f32 %v3104, %v3105
    %v3107 = vrot.slane %v3106, 1
    %v3108 = vmax.f32 %v3106, %v3107
    %v3109 = vmax.f32 %v2173, %v2177
    %v3110 = vrot.slane %v3109, 4
    %v3111 = vmax.f32 %v3109, %v3110
    %v3112 = vrot.slane %v3111, 2
    %v3113 = vmax.f32 %v3111, %v3112
    %v3114 = vrot.slane %v3113, 1
    %v3115 = vmax.f32 %v3113, %v3114
    %v3116 = vmax.f32 %v2364, %v2368
    %v3117 = vrot.slane %v3116, 4
    %v3118 = vmax.f32 %v3116, %v3117
    %v3119 = vrot.slane %v3118, 2
    %v3120 = vmax.f32 %v3118, %v3119
    %v3121 = vrot.slane %v3120, 1
    %v3122 = vmax.f32 %v3120, %v3121
    %v3123 = vmax.f32 %v2366, %v2370
    %v3124 = vrot.slane %v3123, 4
    %v3125 = vmax.f32 %v3123, %v3124
    %v3126 = vrot.slane %v3125, 2
    %v3127 = vmax.f32 %v3125, %v3126
    %v3128 = vrot.slane %v3127, 1
    %v3129 = vmax.f32 %v3127, %v3128
    %v3130 = vmax.f32 %v1795, %v1799
    %v3131 = vrot.slane %v3130, 4
    %v3132 = vmax.f32 %v3130, %v3131
    %v3133 = vrot.slane %v3132, 2
    %v3134 = vmax.f32 %v3132, %v3133
    %v3135 = vrot.slane %v3134, 1
    %v3136 = vmax.f32 %v3134, %v3135
    %v3137 = vmax.f32 %v1797, %v1801
    %v3138 = vrot.slane %v3137, 4
    %v3139 = vmax.f32 %v3137, %v3138
    %v3140 = vrot.slane %v3139, 2
    %v3141 = vmax.f32 %v3139, %v3140
    %v3142 = vrot.slane %v3141, 1
    %v3143 = vmax.f32 %v3141, %v3142
    %v3144 = vmax.f32 %v1988, %v1992
    %v3145 = vrot.slane %v3144, 4
    %v3146 = vmax.f32 %v3144, %v3145
    %v3147 = vrot.slane %v3146, 2
    %v3148 = vmax.f32 %v3146, %v3147
    %v3149 = vrot.slane %v3148, 1
    %v3150 = vmax.f32 %v3148, %v3149
    %v3151 = vmax.f32 %v1990, %v1994
    %v3152 = vrot.slane %v3151, 4
    %v3153 = vmax.f32 %v3151, %v3152
    %v3154 = vrot.slane %v3153, 2
    %v3155 = vmax.f32 %v3153, %v3154
    %v3156 = vrot.slane %v3155, 1
    %v3157 = vmax.f32 %v3155, %v3156
    %v3158 = vmax.f32 %v2181, %v2185
    %v3159 = vrot.slane %v3158, 4
    %v3160 = vmax.f32 %v3158, %v3159
    %v3161 = vrot.slane %v3160, 2
    %v3162 = vmax.f32 %v3160, %v3161
    %v3163 = vrot.slane %v3162, 1
    %v3164 = vmax.f32 %v3162, %v3163
    %v3165 = vmax.f32 %v2183, %v2187
    %v3166 = vrot.slane %v3165, 4
    %v3167 = vmax.f32 %v3165, %v3166
    %v3168 = vrot.slane %v3167, 2
    %v3169 = vmax.f32 %v3167, %v3168
    %v3170 = vrot.slane %v3169, 1
    %v3171 = vmax.f32 %v3169, %v3170
    %v3172 = vmax.f32 %v2374, %v2378
    %v3173 = vrot.slane %v3172, 4
    %v3174 = vmax.f32 %v3172, %v3173
    %v3175 = vrot.slane %v3174, 2
    %v3176 = vmax.f32 %v3174, %v3175
    %v3177 = vrot.slane %v3176, 1
    %v3178 = vmax.f32 %v3176, %v3177
    %v3179 = vmax.f32 %v2376, %v2380
    %v3180 = vrot.slane %v3179, 4
    %v3181 = vmax.f32 %v3179, %v3180
    %v3182 = vrot.slane %v3181, 2
    %v3183 = vmax.f32 %v3181, %v3182
    %v3184 = vrot.slane %v3183, 1
    %v3185 = vmax.f32 %v3183, %v3184
    %v3186 = vmax.f32 %v1805, %v1809
    %v3187 = vrot.slane %v3186, 4
    %v3188 = vmax.f32 %v3186, %v3187
    %v3189 = vrot.slane %v3188, 2
    %v3190 = vmax.f32 %v3188, %v3189
    %v3191 = vrot.slane %v3190, 1
    %v3192 = vmax.f32 %v3190, %v3191
    %v3193 = vmax.f32 %v1807, %v1811
    %v3194 = vrot.slane %v3193, 4
    %v3195 = vmax.f32 %v3193, %v3194
    %v3196 = vrot.slane %v3195, 2
    %v3197 = vmax.f32 %v3195, %v3196
    %v3198 = vrot.slane %v3197, 1
    %v3199 = vmax.f32 %v3197, %v3198
    %v3200 = vmax.f32 %v1998, %v2002
    %v3201 = vrot.slane %v3200, 4
    %v3202 = vmax.f32 %v3200, %v3201
    %v3203 = vrot.slane %v3202, 2
    %v3204 = vmax.f32 %v3202, %v3203
    %v3205 = vrot.slane %v3204, 1
    %v3206 = vmax.f32 %v3204, %v3205
    %v3207 = vmax.f32 %v2000, %v2004
    %v3208 = vrot.slane %v3207, 4
    %v3209 = vmax.f32 %v3207, %v3208
    %v3210 = vrot.slane %v3209, 2
    %v3211 = vmax.f32 %v3209, %v3210
    %v3212 = vrot.slane %v3211, 1
    %v3213 = vmax.f32 %v3211, %v3212
    %v3214 = vmax.f32 %v2191, %v2195
    %v3215 = vrot.slane %v3214, 4
    %v3216 = vmax.f32 %v3214, %v3215
    %v3217 = vrot.slane %v3216, 2
    %v3218 = vmax.f32 %v3216, %v3217
    %v3219 = vrot.slane %v3218, 1
    %v3220 = vmax.f32 %v3218, %v3219
    %v3221 = vmax.f32 %v2193, %v2197
    %v3222 = vrot.slane %v3221, 4
    %v3223 = vmax.f32 %v3221, %v3222
    %v3224 = vrot.slane %v3223, 2
    %v3225 = vmax.f32 %v3223, %v3224
    %v3226 = vrot.slane %v3225, 1
    %v3227 = vmax.f32 %v3225, %v3226
    %v3228 = vmax.f32 %v2384, %v2388
    %v3229 = vrot.slane %v3228, 4
    %v3230 = vmax.f32 %v3228, %v3229
    %v3231 = vrot.slane %v3230, 2
    %v3232 = vmax.f32 %v3230, %v3231
    %v3233 = vrot.slane %v3232, 1
    %v3234 = vmax.f32 %v3232, %v3233
    %v3235 = vmax.f32 %v2386, %v2390
    %v3236 = vrot.slane %v3235, 4
    %v3237 = vmax.f32 %v3235, %v3236
    %v3238 = vrot.slane %v3237, 2
    %v3239 = vmax.f32 %v3237, %v3238
    %v3240 = vrot.slane %v3239, 1
    %v3241 = vmax.f32 %v3239, %v3240
    %v3242 = vmax.f32 %v1815, %v1819
    %v3243 = vrot.slane %v3242, 4
    %v3244 = vmax.f32 %v3242, %v3243
    %v3245 = vrot.slane %v3244, 2
    %v3246 = vmax.f32 %v3244, %v3245
    %v3247 = vrot.slane %v3246, 1
    %v3248 = vmax.f32 %v3246, %v3247
    %v3249 = vmax.f32 %v1817, %v1821
    %v3250 = vrot.slane %v3249, 4
    %v3251 = vmax.f32 %v3249, %v3250
    %v3252 = vrot.slane %v3251, 2
    %v3253 = vmax.f32 %v3251, %v3252
    %v3254 = vrot.slane %v3253, 1
    %v3255 = vmax.f32 %v3253, %v3254
    %v3256 = vmax.f32 %v2008, %v2012
    %v3257 = vrot.slane %v3256, 4
    %v3258 = vmax.f32 %v3256, %v3257
    %v3259 = vrot.slane %v3258, 2
    %v3260 = vmax.f32 %v3258, %v3259
    %v3261 = vrot.slane %v3260, 1
    %v3262 = vmax.f32 %v3260, %v3261
    %v3263 = vmax.f32 %v2010, %v2014
    %v3264 = vrot.slane %v3263, 4
    %v3265 = vmax.f32 %v3263, %v3264
    %v3266 = vrot.slane %v3265, 2
    %v3267 = vmax.f32 %v3265, %v3266
    %v3268 = vrot.slane %v3267, 1
    %v3269 = vmax.f32 %v3267, %v3268
    %v3270 = vmax.f32 %v2201, %v2205
    %v3271 = vrot.slane %v3270, 4
    %v3272 = vmax.f32 %v3270, %v3271
    %v3273 = vrot.slane %v3272, 2
    %v3274 = vmax.f32 %v3272, %v3273
    %v3275 = vrot.slane %v3274, 1
    %v3276 = vmax.f32 %v3274, %v3275
    %v3277 = vmax.f32 %v2203, %v2207
    %v3278 = vrot.slane %v3277, 4
    %v3279 = vmax.f32 %v3277, %v3278
    %v3280 = vrot.slane %v3279, 2
    %v3281 = vmax.f32 %v3279, %v3280
    %v3282 = vrot.slane %v3281, 1
    %v3283 = vmax.f32 %v3281, %v3282
    %v3284 = vmax.f32 %v2394, %v2398
    %v3285 = vrot.slane %v3284, 4
    %v3286 = vmax.f32 %v3284, %v3285
    %v3287 = vrot.slane %v3286, 2
    %v3288 = vmax.f32 %v3286, %v3287
    %v3289 = vrot.slane %v3288, 1
    %v3290 = vmax.f32 %v3288, %v3289
    %v3291 = vmax.f32 %v2396, %v2400
    %v3292 = vrot.slane %v3291, 4
    %v3293 = vmax.f32 %v3291, %v3292
    %v3294 = vrot.slane %v3293, 2
    %v3295 = vmax.f32 %v3293, %v3294
    %v3296 = vrot.slane %v3295, 1
    %v3297 = vmax.f32 %v3295, %v3296
    %vm3362 = vcmask 1041409
    %v3363 = vsel %vm3362, %v2464, %v2408
    %vm3364 = vcmask 1042434
    %v3365 = vsel %vm3364, %v2520, %v3363
    %vm3366 = vcmask 1043459
    %v3367 = vsel %vm3366, %v2576, %v3365
    %vm3368 = vcmask 1044484
    %v3369 = vsel %vm3368, %v2632, %v3367
    %vm3370 = vcmask 1045509
    %v3371 = vsel %vm3370, %v2688, %v3369
    %vm3372 = vcmask 1046534
    %v3373 = vsel %vm3372, %v2744, %v3371
    %vm3374 = vcmask 1047559
    %v3375 = vsel %vm3374, %v2800, %v3373
    %v3376 = vsel %vm3362, %v2471, %v2415
    %v3377 = vsel %vm3364, %v2527, %v3376
    %v3378 = vsel %vm3366, %v2583, %v3377
    %v3379 = vsel %vm3368, %v2639, %v3378
    %v3380 = vsel %vm3370, %v2695, %v3379
    %v3381 = vsel %vm3372, %v2751, %v3380
    %v3382 = vsel %vm3374, %v2807, %v3381
    %v3383 = vsel %vm3362, %v2478, %v2422
    %v3384 = vsel %vm3364, %v2534, %v3383
    %v3385 = vsel %vm3366, %v2590, %v3384
    %v3386 = vsel %vm3368, %v2646, %v3385
    %v3387 = vsel %vm3370, %v2702, %v3386
    %v3388 = vsel %vm3372, %v2758, %v3387
    %v3389 = vsel %vm3374, %v2814, %v3388
    %v3390 = vsel %vm3362, %v2485, %v2429
    %v3391 = vsel %vm3364, %v2541, %v3390
    %v3392 = vsel %vm3366, %v2597, %v3391
    %v3393 = vsel %vm3368, %v2653, %v3392
    %v3394 = vsel %vm3370, %v2709, %v3393
    %v3395 = vsel %vm3372, %v2765, %v3394
    %v3396 = vsel %vm3374, %v2821, %v3395
    %v3397 = vsel %vm3362, %v2492, %v2436
    %v3398 = vsel %vm3364, %v2548, %v3397
    %v3399 = vsel %vm3366, %v2604, %v3398
    %v3400 = vsel %vm3368, %v2660, %v3399
    %v3401 = vsel %vm3370, %v2716, %v3400
    %v3402 = vsel %vm3372, %v2772, %v3401
    %v3403 = vsel %vm3374, %v2828, %v3402
    %v3404 = vsel %vm3362, %v2499, %v2443
    %v3405 = vsel %vm3364, %v2555, %v3404
    %v3406 = vsel %vm3366, %v2611, %v3405
    %v3407 = vsel %vm3368, %v2667, %v3406
    %v3408 = vsel %vm3370, %v2723, %v3407
    %v3409 = vsel %vm3372, %v2779, %v3408
    %v3410 = vsel %vm3374, %v2835, %v3409
    %v3411 = vsel %vm3362, %v2506, %v2450
    %v3412 = vsel %vm3364, %v2562, %v3411
    %v3413 = vsel %vm3366, %v2618, %v3412
    %v3414 = vsel %vm3368, %v2674, %v3413
    %v3415 = vsel %vm3370, %v2730, %v3414
    %v3416 = vsel %vm3372, %v2786, %v3415
    %v3417 = vsel %vm3374, %v2842, %v3416
    %v3418 = vsel %vm3362, %v2513, %v2457
    %v3419 = vsel %vm3364, %v2569, %v3418
    %v3420 = vsel %vm3366, %v2625, %v3419
    %v3421 = vsel %vm3368, %v2681, %v3420
    %v3422 = vsel %vm3370, %v2737, %v3421
    %v3423 = vsel %vm3372, %v2793, %v3422
    %v3424 = vsel %vm3374, %v2849, %v3423
    %v3497 = vsel %vm3362, %v2912, %v2856
    %v3498 = vsel %vm3364, %v2968, %v3497
    %v3499 = vsel %vm3366, %v3024, %v3498
    %v3500 = vsel %vm3368, %v3080, %v3499
    %v3501 = vsel %vm3370, %v3136, %v3500
    %v3502 = vsel %vm3372, %v3192, %v3501
    %v3503 = vsel %vm3374, %v3248, %v3502
    %v3504 = vsel %vm3362, %v2919, %v2863
    %v3505 = vsel %vm3364, %v2975, %v3504
    %v3506 = vsel %vm3366, %v3031, %v3505
    %v3507 = vsel %vm3368, %v3087, %v3506
    %v3508 = vsel %vm3370, %v3143, %v3507
    %v3509 = vsel %vm3372, %v3199, %v3508
    %v3510 = vsel %vm3374, %v3255, %v3509
    %v3511 = vsel %vm3362, %v2926, %v2870
    %v3512 = vsel %vm3364, %v2982, %v3511
    %v3513 = vsel %vm3366, %v3038, %v3512
    %v3514 = vsel %vm3368, %v3094, %v3513
    %v3515 = vsel %vm3370, %v3150, %v3514
    %v3516 = vsel %vm3372, %v3206, %v3515
    %v3517 = vsel %vm3374, %v3262, %v3516
    %v3518 = vsel %vm3362, %v2933, %v2877
    %v3519 = vsel %vm3364, %v2989, %v3518
    %v3520 = vsel %vm3366, %v3045, %v3519
    %v3521 = vsel %vm3368, %v3101, %v3520
    %v3522 = vsel %vm3370, %v3157, %v3521
    %v3523 = vsel %vm3372, %v3213, %v3522
    %v3524 = vsel %vm3374, %v3269, %v3523
    %v3525 = vsel %vm3362, %v2940, %v2884
    %v3526 = vsel %vm3364, %v2996, %v3525
    %v3527 = vsel %vm3366, %v3052, %v3526
    %v3528 = vsel %vm3368, %v3108, %v3527
    %v3529 = vsel %vm3370, %v3164, %v3528
    %v3530 = vsel %vm3372, %v3220, %v3529
    %v3531 = vsel %vm3374, %v3276, %v3530
    %v3532 = vsel %vm3362, %v2947, %v2891
    %v3533 = vsel %vm3364, %v3003, %v3532
    %v3534 = vsel %vm3366, %v3059, %v3533
    %v3535 = vsel %vm3368, %v3115, %v3534
    %v3536 = vsel %vm3370, %v3171, %v3535
    %v3537 = vsel %vm3372, %v3227, %v3536
    %v3538 = vsel %vm3374, %v3283, %v3537
    %v3539 = vsel %vm3362, %v2954, %v2898
    %v3540 = vsel %vm3364, %v3010, %v3539
    %v3541 = vsel %vm3366, %v3066, %v3540
    %v3542 = vsel %vm3368, %v3122, %v3541
    %v3543 = vsel %vm3370, %v3178, %v3542
    %v3544 = vsel %vm3372, %v3234, %v3543
    %v3545 = vsel %vm3374, %v3290, %v3544
    %v3546 = vsel %vm3362, %v2961, %v2905
    %v3547 = vsel %vm3364, %v3017, %v3546
    %v3548 = vsel %vm3366, %v3073, %v3547
    %v3549 = vsel %vm3368, %v3129, %v3548
    %v3550 = vsel %vm3370, %v3185, %v3549
    %v3551 = vsel %vm3372, %v3241, %v3550
    %v3552 = vsel %vm3374, %v3297, %v3551
    %3561 = vst [vmem:[%s18] sm:$0xff] %v3375
    %3562 = vst [vmem:[%s18 + $0x8] sm:$0xff] %v3382
    %3563 = vst [vmem:[%s18 + $0x10] sm:$0xff] %v3389
    %3564 = vst [vmem:[%s18 + $0x18] sm:$0xff] %v3396
    %3565 = vst [vmem:[%s18 + $0x20] sm:$0xff] %v3403
    %3566 = vst [vmem:[%s18 + $0x28] sm:$0xff] %v3410
    %3567 = vst [vmem:[%s18 + $0x30] sm:$0xff] %v3417
    %3568 = vst [vmem:[%s18 + $0x38] sm:$0xff] %v3424
    %3569 = vst [vmem:[%s18 + $0x40] sm:$0xff] %v3503
    %3570 = vst [vmem:[%s18 + $0x48] sm:$0xff] %v3510
    %3571 = vst [vmem:[%s18 + $0x50] sm:$0xff] %v3517
    %3572 = vst [vmem:[%s18 + $0x58] sm:$0xff] %v3524
    %3573 = vst [vmem:[%s18 + $0x60] sm:$0xff] %v3531
    %3574 = vst [vmem:[%s18 + $0x68] sm:$0xff] %v3538
    %3575 = vst [vmem:[%s18 + $0x70] sm:$0xff] %v3545
    %3576 = vst [vmem:[%s18 + $0x78] sm:$0xff] %v3552
    %3577 = vst [vmem:[%s19] sm:$0xff] %v3503
    %3578 = vst [vmem:[%s19 + $0x8] sm:$0xff] %v3510
    %3579 = vst [vmem:[%s19 + $0x10] sm:$0xff] %v3517
    %3580 = vst [vmem:[%s19 + $0x18] sm:$0xff] %v3524
    %3581 = vst [vmem:[%s19 + $0x20] sm:$0xff] %v3531
    %3582 = vst [vmem:[%s19 + $0x28] sm:$0xff] %v3538
    %3583 = vst [vmem:[%s19 + $0x30] sm:$0xff] %v3545
    %3584 = vst [vmem:[%s19 + $0x38] sm:$0xff] %v3552
    %v3585 = vpack.c.bf16 %v3375, %v3375
    %v3586 = vpack.c.bf16 %v3382, %v3382
    %v3587 = vpack.c.bf16 %v3389, %v3389
    %v3588 = vpack.c.bf16 %v3396, %v3396
    %v3589 = vpack.c.bf16 %v3403, %v3403
    %v3590 = vpack.c.bf16 %v3410, %v3410
    %v3591 = vpack.c.bf16 %v3417, %v3417
    %v3592 = vpack.c.bf16 %v3424, %v3424
    %v3593 = vpack.c.bf16 %v3503, %v3503
    %v3594 = vpack.c.bf16 %v3510, %v3510
    %v3595 = vpack.c.bf16 %v3517, %v3517
    %v3596 = vpack.c.bf16 %v3524, %v3524
    %v3597 = vpack.c.bf16 %v3531, %v3531
    %v3598 = vpack.c.bf16 %v3538, %v3538
    %v3599 = vpack.c.bf16 %v3545, %v3545
    %v3600 = vpack.c.bf16 %v3552, %v3552
    %v3601 = vld [vmem:[#allocation10] sm:$0xff]
    %v3602 = vld [vmem:[#allocation10 + $0x8] sm:$0xff]
    %v3603 = vld [vmem:[#allocation10 + $0x10] sm:$0xff]
    %v3604 = vld [vmem:[#allocation10 + $0x18] sm:$0xff]
    %v3605 = vld [vmem:[#allocation10 + $0x20] sm:$0xff]
    %v3606 = vld [vmem:[#allocation10 + $0x28] sm:$0xff]
    %v3607 = vld [vmem:[#allocation10 + $0x30] sm:$0xff]
    %v3608 = vld [vmem:[#allocation10 + $0x38] sm:$0xff]
    %v3609 = vld [vmem:[#allocation10 + $0x40] sm:$0xff]
    %v3610 = vld [vmem:[#allocation10 + $0x48] sm:$0xff]
    %v3611 = vld [vmem:[#allocation10 + $0x50] sm:$0xff]
    %v3612 = vld [vmem:[#allocation10 + $0x58] sm:$0xff]
    %v3613 = vld [vmem:[#allocation10 + $0x60] sm:$0xff]
    %v3614 = vld [vmem:[#allocation10 + $0x68] sm:$0xff]
    %v3615 = vld [vmem:[#allocation10 + $0x70] sm:$0xff]
    %v3616 = vld [vmem:[#allocation10 + $0x78] sm:$0xff]
    %v3617 = vld [vmem:[#allocation10 + $0x80] sm:$0xff]
    %v3618 = vld [vmem:[#allocation10 + $0x88] sm:$0xff]
    %v3619 = vld [vmem:[#allocation10 + $0x90] sm:$0xff]
    %v3620 = vld [vmem:[#allocation10 + $0x98] sm:$0xff]
    %v3621 = vld [vmem:[#allocation10 + $0xa0] sm:$0xff]
    %v3622 = vld [vmem:[#allocation10 + $0xa8] sm:$0xff]
    %v3623 = vld [vmem:[#allocation10 + $0xb0] sm:$0xff]
    %v3624 = vld [vmem:[#allocation10 + $0xb8] sm:$0xff]
    %v3625 = vld [vmem:[#allocation10 + $0xc0] sm:$0xff]
    %v3626 = vld [vmem:[#allocation10 + $0xc8] sm:$0xff]
    %v3627 = vld [vmem:[#allocation10 + $0xd0] sm:$0xff]
    %v3628 = vld [vmem:[#allocation10 + $0xd8] sm:$0xff]
    %v3629 = vld [vmem:[#allocation10 + $0xe0] sm:$0xff]
    %v3630 = vld [vmem:[#allocation10 + $0xe8] sm:$0xff]
    %v3631 = vld [vmem:[#allocation10 + $0xf0] sm:$0xff]
    %v3632 = vld [vmem:[#allocation10 + $0xf8] sm:$0xff]
    %v3633 = vld [vmem:[#allocation10 + $0x100] sm:$0xff]
    %v3634 = vld [vmem:[#allocation10 + $0x108] sm:$0xff]
    %v3635 = vld [vmem:[#allocation10 + $0x110] sm:$0xff]
    %v3636 = vld [vmem:[#allocation10 + $0x118] sm:$0xff]
    %v3637 = vld [vmem:[#allocation10 + $0x120] sm:$0xff]
    %v3638 = vld [vmem:[#allocation10 + $0x128] sm:$0xff]
    %v3639 = vld [vmem:[#allocation10 + $0x130] sm:$0xff]
    %v3640 = vld [vmem:[#allocation10 + $0x138] sm:$0xff]
    %v3641 = vld [vmem:[#allocation10 + $0x140] sm:$0xff]
    %v3642 = vld [vmem:[#allocation10 + $0x148] sm:$0xff]
    %v3643 = vld [vmem:[#allocation10 + $0x150] sm:$0xff]
    %v3644 = vld [vmem:[#allocation10 + $0x158] sm:$0xff]
    %v3645 = vld [vmem:[#allocation10 + $0x160] sm:$0xff]
    %v3646 = vld [vmem:[#allocation10 + $0x168] sm:$0xff]
    %v3647 = vld [vmem:[#allocation10 + $0x170] sm:$0xff]
    %v3648 = vld [vmem:[#allocation10 + $0x178] sm:$0xff]
    %v3649 = vld [vmem:[#allocation10 + $0x180] sm:$0xff]
    %v3650 = vld [vmem:[#allocation10 + $0x188] sm:$0xff]
    %v3651 = vld [vmem:[#allocation10 + $0x190] sm:$0xff]
    %v3652 = vld [vmem:[#allocation10 + $0x198] sm:$0xff]
    %v3653 = vld [vmem:[#allocation10 + $0x1a0] sm:$0xff]
    %v3654 = vld [vmem:[#allocation10 + $0x1a8] sm:$0xff]
    %v3655 = vld [vmem:[#allocation10 + $0x1b0] sm:$0xff]
    %v3656 = vld [vmem:[#allocation10 + $0x1b8] sm:$0xff]
    %v3657 = vld [vmem:[#allocation10 + $0x1c0] sm:$0xff]
    %v3658 = vld [vmem:[#allocation10 + $0x1c8] sm:$0xff]
    %v3659 = vld [vmem:[#allocation10 + $0x1d0] sm:$0xff]
    %v3660 = vld [vmem:[#allocation10 + $0x1d8] sm:$0xff]
    %v3661 = vld [vmem:[#allocation10 + $0x1e0] sm:$0xff]
    %v3662 = vld [vmem:[#allocation10 + $0x1e8] sm:$0xff]
    %v3663 = vld [vmem:[#allocation10 + $0x1f0] sm:$0xff]
    %v3664 = vld [vmem:[#allocation10 + $0x1f8] sm:$0xff]
    %v3665 = vld [vmem:[#allocation10 + $0x200] sm:$0xff]
    %v3666 = vld [vmem:[#allocation10 + $0x208] sm:$0xff]
    %v3667 = vld [vmem:[#allocation10 + $0x210] sm:$0xff]
    %v3668 = vld [vmem:[#allocation10 + $0x218] sm:$0xff]
    %v3669 = vld [vmem:[#allocation10 + $0x220] sm:$0xff]
    %v3670 = vld [vmem:[#allocation10 + $0x228] sm:$0xff]
    %v3671 = vld [vmem:[#allocation10 + $0x230] sm:$0xff]
    %v3672 = vld [vmem:[#allocation10 + $0x238] sm:$0xff]
    %v3673 = vld [vmem:[#allocation10 + $0x240] sm:$0xff]
    %v3674 = vld [vmem:[#allocation10 + $0x248] sm:$0xff]
    %v3675 = vld [vmem:[#allocation10 + $0x250] sm:$0xff]
    %v3676 = vld [vmem:[#allocation10 + $0x258] sm:$0xff]
    %v3677 = vld [vmem:[#allocation10 + $0x260] sm:$0xff]
    %v3678 = vld [vmem:[#allocation10 + $0x268] sm:$0xff]
    %v3679 = vld [vmem:[#allocation10 + $0x270] sm:$0xff]
    %v3680 = vld [vmem:[#allocation10 + $0x278] sm:$0xff]
    %v3681 = vld [vmem:[#allocation10 + $0x280] sm:$0xff]
    %v3682 = vld [vmem:[#allocation10 + $0x288] sm:$0xff]
    %v3683 = vld [vmem:[#allocation10 + $0x290] sm:$0xff]
    %v3684 = vld [vmem:[#allocation10 + $0x298] sm:$0xff]
    %v3685 = vld [vmem:[#allocation10 + $0x2a0] sm:$0xff]
    %v3686 = vld [vmem:[#allocation10 + $0x2a8] sm:$0xff]
    %v3687 = vld [vmem:[#allocation10 + $0x2b0] sm:$0xff]
    %v3688 = vld [vmem:[#allocation10 + $0x2b8] sm:$0xff]
    %v3689 = vld [vmem:[#allocation10 + $0x2c0] sm:$0xff]
    %v3690 = vld [vmem:[#allocation10 + $0x2c8] sm:$0xff]
    %v3691 = vld [vmem:[#allocation10 + $0x2d0] sm:$0xff]
    %v3692 = vld [vmem:[#allocation10 + $0x2d8] sm:$0xff]
    %v3693 = vld [vmem:[#allocation10 + $0x2e0] sm:$0xff]
    %v3694 = vld [vmem:[#allocation10 + $0x2e8] sm:$0xff]
    %v3695 = vld [vmem:[#allocation10 + $0x2f0] sm:$0xff]
    %v3696 = vld [vmem:[#allocation10 + $0x2f8] sm:$0xff]
    %v3697 = vld [vmem:[#allocation10 + $0x300] sm:$0xff]
    %v3698 = vld [vmem:[#allocation10 + $0x308] sm:$0xff]
    %v3699 = vld [vmem:[#allocation10 + $0x310] sm:$0xff]
    %v3700 = vld [vmem:[#allocation10 + $0x318] sm:$0xff]
    %v3701 = vld [vmem:[#allocation10 + $0x320] sm:$0xff]
    %v3702 = vld [vmem:[#allocation10 + $0x328] sm:$0xff]
    %v3703 = vld [vmem:[#allocation10 + $0x330] sm:$0xff]
    %v3704 = vld [vmem:[#allocation10 + $0x338] sm:$0xff]
    %v3705 = vld [vmem:[#allocation10 + $0x340] sm:$0xff]
    %v3706 = vld [vmem:[#allocation10 + $0x348] sm:$0xff]
    %v3707 = vld [vmem:[#allocation10 + $0x350] sm:$0xff]
    %v3708 = vld [vmem:[#allocation10 + $0x358] sm:$0xff]
    %v3709 = vld [vmem:[#allocation10 + $0x360] sm:$0xff]
    %v3710 = vld [vmem:[#allocation10 + $0x368] sm:$0xff]
    %v3711 = vld [vmem:[#allocation10 + $0x370] sm:$0xff]
    %v3712 = vld [vmem:[#allocation10 + $0x378] sm:$0xff]
    %v3713 = vld [vmem:[#allocation10 + $0x380] sm:$0xff]
    %v3714 = vld [vmem:[#allocation10 + $0x388] sm:$0xff]
    %v3715 = vld [vmem:[#allocation10 + $0x390] sm:$0xff]
    %v3716 = vld [vmem:[#allocation10 + $0x398] sm:$0xff]
    %v3717 = vld [vmem:[#allocation10 + $0x3a0] sm:$0xff]
    %v3718 = vld [vmem:[#allocation10 + $0x3a8] sm:$0xff]
    %v3719 = vld [vmem:[#allocation10 + $0x3b0] sm:$0xff]
    %v3720 = vld [vmem:[#allocation10 + $0x3b8] sm:$0xff]
    %v3721 = vld [vmem:[#allocation10 + $0x3c0] sm:$0xff]
    %v3722 = vld [vmem:[#allocation10 + $0x3c8] sm:$0xff]
    %v3723 = vld [vmem:[#allocation10 + $0x3d0] sm:$0xff]
    %v3724 = vld [vmem:[#allocation10 + $0x3d8] sm:$0xff]
    %v3725 = vld [vmem:[#allocation10 + $0x3e0] sm:$0xff]
    %v3726 = vld [vmem:[#allocation10 + $0x3e8] sm:$0xff]
    %v3727 = vld [vmem:[#allocation10 + $0x3f0] sm:$0xff]
    %v3728 = vld [vmem:[#allocation10 + $0x3f8] sm:$0xff]
    %v3729 = vld [vmem:[#allocation10 + $0x400] sm:$0xff]
    %v3730 = vld [vmem:[#allocation10 + $0x408] sm:$0xff]
    %v3731 = vld [vmem:[#allocation10 + $0x410] sm:$0xff]
    %v3732 = vld [vmem:[#allocation10 + $0x418] sm:$0xff]
    %v3733 = vld [vmem:[#allocation10 + $0x420] sm:$0xff]
    %v3734 = vld [vmem:[#allocation10 + $0x428] sm:$0xff]
    %v3735 = vld [vmem:[#allocation10 + $0x430] sm:$0xff]
    %v3736 = vld [vmem:[#allocation10 + $0x438] sm:$0xff]
    %v3737 = vld [vmem:[#allocation10 + $0x440] sm:$0xff]
    %v3738 = vld [vmem:[#allocation10 + $0x448] sm:$0xff]
    %v3739 = vld [vmem:[#allocation10 + $0x450] sm:$0xff]
    %v3740 = vld [vmem:[#allocation10 + $0x458] sm:$0xff]
    %v3741 = vld [vmem:[#allocation10 + $0x460] sm:$0xff]
    %v3742 = vld [vmem:[#allocation10 + $0x468] sm:$0xff]
    %v3743 = vld [vmem:[#allocation10 + $0x470] sm:$0xff]
    %v3744 = vld [vmem:[#allocation10 + $0x478] sm:$0xff]
    %v3745 = vld [vmem:[#allocation10 + $0x480] sm:$0xff]
    %v3746 = vld [vmem:[#allocation10 + $0x488] sm:$0xff]
    %v3747 = vld [vmem:[#allocation10 + $0x490] sm:$0xff]
    %v3748 = vld [vmem:[#allocation10 + $0x498] sm:$0xff]
    %v3749 = vld [vmem:[#allocation10 + $0x4a0] sm:$0xff]
    %v3750 = vld [vmem:[#allocation10 + $0x4a8] sm:$0xff]
    %v3751 = vld [vmem:[#allocation10 + $0x4b0] sm:$0xff]
    %v3752 = vld [vmem:[#allocation10 + $0x4b8] sm:$0xff]
    %v3753 = vld [vmem:[#allocation10 + $0x4c0] sm:$0xff]
    %v3754 = vld [vmem:[#allocation10 + $0x4c8] sm:$0xff]
    %v3755 = vld [vmem:[#allocation10 + $0x4d0] sm:$0xff]
    %v3756 = vld [vmem:[#allocation10 + $0x4d8] sm:$0xff]
    %v3757 = vld [vmem:[#allocation10 + $0x4e0] sm:$0xff]
    %v3758 = vld [vmem:[#allocation10 + $0x4e8] sm:$0xff]
    %v3759 = vld [vmem:[#allocation10 + $0x4f0] sm:$0xff]
    %v3760 = vld [vmem:[#allocation10 + $0x4f8] sm:$0xff]
    %v3761 = vld [vmem:[#allocation10 + $0x500] sm:$0xff]
    %v3762 = vld [vmem:[#allocation10 + $0x508] sm:$0xff]
    %v3763 = vld [vmem:[#allocation10 + $0x510] sm:$0xff]
    %v3764 = vld [vmem:[#allocation10 + $0x518] sm:$0xff]
    %v3765 = vld [vmem:[#allocation10 + $0x520] sm:$0xff]
    %v3766 = vld [vmem:[#allocation10 + $0x528] sm:$0xff]
    %v3767 = vld [vmem:[#allocation10 + $0x530] sm:$0xff]
    %v3768 = vld [vmem:[#allocation10 + $0x538] sm:$0xff]
    %v3769 = vld [vmem:[#allocation10 + $0x540] sm:$0xff]
    %v3770 = vld [vmem:[#allocation10 + $0x548] sm:$0xff]
    %v3771 = vld [vmem:[#allocation10 + $0x550] sm:$0xff]
    %v3772 = vld [vmem:[#allocation10 + $0x558] sm:$0xff]
    %v3773 = vld [vmem:[#allocation10 + $0x560] sm:$0xff]
    %v3774 = vld [vmem:[#allocation10 + $0x568] sm:$0xff]
    %v3775 = vld [vmem:[#allocation10 + $0x570] sm:$0xff]
    %v3776 = vld [vmem:[#allocation10 + $0x578] sm:$0xff]
    %v3777 = vld [vmem:[#allocation10 + $0x580] sm:$0xff]
    %v3778 = vld [vmem:[#allocation10 + $0x588] sm:$0xff]
    %v3779 = vld [vmem:[#allocation10 + $0x590] sm:$0xff]
    %v3780 = vld [vmem:[#allocation10 + $0x598] sm:$0xff]
    %v3781 = vld [vmem:[#allocation10 + $0x5a0] sm:$0xff]
    %v3782 = vld [vmem:[#allocation10 + $0x5a8] sm:$0xff]
    %v3783 = vld [vmem:[#allocation10 + $0x5b0] sm:$0xff]
    %v3784 = vld [vmem:[#allocation10 + $0x5b8] sm:$0xff]
    %v3785 = vld [vmem:[#allocation10 + $0x5c0] sm:$0xff]
    %v3786 = vld [vmem:[#allocation10 + $0x5c8] sm:$0xff]
    %v3787 = vld [vmem:[#allocation10 + $0x5d0] sm:$0xff]
    %v3788 = vld [vmem:[#allocation10 + $0x5d8] sm:$0xff]
    %v3789 = vld [vmem:[#allocation10 + $0x5e0] sm:$0xff]
    %v3790 = vld [vmem:[#allocation10 + $0x5e8] sm:$0xff]
    %v3791 = vld [vmem:[#allocation10 + $0x5f0] sm:$0xff]
    %v3792 = vld [vmem:[#allocation10 + $0x5f8] sm:$0xff]
    %v3793 = vld [vmem:[#allocation10 + $0x600] sm:$0xff]
    %v3794 = vld [vmem:[#allocation10 + $0x608] sm:$0xff]
    %v3795 = vld [vmem:[#allocation10 + $0x610] sm:$0xff]
    %v3796 = vld [vmem:[#allocation10 + $0x618] sm:$0xff]
    %v3797 = vld [vmem:[#allocation10 + $0x620] sm:$0xff]
    %v3798 = vld [vmem:[#allocation10 + $0x628] sm:$0xff]
    %v3799 = vld [vmem:[#allocation10 + $0x630] sm:$0xff]
    %v3800 = vld [vmem:[#allocation10 + $0x638] sm:$0xff]
    %v3801 = vld [vmem:[#allocation10 + $0x640] sm:$0xff]
    %v3802 = vld [vmem:[#allocation10 + $0x648] sm:$0xff]
    %v3803 = vld [vmem:[#allocation10 + $0x650] sm:$0xff]
    %v3804 = vld [vmem:[#allocation10 + $0x658] sm:$0xff]
    %v3805 = vld [vmem:[#allocation10 + $0x660] sm:$0xff]
    %v3806 = vld [vmem:[#allocation10 + $0x668] sm:$0xff]
    %v3807 = vld [vmem:[#allocation10 + $0x670] sm:$0xff]
    %v3808 = vld [vmem:[#allocation10 + $0x678] sm:$0xff]
    %v3809 = vld [vmem:[#allocation10 + $0x680] sm:$0xff]
    %v3810 = vld [vmem:[#allocation10 + $0x688] sm:$0xff]
    %v3811 = vld [vmem:[#allocation10 + $0x690] sm:$0xff]
    %v3812 = vld [vmem:[#allocation10 + $0x698] sm:$0xff]
    %v3813 = vld [vmem:[#allocation10 + $0x6a0] sm:$0xff]
    %v3814 = vld [vmem:[#allocation10 + $0x6a8] sm:$0xff]
    %v3815 = vld [vmem:[#allocation10 + $0x6b0] sm:$0xff]
    %v3816 = vld [vmem:[#allocation10 + $0x6b8] sm:$0xff]
    %v3817 = vld [vmem:[#allocation10 + $0x6c0] sm:$0xff]
    %v3818 = vld [vmem:[#allocation10 + $0x6c8] sm:$0xff]
    %v3819 = vld [vmem:[#allocation10 + $0x6d0] sm:$0xff]
    %v3820 = vld [vmem:[#allocation10 + $0x6d8] sm:$0xff]
    %v3821 = vld [vmem:[#allocation10 + $0x6e0] sm:$0xff]
    %v3822 = vld [vmem:[#allocation10 + $0x6e8] sm:$0xff]
    %v3823 = vld [vmem:[#allocation10 + $0x6f0] sm:$0xff]
    %v3824 = vld [vmem:[#allocation10 + $0x6f8] sm:$0xff]
    %v3825 = vld [vmem:[#allocation10 + $0x700] sm:$0xff]
    %v3826 = vld [vmem:[#allocation10 + $0x708] sm:$0xff]
    %v3827 = vld [vmem:[#allocation10 + $0x710] sm:$0xff]
    %v3828 = vld [vmem:[#allocation10 + $0x718] sm:$0xff]
    %v3829 = vld [vmem:[#allocation10 + $0x720] sm:$0xff]
    %v3830 = vld [vmem:[#allocation10 + $0x728] sm:$0xff]
    %v3831 = vld [vmem:[#allocation10 + $0x730] sm:$0xff]
    %v3832 = vld [vmem:[#allocation10 + $0x738] sm:$0xff]
    %v3833 = vld [vmem:[#allocation10 + $0x740] sm:$0xff]
    %v3834 = vld [vmem:[#allocation10 + $0x748] sm:$0xff]
    %v3835 = vld [vmem:[#allocation10 + $0x750] sm:$0xff]
    %v3836 = vld [vmem:[#allocation10 + $0x758] sm:$0xff]
    %v3837 = vld [vmem:[#allocation10 + $0x760] sm:$0xff]
    %v3838 = vld [vmem:[#allocation10 + $0x768] sm:$0xff]
    %v3839 = vld [vmem:[#allocation10 + $0x770] sm:$0xff]
    %v3840 = vld [vmem:[#allocation10 + $0x778] sm:$0xff]
    %v3841 = vld [vmem:[#allocation10 + $0x780] sm:$0xff]
    %v3842 = vld [vmem:[#allocation10 + $0x788] sm:$0xff]
    %v3843 = vld [vmem:[#allocation10 + $0x790] sm:$0xff]
    %v3844 = vld [vmem:[#allocation10 + $0x798] sm:$0xff]
    %v3845 = vld [vmem:[#allocation10 + $0x7a0] sm:$0xff]
    %v3846 = vld [vmem:[#allocation10 + $0x7a8] sm:$0xff]
    %v3847 = vld [vmem:[#allocation10 + $0x7b0] sm:$0xff]
    %v3848 = vld [vmem:[#allocation10 + $0x7b8] sm:$0xff]
    %v3849 = vld [vmem:[#allocation10 + $0x7c0] sm:$0xff]
    %v3850 = vld [vmem:[#allocation10 + $0x7c8] sm:$0xff]
    %v3851 = vld [vmem:[#allocation10 + $0x7d0] sm:$0xff]
    %v3852 = vld [vmem:[#allocation10 + $0x7d8] sm:$0xff]
    %v3853 = vld [vmem:[#allocation10 + $0x7e0] sm:$0xff]
    %v3854 = vld [vmem:[#allocation10 + $0x7e8] sm:$0xff]
    %v3855 = vld [vmem:[#allocation10 + $0x7f0] sm:$0xff]
    %v3856 = vld [vmem:[#allocation10 + $0x7f8] sm:$0xff]
    %v3857 = vld [vmem:[%s9] sm:$0x3]
    %v3859 = vlaneseq
    %v3860 = vshrl.u32 %v3859, 7
    %v3861 = vsub.s32 0, %v3860
    %v3862 = vrot.slane %v3857, %v3861
    %v3863 = vlaneseq
    %v3864 = vshrl.u32 %v3863, 7
    %v3865 = vsub.s32 1, %v3864
    %v3866 = vrot.slane %v3857, %v3865
    %v4125 = vunpack.c.l.b16 %v3601
    %v4126 = vunpack.c.h.b16 %v3601
    %v4127 = vunpack.c.l.b16 %v3602
    %v4128 = vunpack.c.h.b16 %v3602
    %v4129 = vunpack.c.l.b16 %v3603
    %v4130 = vunpack.c.h.b16 %v3603
    %v4131 = vunpack.c.l.b16 %v3604
    %v4132 = vunpack.c.h.b16 %v3604
    %v4133 = vunpack.c.l.b16 %v3605
    %v4134 = vunpack.c.h.b16 %v3605
    %v4135 = vunpack.c.l.b16 %v3606
    %v4136 = vunpack.c.h.b16 %v3606
    %v4137 = vunpack.c.l.b16 %v3607
    %v4138 = vunpack.c.h.b16 %v3607
    %v4139 = vunpack.c.l.b16 %v3608
    %v4140 = vunpack.c.h.b16 %v3608
    %v4141 = vunpack.c.l.b16 %v3609
    %v4142 = vunpack.c.h.b16 %v3609
    %v4143 = vunpack.c.l.b16 %v3610
    %v4144 = vunpack.c.h.b16 %v3610
    %v4145 = vunpack.c.l.b16 %v3611
    %v4146 = vunpack.c.h.b16 %v3611
    %v4147 = vunpack.c.l.b16 %v3612
    %v4148 = vunpack.c.h.b16 %v3612
    %v4149 = vunpack.c.l.b16 %v3613
    %v4150 = vunpack.c.h.b16 %v3613
    %v4151 = vunpack.c.l.b16 %v3614
    %v4152 = vunpack.c.h.b16 %v3614
    %v4153 = vunpack.c.l.b16 %v3615
    %v4154 = vunpack.c.h.b16 %v3615
    %v4155 = vunpack.c.l.b16 %v3616
    %v4156 = vunpack.c.h.b16 %v3616
    %v4157 = vunpack.c.l.b16 %v3617
    %v4158 = vunpack.c.h.b16 %v3617
    %v4159 = vunpack.c.l.b16 %v3618
    %v4160 = vunpack.c.h.b16 %v3618
    %v4161 = vunpack.c.l.b16 %v3619
    %v4162 = vunpack.c.h.b16 %v3619
    %v4163 = vunpack.c.l.b16 %v3620
    %v4164 = vunpack.c.h.b16 %v3620
    %v4165 = vunpack.c.l.b16 %v3621
    %v4166 = vunpack.c.h.b16 %v3621
    %v4167 = vunpack.c.l.b16 %v3622
    %v4168 = vunpack.c.h.b16 %v3622
    %v4169 = vunpack.c.l.b16 %v3623
    %v4170 = vunpack.c.h.b16 %v3623
    %v4171 = vunpack.c.l.b16 %v3624
    %v4172 = vunpack.c.h.b16 %v3624
    %v4173 = vunpack.c.l.b16 %v3625
    %v4174 = vunpack.c.h.b16 %v3625
    %v4175 = vunpack.c.l.b16 %v3626
    %v4176 = vunpack.c.h.b16 %v3626
    %v4177 = vunpack.c.l.b16 %v3627
    %v4178 = vunpack.c.h.b16 %v3627
    %v4179 = vunpack.c.l.b16 %v3628
    %v4180 = vunpack.c.h.b16 %v3628
    %v4181 = vunpack.c.l.b16 %v3629
    %v4182 = vunpack.c.h.b16 %v3629
    %v4183 = vunpack.c.l.b16 %v3630
    %v4184 = vunpack.c.h.b16 %v3630
    %v4185 = vunpack.c.l.b16 %v3631
    %v4186 = vunpack.c.h.b16 %v3631
    %v4187 = vunpack.c.l.b16 %v3632
    %v4188 = vunpack.c.h.b16 %v3632
    %v4189 = vunpack.c.l.b16 %v3633
    %v4190 = vunpack.c.h.b16 %v3633
    %v4191 = vunpack.c.l.b16 %v3634
    %v4192 = vunpack.c.h.b16 %v3634
    %v4193 = vunpack.c.l.b16 %v3635
    %v4194 = vunpack.c.h.b16 %v3635
    %v4195 = vunpack.c.l.b16 %v3636
    %v4196 = vunpack.c.h.b16 %v3636
    %v4197 = vunpack.c.l.b16 %v3637
    %v4198 = vunpack.c.h.b16 %v3637
    %v4199 = vunpack.c.l.b16 %v3638
    %v4200 = vunpack.c.h.b16 %v3638
    %v4201 = vunpack.c.l.b16 %v3639
    %v4202 = vunpack.c.h.b16 %v3639
    %v4203 = vunpack.c.l.b16 %v3640
    %v4204 = vunpack.c.h.b16 %v3640
    %v4205 = vunpack.c.l.b16 %v3641
    %v4206 = vunpack.c.h.b16 %v3641
    %v4207 = vunpack.c.l.b16 %v3642
    %v4208 = vunpack.c.h.b16 %v3642
    %v4209 = vunpack.c.l.b16 %v3643
    %v4210 = vunpack.c.h.b16 %v3643
    %v4211 = vunpack.c.l.b16 %v3644
    %v4212 = vunpack.c.h.b16 %v3644
    %v4213 = vunpack.c.l.b16 %v3645
    %v4214 = vunpack.c.h.b16 %v3645
    %v4215 = vunpack.c.l.b16 %v3646
    %v4216 = vunpack.c.h.b16 %v3646
    %v4217 = vunpack.c.l.b16 %v3647
    %v4218 = vunpack.c.h.b16 %v3647
    %v4219 = vunpack.c.l.b16 %v3648
    %v4220 = vunpack.c.h.b16 %v3648
    %v4221 = vunpack.c.l.b16 %v3649
    %v4222 = vunpack.c.h.b16 %v3649
    %v4223 = vunpack.c.l.b16 %v3650
    %v4224 = vunpack.c.h.b16 %v3650
    %v4225 = vunpack.c.l.b16 %v3651
    %v4226 = vunpack.c.h.b16 %v3651
    %v4227 = vunpack.c.l.b16 %v3652
    %v4228 = vunpack.c.h.b16 %v3652
    %v4229 = vunpack.c.l.b16 %v3653
    %v4230 = vunpack.c.h.b16 %v3653
    %v4231 = vunpack.c.l.b16 %v3654
    %v4232 = vunpack.c.h.b16 %v3654
    %v4233 = vunpack.c.l.b16 %v3655
    %v4234 = vunpack.c.h.b16 %v3655
    %v4235 = vunpack.c.l.b16 %v3656
    %v4236 = vunpack.c.h.b16 %v3656
    %v4237 = vunpack.c.l.b16 %v3657
    %v4238 = vunpack.c.h.b16 %v3657
    %v4239 = vunpack.c.l.b16 %v3658
    %v4240 = vunpack.c.h.b16 %v3658
    %v4241 = vunpack.c.l.b16 %v3659
    %v4242 = vunpack.c.h.b16 %v3659
    %v4243 = vunpack.c.l.b16 %v3660
    %v4244 = vunpack.c.h.b16 %v3660
    %v4245 = vunpack.c.l.b16 %v3661
    %v4246 = vunpack.c.h.b16 %v3661
    %v4247 = vunpack.c.l.b16 %v3662
    %v4248 = vunpack.c.h.b16 %v3662
    %v4249 = vunpack.c.l.b16 %v3663
    %v4250 = vunpack.c.h.b16 %v3663
    %v4251 = vunpack.c.l.b16 %v3664
    %v4252 = vunpack.c.h.b16 %v3664
    %v4253 = vunpack.c.l.b16 %v3665
    %v4254 = vunpack.c.h.b16 %v3665
    %v4255 = vunpack.c.l.b16 %v3666
    %v4256 = vunpack.c.h.b16 %v3666
    %v4257 = vunpack.c.l.b16 %v3667
    %v4258 = vunpack.c.h.b16 %v3667
    %v4259 = vunpack.c.l.b16 %v3668
    %v4260 = vunpack.c.h.b16 %v3668
    %v4261 = vunpack.c.l.b16 %v3669
    %v4262 = vunpack.c.h.b16 %v3669
    %v4263 = vunpack.c.l.b16 %v3670
    %v4264 = vunpack.c.h.b16 %v3670
    %v4265 = vunpack.c.l.b16 %v3671
    %v4266 = vunpack.c.h.b16 %v3671
    %v4267 = vunpack.c.l.b16 %v3672
    %v4268 = vunpack.c.h.b16 %v3672
    %v4269 = vunpack.c.l.b16 %v3673
    %v4270 = vunpack.c.h.b16 %v3673
    %v4271 = vunpack.c.l.b16 %v3674
    %v4272 = vunpack.c.h.b16 %v3674
    %v4273 = vunpack.c.l.b16 %v3675
    %v4274 = vunpack.c.h.b16 %v3675
    %v4275 = vunpack.c.l.b16 %v3676
    %v4276 = vunpack.c.h.b16 %v3676
    %v4277 = vunpack.c.l.b16 %v3677
    %v4278 = vunpack.c.h.b16 %v3677
    %v4279 = vunpack.c.l.b16 %v3678
    %v4280 = vunpack.c.h.b16 %v3678
    %v4281 = vunpack.c.l.b16 %v3679
    %v4282 = vunpack.c.h.b16 %v3679
    %v4283 = vunpack.c.l.b16 %v3680
    %v4284 = vunpack.c.h.b16 %v3680
    %v4285 = vunpack.c.l.b16 %v3681
    %v4286 = vunpack.c.h.b16 %v3681
    %v4287 = vunpack.c.l.b16 %v3682
    %v4288 = vunpack.c.h.b16 %v3682
    %v4289 = vunpack.c.l.b16 %v3683
    %v4290 = vunpack.c.h.b16 %v3683
    %v4291 = vunpack.c.l.b16 %v3684
    %v4292 = vunpack.c.h.b16 %v3684
    %v4293 = vunpack.c.l.b16 %v3685
    %v4294 = vunpack.c.h.b16 %v3685
    %v4295 = vunpack.c.l.b16 %v3686
    %v4296 = vunpack.c.h.b16 %v3686
    %v4297 = vunpack.c.l.b16 %v3687
    %v4298 = vunpack.c.h.b16 %v3687
    %v4299 = vunpack.c.l.b16 %v3688
    %v4300 = vunpack.c.h.b16 %v3688
    %v4301 = vunpack.c.l.b16 %v3689
    %v4302 = vunpack.c.h.b16 %v3689
    %v4303 = vunpack.c.l.b16 %v3690
    %v4304 = vunpack.c.h.b16 %v3690
    %v4305 = vunpack.c.l.b16 %v3691
    %v4306 = vunpack.c.h.b16 %v3691
    %v4307 = vunpack.c.l.b16 %v3692
    %v4308 = vunpack.c.h.b16 %v3692
    %v4309 = vunpack.c.l.b16 %v3693
    %v4310 = vunpack.c.h.b16 %v3693
    %v4311 = vunpack.c.l.b16 %v3694
    %v4312 = vunpack.c.h.b16 %v3694
    %v4313 = vunpack.c.l.b16 %v3695
    %v4314 = vunpack.c.h.b16 %v3695
    %v4315 = vunpack.c.l.b16 %v3696
    %v4316 = vunpack.c.h.b16 %v3696
    %v4317 = vunpack.c.l.b16 %v3697
    %v4318 = vunpack.c.h.b16 %v3697
    %v4319 = vunpack.c.l.b16 %v3698
    %v4320 = vunpack.c.h.b16 %v3698
    %v4321 = vunpack.c.l.b16 %v3699
    %v4322 = vunpack.c.h.b16 %v3699
    %v4323 = vunpack.c.l.b16 %v3700
    %v4324 = vunpack.c.h.b16 %v3700
    %v4325 = vunpack.c.l.b16 %v3701
    %v4326 = vunpack.c.h.b16 %v3701
    %v4327 = vunpack.c.l.b16 %v3702
    %v4328 = vunpack.c.h.b16 %v3702
    %v4329 = vunpack.c.l.b16 %v3703
    %v4330 = vunpack.c.h.b16 %v3703
    %v4331 = vunpack.c.l.b16 %v3704
    %v4332 = vunpack.c.h.b16 %v3704
    %v4333 = vunpack.c.l.b16 %v3705
    %v4334 = vunpack.c.h.b16 %v3705
    %v4335 = vunpack.c.l.b16 %v3706
    %v4336 = vunpack.c.h.b16 %v3706
    %v4337 = vunpack.c.l.b16 %v3707
    %v4338 = vunpack.c.h.b16 %v3707
    %v4339 = vunpack.c.l.b16 %v3708
    %v4340 = vunpack.c.h.b16 %v3708
    %v4341 = vunpack.c.l.b16 %v3709
    %v4342 = vunpack.c.h.b16 %v3709
    %v4343 = vunpack.c.l.b16 %v3710
    %v4344 = vunpack.c.h.b16 %v3710
    %v4345 = vunpack.c.l.b16 %v3711
    %v4346 = vunpack.c.h.b16 %v3711
    %v4347 = vunpack.c.l.b16 %v3712
    %v4348 = vunpack.c.h.b16 %v3712
    %v4349 = vunpack.c.l.b16 %v3713
    %v4350 = vunpack.c.h.b16 %v3713
    %v4351 = vunpack.c.l.b16 %v3714
    %v4352 = vunpack.c.h.b16 %v3714
    %v4353 = vunpack.c.l.b16 %v3715
    %v4354 = vunpack.c.h.b16 %v3715
    %v4355 = vunpack.c.l.b16 %v3716
    %v4356 = vunpack.c.h.b16 %v3716
    %v4357 = vunpack.c.l.b16 %v3717
    %v4358 = vunpack.c.h.b16 %v3717
    %v4359 = vunpack.c.l.b16 %v3718
    %v4360 = vunpack.c.h.b16 %v3718
    %v4361 = vunpack.c.l.b16 %v3719
    %v4362 = vunpack.c.h.b16 %v3719
    %v4363 = vunpack.c.l.b16 %v3720
    %v4364 = vunpack.c.h.b16 %v3720
    %v4365 = vunpack.c.l.b16 %v3721
    %v4366 = vunpack.c.h.b16 %v3721
    %v4367 = vunpack.c.l.b16 %v3722
    %v4368 = vunpack.c.h.b16 %v3722
    %v4369 = vunpack.c.l.b16 %v3723
    %v4370 = vunpack.c.h.b16 %v3723
    %v4371 = vunpack.c.l.b16 %v3724
    %v4372 = vunpack.c.h.b16 %v3724
    %v4373 = vunpack.c.l.b16 %v3725
    %v4374 = vunpack.c.h.b16 %v3725
    %v4375 = vunpack.c.l.b16 %v3726
    %v4376 = vunpack.c.h.b16 %v3726
    %v4377 = vunpack.c.l.b16 %v3727
    %v4378 = vunpack.c.h.b16 %v3727
    %v4379 = vunpack.c.l.b16 %v3728
    %v4380 = vunpack.c.h.b16 %v3728
    %v4381 = vunpack.c.l.b16 %v3729
    %v4382 = vunpack.c.h.b16 %v3729
    %v4383 = vunpack.c.l.b16 %v3730
    %v4384 = vunpack.c.h.b16 %v3730
    %v4385 = vunpack.c.l.b16 %v3731
    %v4386 = vunpack.c.h.b16 %v3731
    %v4387 = vunpack.c.l.b16 %v3732
    %v4388 = vunpack.c.h.b16 %v3732
    %v4389 = vunpack.c.l.b16 %v3733
    %v4390 = vunpack.c.h.b16 %v3733
    %v4391 = vunpack.c.l.b16 %v3734
    %v4392 = vunpack.c.h.b16 %v3734
    %v4393 = vunpack.c.l.b16 %v3735
    %v4394 = vunpack.c.h.b16 %v3735
    %v4395 = vunpack.c.l.b16 %v3736
    %v4396 = vunpack.c.h.b16 %v3736
    %v4397 = vunpack.c.l.b16 %v3737
    %v4398 = vunpack.c.h.b16 %v3737
    %v4399 = vunpack.c.l.b16 %v3738
    %v4400 = vunpack.c.h.b16 %v3738
    %v4401 = vunpack.c.l.b16 %v3739
    %v4402 = vunpack.c.h.b16 %v3739
    %v4403 = vunpack.c.l.b16 %v3740
    %v4404 = vunpack.c.h.b16 %v3740
    %v4405 = vunpack.c.l.b16 %v3741
    %v4406 = vunpack.c.h.b16 %v3741
    %v4407 = vunpack.c.l.b16 %v3742
    %v4408 = vunpack.c.h.b16 %v3742
    %v4409 = vunpack.c.l.b16 %v3743
    %v4410 = vunpack.c.h.b16 %v3743
    %v4411 = vunpack.c.l.b16 %v3744
    %v4412 = vunpack.c.h.b16 %v3744
    %v4413 = vunpack.c.l.b16 %v3745
    %v4414 = vunpack.c.h.b16 %v3745
    %v4415 = vunpack.c.l.b16 %v3746
    %v4416 = vunpack.c.h.b16 %v3746
    %v4417 = vunpack.c.l.b16 %v3747
    %v4418 = vunpack.c.h.b16 %v3747
    %v4419 = vunpack.c.l.b16 %v3748
    %v4420 = vunpack.c.h.b16 %v3748
    %v4421 = vunpack.c.l.b16 %v3749
    %v4422 = vunpack.c.h.b16 %v3749
    %v4423 = vunpack.c.l.b16 %v3750
    %v4424 = vunpack.c.h.b16 %v3750
    %v4425 = vunpack.c.l.b16 %v3751
    %v4426 = vunpack.c.h.b16 %v3751
    %v4427 = vunpack.c.l.b16 %v3752
    %v4428 = vunpack.c.h.b16 %v3752
    %v4429 = vunpack.c.l.b16 %v3753
    %v4430 = vunpack.c.h.b16 %v3753
    %v4431 = vunpack.c.l.b16 %v3754
    %v4432 = vunpack.c.h.b16 %v3754
    %v4433 = vunpack.c.l.b16 %v3755
    %v4434 = vunpack.c.h.b16 %v3755
    %v4435 = vunpack.c.l.b16 %v3756
    %v4436 = vunpack.c.h.b16 %v3756
    %v4437 = vunpack.c.l.b16 %v3757
    %v4438 = vunpack.c.h.b16 %v3757
    %v4439 = vunpack.c.l.b16 %v3758
    %v4440 = vunpack.c.h.b16 %v3758
    %v4441 = vunpack.c.l.b16 %v3759
    %v4442 = vunpack.c.h.b16 %v3759
    %v4443 = vunpack.c.l.b16 %v3760
    %v4444 = vunpack.c.h.b16 %v3760
    %v4445 = vunpack.c.l.b16 %v3761
    %v4446 = vunpack.c.h.b16 %v3761
    %v4447 = vunpack.c.l.b16 %v3762
    %v4448 = vunpack.c.h.b16 %v3762
    %v4449 = vunpack.c.l.b16 %v3763
    %v4450 = vunpack.c.h.b16 %v3763
    %v4451 = vunpack.c.l.b16 %v3764
    %v4452 = vunpack.c.h.b16 %v3764
    %v4453 = vunpack.c.l.b16 %v3765
    %v4454 = vunpack.c.h.b16 %v3765
    %v4455 = vunpack.c.l.b16 %v3766
    %v4456 = vunpack.c.h.b16 %v3766
    %v4457 = vunpack.c.l.b16 %v3767
    %v4458 = vunpack.c.h.b16 %v3767
    %v4459 = vunpack.c.l.b16 %v3768
    %v4460 = vunpack.c.h.b16 %v3768
    %v4461 = vunpack.c.l.b16 %v3769
    %v4462 = vunpack.c.h.b16 %v3769
    %v4463 = vunpack.c.l.b16 %v3770
    %v4464 = vunpack.c.h.b16 %v3770
    %v4465 = vunpack.c.l.b16 %v3771
    %v4466 = vunpack.c.h.b16 %v3771
    %v4467 = vunpack.c.l.b16 %v3772
    %v4468 = vunpack.c.h.b16 %v3772
    %v4469 = vunpack.c.l.b16 %v3773
    %v4470 = vunpack.c.h.b16 %v3773
    %v4471 = vunpack.c.l.b16 %v3774
    %v4472 = vunpack.c.h.b16 %v3774
    %v4473 = vunpack.c.l.b16 %v3775
    %v4474 = vunpack.c.h.b16 %v3775
    %v4475 = vunpack.c.l.b16 %v3776
    %v4476 = vunpack.c.h.b16 %v3776
    %v4477 = vunpack.c.l.b16 %v3777
    %v4478 = vunpack.c.h.b16 %v3777
    %v4479 = vunpack.c.l.b16 %v3778
    %v4480 = vunpack.c.h.b16 %v3778
    %v4481 = vunpack.c.l.b16 %v3779
    %v4482 = vunpack.c.h.b16 %v3779
    %v4483 = vunpack.c.l.b16 %v3780
    %v4484 = vunpack.c.h.b16 %v3780
    %v4485 = vunpack.c.l.b16 %v3781
    %v4486 = vunpack.c.h.b16 %v3781
    %v4487 = vunpack.c.l.b16 %v3782
    %v4488 = vunpack.c.h.b16 %v3782
    %v4489 = vunpack.c.l.b16 %v3783
    %v4490 = vunpack.c.h.b16 %v3783
    %v4491 = vunpack.c.l.b16 %v3784
    %v4492 = vunpack.c.h.b16 %v3784
    %v4493 = vunpack.c.l.b16 %v3785
    %v4494 = vunpack.c.h.b16 %v3785
    %v4495 = vunpack.c.l.b16 %v3786
    %v4496 = vunpack.c.h.b16 %v3786
    %v4497 = vunpack.c.l.b16 %v3787
    %v4498 = vunpack.c.h.b16 %v3787
    %v4499 = vunpack.c.l.b16 %v3788
    %v4500 = vunpack.c.h.b16 %v3788
    %v4501 = vunpack.c.l.b16 %v3789
    %v4502 = vunpack.c.h.b16 %v3789
    %v4503 = vunpack.c.l.b16 %v3790
    %v4504 = vunpack.c.h.b16 %v3790
    %v4505 = vunpack.c.l.b16 %v3791
    %v4506 = vunpack.c.h.b16 %v3791
    %v4507 = vunpack.c.l.b16 %v3792
    %v4508 = vunpack.c.h.b16 %v3792
    %v4509 = vunpack.c.l.b16 %v3793
    %v4510 = vunpack.c.h.b16 %v3793
    %v4511 = vunpack.c.l.b16 %v3794
    %v4512 = vunpack.c.h.b16 %v3794
    %v4513 = vunpack.c.l.b16 %v3795
    %v4514 = vunpack.c.h.b16 %v3795
    %v4515 = vunpack.c.l.b16 %v3796
    %v4516 = vunpack.c.h.b16 %v3796
    %v4517 = vunpack.c.l.b16 %v3797
    %v4518 = vunpack.c.h.b16 %v3797
    %v4519 = vunpack.c.l.b16 %v3798
    %v4520 = vunpack.c.h.b16 %v3798
    %v4521 = vunpack.c.l.b16 %v3799
    %v4522 = vunpack.c.h.b16 %v3799
    %v4523 = vunpack.c.l.b16 %v3800
    %v4524 = vunpack.c.h.b16 %v3800
    %v4525 = vunpack.c.l.b16 %v3801
    %v4526 = vunpack.c.h.b16 %v3801
    %v4527 = vunpack.c.l.b16 %v3802
    %v4528 = vunpack.c.h.b16 %v3802
    %v4529 = vunpack.c.l.b16 %v3803
    %v4530 = vunpack.c.h.b16 %v3803
    %v4531 = vunpack.c.l.b16 %v3804
    %v4532 = vunpack.c.h.b16 %v3804
    %v4533 = vunpack.c.l.b16 %v3805
    %v4534 = vunpack.c.h.b16 %v3805
    %v4535 = vunpack.c.l.b16 %v3806
    %v4536 = vunpack.c.h.b16 %v3806
    %v4537 = vunpack.c.l.b16 %v3807
    %v4538 = vunpack.c.h.b16 %v3807
    %v4539 = vunpack.c.l.b16 %v3808
    %v4540 = vunpack.c.h.b16 %v3808
    %v4541 = vunpack.c.l.b16 %v3809
    %v4542 = vunpack.c.h.b16 %v3809
    %v4543 = vunpack.c.l.b16 %v3810
    %v4544 = vunpack.c.h.b16 %v3810
    %v4545 = vunpack.c.l.b16 %v3811
    %v4546 = vunpack.c.h.b16 %v3811
    %v4547 = vunpack.c.l.b16 %v3812
    %v4548 = vunpack.c.h.b16 %v3812
    %v4549 = vunpack.c.l.b16 %v3813
    %v4550 = vunpack.c.h.b16 %v3813
    %v4551 = vunpack.c.l.b16 %v3814
    %v4552 = vunpack.c.h.b16 %v3814
    %v4553 = vunpack.c.l.b16 %v3815
    %v4554 = vunpack.c.h.b16 %v3815
    %v4555 = vunpack.c.l.b16 %v3816
    %v4556 = vunpack.c.h.b16 %v3816
    %v4557 = vunpack.c.l.b16 %v3817
    %v4558 = vunpack.c.h.b16 %v3817
    %v4559 = vunpack.c.l.b16 %v3818
    %v4560 = vunpack.c.h.b16 %v3818
    %v4561 = vunpack.c.l.b16 %v3819
    %v4562 = vunpack.c.h.b16 %v3819
    %v4563 = vunpack.c.l.b16 %v3820
    %v4564 = vunpack.c.h.b16 %v3820
    %v4565 = vunpack.c.l.b16 %v3821
    %v4566 = vunpack.c.h.b16 %v3821
    %v4567 = vunpack.c.l.b16 %v3822
    %v4568 = vunpack.c.h.b16 %v3822
    %v4569 = vunpack.c.l.b16 %v3823
    %v4570 = vunpack.c.h.b16 %v3823
    %v4571 = vunpack.c.l.b16 %v3824
    %v4572 = vunpack.c.h.b16 %v3824
    %v4573 = vunpack.c.l.b16 %v3825
    %v4574 = vunpack.c.h.b16 %v3825
    %v4575 = vunpack.c.l.b16 %v3826
    %v4576 = vunpack.c.h.b16 %v3826
    %v4577 = vunpack.c.l.b16 %v3827
    %v4578 = vunpack.c.h.b16 %v3827
    %v4579 = vunpack.c.l.b16 %v3828
    %v4580 = vunpack.c.h.b16 %v3828
    %v4581 = vunpack.c.l.b16 %v3829
    %v4582 = vunpack.c.h.b16 %v3829
    %v4583 = vunpack.c.l.b16 %v3830
    %v4584 = vunpack.c.h.b16 %v3830
    %v4585 = vunpack.c.l.b16 %v3831
    %v4586 = vunpack.c.h.b16 %v3831
    %v4587 = vunpack.c.l.b16 %v3832
    %v4588 = vunpack.c.h.b16 %v3832
    %v4589 = vunpack.c.l.b16 %v3833
    %v4590 = vunpack.c.h.b16 %v3833
    %v4591 = vunpack.c.l.b16 %v3834
    %v4592 = vunpack.c.h.b16 %v3834
    %v4593 = vunpack.c.l.b16 %v3835
    %v4594 = vunpack.c.h.b16 %v3835
    %v4595 = vunpack.c.l.b16 %v3836
    %v4596 = vunpack.c.h.b16 %v3836
    %v4597 = vunpack.c.l.b16 %v3837
    %v4598 = vunpack.c.h.b16 %v3837
    %v4599 = vunpack.c.l.b16 %v3838
    %v4600 = vunpack.c.h.b16 %v3838
    %v4601 = vunpack.c.l.b16 %v3839
    %v4602 = vunpack.c.h.b16 %v3839
    %v4603 = vunpack.c.l.b16 %v3840
    %v4604 = vunpack.c.h.b16 %v3840
    %v4605 = vunpack.c.l.b16 %v3841
    %v4606 = vunpack.c.h.b16 %v3841
    %v4607 = vunpack.c.l.b16 %v3842
    %v4608 = vunpack.c.h.b16 %v3842
    %v4609 = vunpack.c.l.b16 %v3843
    %v4610 = vunpack.c.h.b16 %v3843
    %v4611 = vunpack.c.l.b16 %v3844
    %v4612 = vunpack.c.h.b16 %v3844
    %v4613 = vunpack.c.l.b16 %v3845
    %v4614 = vunpack.c.h.b16 %v3845
    %v4615 = vunpack.c.l.b16 %v3846
    %v4616 = vunpack.c.h.b16 %v3846
    %v4617 = vunpack.c.l.b16 %v3847
    %v4618 = vunpack.c.h.b16 %v3847
    %v4619 = vunpack.c.l.b16 %v3848
    %v4620 = vunpack.c.h.b16 %v3848
    %v4621 = vunpack.c.l.b16 %v3849
    %v4622 = vunpack.c.h.b16 %v3849
    %v4623 = vunpack.c.l.b16 %v3850
    %v4624 = vunpack.c.h.b16 %v3850
    %v4625 = vunpack.c.l.b16 %v3851
    %v4626 = vunpack.c.h.b16 %v3851
    %v4627 = vunpack.c.l.b16 %v3852
    %v4628 = vunpack.c.h.b16 %v3852
    %v4629 = vunpack.c.l.b16 %v3853
    %v4630 = vunpack.c.h.b16 %v3853
    %v4631 = vunpack.c.l.b16 %v3854
    %v4632 = vunpack.c.h.b16 %v3854
    %v4633 = vunpack.c.l.b16 %v3855
    %v4634 = vunpack.c.h.b16 %v3855
    %v4635 = vunpack.c.l.b16 %v3856
    %v4636 = vunpack.c.h.b16 %v3856
    %v4637 = vpack.c.b16 %v4127, %v4125
    %v4638 = vpack.c.b16 %v4128, %v4126
    %v4639 = vpack.c.b16 %v4131, %v4129
    %v4640 = vpack.c.b16 %v4132, %v4130
    %v4641 = vpack.c.b16 %v4135, %v4133
    %v4642 = vpack.c.b16 %v4136, %v4134
    %v4643 = vpack.c.b16 %v4139, %v4137
    %v4644 = vpack.c.b16 %v4140, %v4138
    %v4645 = vpack.c.b16 %v4143, %v4141
    %v4646 = vpack.c.b16 %v4144, %v4142
    %v4647 = vpack.c.b16 %v4147, %v4145
    %v4648 = vpack.c.b16 %v4148, %v4146
    %v4649 = vpack.c.b16 %v4151, %v4149
    %v4650 = vpack.c.b16 %v4152, %v4150
    %v4651 = vpack.c.b16 %v4155, %v4153
    %v4652 = vpack.c.b16 %v4156, %v4154
    %v4653 = vpack.c.b16 %v4159, %v4157
    %v4654 = vpack.c.b16 %v4160, %v4158
    %v4655 = vpack.c.b16 %v4163, %v4161
    %v4656 = vpack.c.b16 %v4164, %v4162
    %v4657 = vpack.c.b16 %v4167, %v4165
    %v4658 = vpack.c.b16 %v4168, %v4166
    %v4659 = vpack.c.b16 %v4171, %v4169
    %v4660 = vpack.c.b16 %v4172, %v4170
    %v4661 = vpack.c.b16 %v4175, %v4173
    %v4662 = vpack.c.b16 %v4176, %v4174
    %v4663 = vpack.c.b16 %v4179, %v4177
    %v4664 = vpack.c.b16 %v4180, %v4178
    %v4665 = vpack.c.b16 %v4183, %v4181
    %v4666 = vpack.c.b16 %v4184, %v4182
    %v4667 = vpack.c.b16 %v4187, %v4185
    %v4668 = vpack.c.b16 %v4188, %v4186
    %v4669 = vpack.c.b16 %v4191, %v4189
    %v4670 = vpack.c.b16 %v4192, %v4190
    %v4671 = vpack.c.b16 %v4195, %v4193
    %v4672 = vpack.c.b16 %v4196, %v4194
    %v4673 = vpack.c.b16 %v4199, %v4197
    %v4674 = vpack.c.b16 %v4200, %v4198
    %v4675 = vpack.c.b16 %v4203, %v4201
    %v4676 = vpack.c.b16 %v4204, %v4202
    %v4677 = vpack.c.b16 %v4207, %v4205
    %v4678 = vpack.c.b16 %v4208, %v4206
    %v4679 = vpack.c.b16 %v4211, %v4209
    %v4680 = vpack.c.b16 %v4212, %v4210
    %v4681 = vpack.c.b16 %v4215, %v4213
    %v4682 = vpack.c.b16 %v4216, %v4214
    %v4683 = vpack.c.b16 %v4219, %v4217
    %v4684 = vpack.c.b16 %v4220, %v4218
    %v4685 = vpack.c.b16 %v4223, %v4221
    %v4686 = vpack.c.b16 %v4224, %v4222
    %v4687 = vpack.c.b16 %v4227, %v4225
    %v4688 = vpack.c.b16 %v4228, %v4226
    %v4689 = vpack.c.b16 %v4231, %v4229
    %v4690 = vpack.c.b16 %v4232, %v4230
    %v4691 = vpack.c.b16 %v4235, %v4233
    %v4692 = vpack.c.b16 %v4236, %v4234
    %v4693 = vpack.c.b16 %v4239, %v4237
    %v4694 = vpack.c.b16 %v4240, %v4238
    %v4695 = vpack.c.b16 %v4243, %v4241
    %v4696 = vpack.c.b16 %v4244, %v4242
    %v4697 = vpack.c.b16 %v4247, %v4245
    %v4698 = vpack.c.b16 %v4248, %v4246
    %v4699 = vpack.c.b16 %v4251, %v4249
    %v4700 = vpack.c.b16 %v4252, %v4250
    %v4701 = vpack.c.b16 %v4255, %v4253
    %v4702 = vpack.c.b16 %v4256, %v4254
    %v4703 = vpack.c.b16 %v4259, %v4257
    %v4704 = vpack.c.b16 %v4260, %v4258
    %v4705 = vpack.c.b16 %v4263, %v4261
    %v4706 = vpack.c.b16 %v4264, %v4262
    %v4707 = vpack.c.b16 %v4267, %v4265
    %v4708 = vpack.c.b16 %v4268, %v4266
    %v4709 = vpack.c.b16 %v4271, %v4269
    %v4710 = vpack.c.b16 %v4272, %v4270
    %v4711 = vpack.c.b16 %v4275, %v4273
    %v4712 = vpack.c.b16 %v4276, %v4274
    %v4713 = vpack.c.b16 %v4279, %v4277
    %v4714 = vpack.c.b16 %v4280, %v4278
    %v4715 = vpack.c.b16 %v4283, %v4281
    %v4716 = vpack.c.b16 %v4284, %v4282
    %v4717 = vpack.c.b16 %v4287, %v4285
    %v4718 = vpack.c.b16 %v4288, %v4286
    %v4719 = vpack.c.b16 %v4291, %v4289
    %v4720 = vpack.c.b16 %v4292, %v4290
    %v4721 = vpack.c.b16 %v4295, %v4293
    %v4722 = vpack.c.b16 %v4296, %v4294
    %v4723 = vpack.c.b16 %v4299, %v4297
    %v4724 = vpack.c.b16 %v4300, %v4298
    %v4725 = vpack.c.b16 %v4303, %v4301
    %v4726 = vpack.c.b16 %v4304, %v4302
    %v4727 = vpack.c.b16 %v4307, %v4305
    %v4728 = vpack.c.b16 %v4308, %v4306
    %v4729 = vpack.c.b16 %v4311, %v4309
    %v4730 = vpack.c.b16 %v4312, %v4310
    %v4731 = vpack.c.b16 %v4315, %v4313
    %v4732 = vpack.c.b16 %v4316, %v4314
    %v4733 = vpack.c.b16 %v4319, %v4317
    %v4734 = vpack.c.b16 %v4320, %v4318
    %v4735 = vpack.c.b16 %v4323, %v4321
    %v4736 = vpack.c.b16 %v4324, %v4322
    %v4737 = vpack.c.b16 %v4327, %v4325
    %v4738 = vpack.c.b16 %v4328, %v4326
    %v4739 = vpack.c.b16 %v4331, %v4329
    %v4740 = vpack.c.b16 %v4332, %v4330
    %v4741 = vpack.c.b16 %v4335, %v4333
    %v4742 = vpack.c.b16 %v4336, %v4334
    %v4743 = vpack.c.b16 %v4339, %v4337
    %v4744 = vpack.c.b16 %v4340, %v4338
    %v4745 = vpack.c.b16 %v4343, %v4341
    %v4746 = vpack.c.b16 %v4344, %v4342
    %v4747 = vpack.c.b16 %v4347, %v4345
    %v4748 = vpack.c.b16 %v4348, %v4346
    %v4749 = vpack.c.b16 %v4351, %v4349
    %v4750 = vpack.c.b16 %v4352, %v4350
    %v4751 = vpack.c.b16 %v4355, %v4353
    %v4752 = vpack.c.b16 %v4356, %v4354
    %v4753 = vpack.c.b16 %v4359, %v4357
    %v4754 = vpack.c.b16 %v4360, %v4358
    %v4755 = vpack.c.b16 %v4363, %v4361
    %v4756 = vpack.c.b16 %v4364, %v4362
    %v4757 = vpack.c.b16 %v4367, %v4365
    %v4758 = vpack.c.b16 %v4368, %v4366
    %v4759 = vpack.c.b16 %v4371, %v4369
    %v4760 = vpack.c.b16 %v4372, %v4370
    %v4761 = vpack.c.b16 %v4375, %v4373
    %v4762 = vpack.c.b16 %v4376, %v4374
    %v4763 = vpack.c.b16 %v4379, %v4377
    %v4764 = vpack.c.b16 %v4380, %v4378
    %v4765 = vpack.c.b16 %v4383, %v4381
    %v4766 = vpack.c.b16 %v4384, %v4382
    %v4767 = vpack.c.b16 %v4387, %v4385
    %v4768 = vpack.c.b16 %v4388, %v4386
    %v4769 = vpack.c.b16 %v4391, %v4389
    %v4770 = vpack.c.b16 %v4392, %v4390
    %v4771 = vpack.c.b16 %v4395, %v4393
    %v4772 = vpack.c.b16 %v4396, %v4394
    %v4773 = vpack.c.b16 %v4399, %v4397
    %v4774 = vpack.c.b16 %v4400, %v4398
    %v4775 = vpack.c.b16 %v4403, %v4401
    %v4776 = vpack.c.b16 %v4404, %v4402
    %v4777 = vpack.c.b16 %v4407, %v4405
    %v4778 = vpack.c.b16 %v4408, %v4406
    %v4779 = vpack.c.b16 %v4411, %v4409
    %v4780 = vpack.c.b16 %v4412, %v4410
    %v4781 = vpack.c.b16 %v4415, %v4413
    %v4782 = vpack.c.b16 %v4416, %v4414
    %v4783 = vpack.c.b16 %v4419, %v4417
    %v4784 = vpack.c.b16 %v4420, %v4418
    %v4785 = vpack.c.b16 %v4423, %v4421
    %v4786 = vpack.c.b16 %v4424, %v4422
    %v4787 = vpack.c.b16 %v4427, %v4425
    %v4788 = vpack.c.b16 %v4428, %v4426
    %v4789 = vpack.c.b16 %v4431, %v4429
    %v4790 = vpack.c.b16 %v4432, %v4430
    %v4791 = vpack.c.b16 %v4435, %v4433
    %v4792 = vpack.c.b16 %v4436, %v4434
    %v4793 = vpack.c.b16 %v4439, %v4437
    %v4794 = vpack.c.b16 %v4440, %v4438
    %v4795 = vpack.c.b16 %v4443, %v4441
    %v4796 = vpack.c.b16 %v4444, %v4442
    %v4797 = vpack.c.b16 %v4447, %v4445
    %v4798 = vpack.c.b16 %v4448, %v4446
    %v4799 = vpack.c.b16 %v4451, %v4449
    %v4800 = vpack.c.b16 %v4452, %v4450
    %v4801 = vpack.c.b16 %v4455, %v4453
    %v4802 = vpack.c.b16 %v4456, %v4454
    %v4803 = vpack.c.b16 %v4459, %v4457
    %v4804 = vpack.c.b16 %v4460, %v4458
    %v4805 = vpack.c.b16 %v4463, %v4461
    %v4806 = vpack.c.b16 %v4464, %v4462
    %v4807 = vpack.c.b16 %v4467, %v4465
    %v4808 = vpack.c.b16 %v4468, %v4466
    %v4809 = vpack.c.b16 %v4471, %v4469
    %v4810 = vpack.c.b16 %v4472, %v4470
    %v4811 = vpack.c.b16 %v4475, %v4473
    %v4812 = vpack.c.b16 %v4476, %v4474
    %v4813 = vpack.c.b16 %v4479, %v4477
    %v4814 = vpack.c.b16 %v4480, %v4478
    %v4815 = vpack.c.b16 %v4483, %v4481
    %v4816 = vpack.c.b16 %v4484, %v4482
    %v4817 = vpack.c.b16 %v4487, %v4485
    %v4818 = vpack.c.b16 %v4488, %v4486
    %v4819 = vpack.c.b16 %v4491, %v4489
    %v4820 = vpack.c.b16 %v4492, %v4490
    %v4821 = vpack.c.b16 %v4495, %v4493
    %v4822 = vpack.c.b16 %v4496, %v4494
    %v4823 = vpack.c.b16 %v4499, %v4497
    %v4824 = vpack.c.b16 %v4500, %v4498
    %v4825 = vpack.c.b16 %v4503, %v4501
    %v4826 = vpack.c.b16 %v4504, %v4502
    %v4827 = vpack.c.b16 %v4507, %v4505
    %v4828 = vpack.c.b16 %v4508, %v4506
    %v4829 = vpack.c.b16 %v4511, %v4509
    %v4830 = vpack.c.b16 %v4512, %v4510
    %v4831 = vpack.c.b16 %v4515, %v4513
    %v4832 = vpack.c.b16 %v4516, %v4514
    %v4833 = vpack.c.b16 %v4519, %v4517
    %v4834 = vpack.c.b16 %v4520, %v4518
    %v4835 = vpack.c.b16 %v4523, %v4521
    %v4836 = vpack.c.b16 %v4524, %v4522
    %v4837 = vpack.c.b16 %v4527, %v4525
    %v4838 = vpack.c.b16 %v4528, %v4526
    %v4839 = vpack.c.b16 %v4531, %v4529
    %v4840 = vpack.c.b16 %v4532, %v4530
    %v4841 = vpack.c.b16 %v4535, %v4533
    %v4842 = vpack.c.b16 %v4536, %v4534
    %v4843 = vpack.c.b16 %v4539, %v4537
    %v4844 = vpack.c.b16 %v4540, %v4538
    %v4845 = vpack.c.b16 %v4543, %v4541
    %v4846 = vpack.c.b16 %v4544, %v4542
    %v4847 = vpack.c.b16 %v4547, %v4545
    %v4848 = vpack.c.b16 %v4548, %v4546
    %v4849 = vpack.c.b16 %v4551, %v4549
    %v4850 = vpack.c.b16 %v4552, %v4550
    %v4851 = vpack.c.b16 %v4555, %v4553
    %v4852 = vpack.c.b16 %v4556, %v4554
    %v4853 = vpack.c.b16 %v4559, %v4557
    %v4854 = vpack.c.b16 %v4560, %v4558
    %v4855 = vpack.c.b16 %v4563, %v4561
    %v4856 = vpack.c.b16 %v4564, %v4562
    %v4857 = vpack.c.b16 %v4567, %v4565
    %v4858 = vpack.c.b16 %v4568, %v4566
    %v4859 = vpack.c.b16 %v4571, %v4569
    %v4860 = vpack.c.b16 %v4572, %v4570
    %v4861 = vpack.c.b16 %v4575, %v4573
    %v4862 = vpack.c.b16 %v4576, %v4574
    %v4863 = vpack.c.b16 %v4579, %v4577
    %v4864 = vpack.c.b16 %v4580, %v4578
    %v4865 = vpack.c.b16 %v4583, %v4581
    %v4866 = vpack.c.b16 %v4584, %v4582
    %v4867 = vpack.c.b16 %v4587, %v4585
    %v4868 = vpack.c.b16 %v4588, %v4586
    %v4869 = vpack.c.b16 %v4591, %v4589
    %v4870 = vpack.c.b16 %v4592, %v4590
    %v4871 = vpack.c.b16 %v4595, %v4593
    %v4872 = vpack.c.b16 %v4596, %v4594
    %v4873 = vpack.c.b16 %v4599, %v4597
    %v4874 = vpack.c.b16 %v4600, %v4598
    %v4875 = vpack.c.b16 %v4603, %v4601
    %v4876 = vpack.c.b16 %v4604, %v4602
    %v4877 = vpack.c.b16 %v4607, %v4605
    %v4878 = vpack.c.b16 %v4608, %v4606
    %v4879 = vpack.c.b16 %v4611, %v4609
    %v4880 = vpack.c.b16 %v4612, %v4610
    %v4881 = vpack.c.b16 %v4615, %v4613
    %v4882 = vpack.c.b16 %v4616, %v4614
    %v4883 = vpack.c.b16 %v4619, %v4617
    %v4884 = vpack.c.b16 %v4620, %v4618
    %v4885 = vpack.c.b16 %v4623, %v4621
    %v4886 = vpack.c.b16 %v4624, %v4622
    %v4887 = vpack.c.b16 %v4627, %v4625
    %v4888 = vpack.c.b16 %v4628, %v4626
    %v4889 = vpack.c.b16 %v4631, %v4629
    %v4890 = vpack.c.b16 %v4632, %v4630
    %v4891 = vpack.c.b16 %v4635, %v4633
    %v4892 = vpack.c.b16 %v4636, %v4634
    %5149 = vmatprep.subr.bf16.mxu0 %v4638
    %5150 = vmatpush1.bf16.msra.mxu0 %v4637
    %5151 = vmatprep.subr.bf16.mxu0 %v4640
    %5152 = vmatpush1.bf16.msra.mxu0 %v4639
    %5153 = vmatprep.subr.bf16.mxu0 %v4642
    %5154 = vmatpush1.bf16.msra.mxu0 %v4641
    %5155 = vmatprep.subr.bf16.mxu0 %v4644
    %5156 = vmatpush1.bf16.msra.mxu0 %v4643
    %5157 = vmatprep.subr.bf16.mxu0 %v4646
    %5158 = vmatpush1.bf16.msra.mxu0 %v4645
    %5159 = vmatprep.subr.bf16.mxu0 %v4648
    %5160 = vmatpush1.bf16.msra.mxu0 %v4647
    %5161 = vmatprep.subr.bf16.mxu0 %v4650
    %5162 = vmatpush1.bf16.msra.mxu0 %v4649
    %5163 = vmatprep.subr.bf16.mxu0 %v4652
    %5164 = vmatpush1.bf16.msra.mxu0 %v4651
    %5165 = vmatprep.subr.bf16.mxu0 %v4654
    %5166 = vmatpush1.bf16.msra.mxu0 %v4653
    %5167 = vmatprep.subr.bf16.mxu0 %v4656
    %5168 = vmatpush1.bf16.msra.mxu0 %v4655
    %5169 = vmatprep.subr.bf16.mxu0 %v4658
    %5170 = vmatpush1.bf16.msra.mxu0 %v4657
    %5171 = vmatprep.subr.bf16.mxu0 %v4660
    %5172 = vmatpush1.bf16.msra.mxu0 %v4659
    %5173 = vmatprep.subr.bf16.mxu0 %v4662
    %5174 = vmatpush1.bf16.msra.mxu0 %v4661
    %5175 = vmatprep.subr.bf16.mxu0 %v4664
    %5176 = vmatpush1.bf16.msra.mxu0 %v4663
    %5177 = vmatprep.subr.bf16.mxu0 %v4666
    %5178 = vmatpush1.bf16.msra.mxu0 %v4665
    %5179 = vmatprep.subr.bf16.mxu0 %v4668
    %5180 = vmatpush1.bf16.msra.mxu0 %v4667
    %5181 = vmatprep.mubr.bf16.mxu0 %v3586
    %5182 = vmatmul.mubr.bf16.gmra.mrb[0].mxu0 %v3585
    %v5183 = vpop.f32.mrb[0].mxu0
    %v5184 = vadd.f32 %v3862, %v5183
    %v5185 = vpop.f32.mrb[0].mxu0
    %v5186 = vadd.f32 %v3866, %v5185
    %v5187 = vpop.f32.mrb[0].mxu0
    %v5188 = vpop.f32.mrb[0].mxu0
    %5189 = vdwg.mxu0
    %5190 = vmatprep.subr.bf16.mxu0 %v4670
    %5191 = vmatpush1.bf16.msra.mxu0 %v4669
    %5192 = vmatprep.subr.bf16.mxu0 %v4672
    %5193 = vmatpush1.bf16.msra.mxu0 %v4671
    %5194 = vmatprep.subr.bf16.mxu0 %v4674
    %5195 = vmatpush1.bf16.msra.mxu0 %v4673
    %5196 = vmatprep.subr.bf16.mxu0 %v4676
    %5197 = vmatpush1.bf16.msra.mxu0 %v4675
    %5198 = vmatprep.subr.bf16.mxu0 %v4678
    %5199 = vmatpush1.bf16.msra.mxu0 %v4677
    %5200 = vmatprep.subr.bf16.mxu0 %v4680
    %5201 = vmatpush1.bf16.msra.mxu0 %v4679
    %5202 = vmatprep.subr.bf16.mxu0 %v4682
    %5203 = vmatpush1.bf16.msra.mxu0 %v4681
    %5204 = vmatprep.subr.bf16.mxu0 %v4684
    %5205 = vmatpush1.bf16.msra.mxu0 %v4683
    %5206 = vmatprep.subr.bf16.mxu0 %v4686
    %5207 = vmatpush1.bf16.msra.mxu0 %v4685
    %5208 = vmatprep.subr.bf16.mxu0 %v4688
    %5209 = vmatpush1.bf16.msra.mxu0 %v4687
    %5210 = vmatprep.subr.bf16.mxu0 %v4690
    %5211 = vmatpush1.bf16.msra.mxu0 %v4689
    %5212 = vmatprep.subr.bf16.mxu0 %v4692
    %5213 = vmatpush1.bf16.msra.mxu0 %v4691
    %5214 = vmatprep.subr.bf16.mxu0 %v4694
    %5215 = vmatpush1.bf16.msra.mxu0 %v4693
    %5216 = vmatprep.subr.bf16.mxu0 %v4696
    %5217 = vmatpush1.bf16.msra.mxu0 %v4695
    %5218 = vmatprep.subr.bf16.mxu0 %v4698
    %5219 = vmatpush1.bf16.msra.mxu0 %v4697
    %5220 = vmatprep.subr.bf16.mxu0 %v4700
    %5221 = vmatpush1.bf16.msra.mxu0 %v4699
    %5222 = vmatprep.mubr.bf16.mxu0 %v3588
    %5223 = vmatmul.mubr.bf16.gmra.mrb[0].mxu0 %v3587
    %v5224 = vpop.f32.mrb[0].mxu0
    %v5225 = vadd.f32 %v5184, %v5224
    %v5226 = vpop.f32.mrb[0].mxu0
    %v5227 = vadd.f32 %v5186, %v5226
    %v5228 = vpop.f32.mrb[0].mxu0
    %v5229 = vpop.f32.mrb[0].mxu0
    %5230 = vdwg.mxu0
    %5231 = vmatprep.subr.bf16.mxu0 %v4702
    %5232 = vmatpush1.bf16.msra.mxu0 %v4701
    %5233 = vmatprep.subr.bf16.mxu0 %v4704
    %5234 = vmatpush1.bf16.msra.mxu0 %v4703
    %5235 = vmatprep.subr.bf16.mxu0 %v4706
    %5236 = vmatpush1.bf16.msra.mxu0 %v4705
    %5237 = vmatprep.subr.bf16.mxu0 %v4708
    %5238 = vmatpush1.bf16.msra.mxu0 %v4707
    %5239 = vmatprep.subr.bf16.mxu0 %v4710
    %5240 = vmatpush1.bf16.msra.mxu0 %v4709
    %5241 = vmatprep.subr.bf16.mxu0 %v4712
    %5242 = vmatpush1.bf16.msra.mxu0 %v4711
    %5243 = vmatprep.subr.bf16.mxu0 %v4714
    %5244 = vmatpush1.bf16.msra.mxu0 %v4713
    %5245 = vmatprep.subr.bf16.mxu0 %v4716
    %5246 = vmatpush1.bf16.msra.mxu0 %v4715
    %5247 = vmatprep.subr.bf16.mxu0 %v4718
    %5248 = vmatpush1.bf16.msra.mxu0 %v4717
    %5249 = vmatprep.subr.bf16.mxu0 %v4720
    %5250 = vmatpush1.bf16.msra.mxu0 %v4719
    %5251 = vmatprep.subr.bf16.mxu0 %v4722
    %5252 = vmatpush1.bf16.msra.mxu0 %v4721
    %5253 = vmatprep.subr.bf16.mxu0 %v4724
    %5254 = vmatpush1.bf16.msra.mxu0 %v4723
    %5255 = vmatprep.subr.bf16.mxu0 %v4726
    %5256 = vmatpush1.bf16.msra.mxu0 %v4725
    %5257 = vmatprep.subr.bf16.mxu0 %v4728
    %5258 = vmatpush1.bf16.msra.mxu0 %v4727
    %5259 = vmatprep.subr.bf16.mxu0 %v4730
    %5260 = vmatpush1.bf16.msra.mxu0 %v4729
    %5261 = vmatprep.subr.bf16.mxu0 %v4732
    %5262 = vmatpush1.bf16.msra.mxu0 %v4731
    %5263 = vmatprep.mubr.bf16.mxu0 %v3590
    %5264 = vmatmul.mubr.bf16.gmra.mrb[0].mxu0 %v3589
    %v5265 = vpop.f32.mrb[0].mxu0
    %v5266 = vadd.f32 %v5225, %v5265
    %v5267 = vpop.f32.mrb[0].mxu0
    %v5268 = vadd.f32 %v5227, %v5267
    %v5269 = vpop.f32.mrb[0].mxu0
    %v5270 = vpop.f32.mrb[0].mxu0
    %5271 = vdwg.mxu0
    %5272 = vmatprep.subr.bf16.mxu0 %v4734
    %5273 = vmatpush1.bf16.msra.mxu0 %v4733
    %5274 = vmatprep.subr.bf16.mxu0 %v4736
    %5275 = vmatpush1.bf16.msra.mxu0 %v4735
    %5276 = vmatprep.subr.bf16.mxu0 %v4738
    %5277 = vmatpush1.bf16.msra.mxu0 %v4737
    %5278 = vmatprep.subr.bf16.mxu0 %v4740
    %5279 = vmatpush1.bf16.msra.mxu0 %v4739
    %5280 = vmatprep.subr.bf16.mxu0 %v4742
    %5281 = vmatpush1.bf16.msra.mxu0 %v4741
    %5282 = vmatprep.subr.bf16.mxu0 %v4744
    %5283 = vmatpush1.bf16.msra.mxu0 %v4743
    %5284 = vmatprep.subr.bf16.mxu0 %v4746
    %5285 = vmatpush1.bf16.msra.mxu0 %v4745
    %5286 = vmatprep.subr.bf16.mxu0 %v4748
    %5287 = vmatpush1.bf16.msra.mxu0 %v4747
    %5288 = vmatprep.subr.bf16.mxu0 %v4750
    %5289 = vmatpush1.bf16.msra.mxu0 %v4749
    %5290 = vmatprep.subr.bf16.mxu0 %v4752
    %5291 = vmatpush1.bf16.msra.mxu0 %v4751
    %5292 = vmatprep.subr.bf16.mxu0 %v4754
    %5293 = vmatpush1.bf16.msra.mxu0 %v4753
    %5294 = vmatprep.subr.bf16.mxu0 %v4756
    %5295 = vmatpush1.bf16.msra.mxu0 %v4755
    %5296 = vmatprep.subr.bf16.mxu0 %v4758
    %5297 = vmatpush1.bf16.msra.mxu0 %v4757
    %5298 = vmatprep.subr.bf16.mxu0 %v4760
    %5299 = vmatpush1.bf16.msra.mxu0 %v4759
    %5300 = vmatprep.subr.bf16.mxu0 %v4762
    %5301 = vmatpush1.bf16.msra.mxu0 %v4761
    %5302 = vmatprep.subr.bf16.mxu0 %v4764
    %5303 = vmatpush1.bf16.msra.mxu0 %v4763
    %5304 = vmatprep.mubr.bf16.mxu0 %v3592
    %5305 = vmatmul.mubr.bf16.gmra.mrb[0].mxu0 %v3591
    %v5306 = vpop.f32.mrb[0].mxu0
    %v5307 = vadd.f32 %v5266, %v5306
    %v5308 = vpop.f32.mrb[0].mxu0
    %v5309 = vadd.f32 %v5268, %v5308
    %v5310 = vpop.f32.mrb[0].mxu0
    %v5311 = vpop.f32.mrb[0].mxu0
    %5312 = vdwg.mxu0
    %5313 = vmatprep.subr.bf16.mxu0 %v4766
    %5314 = vmatpush1.bf16.msra.mxu0 %v4765
    %5315 = vmatprep.subr.bf16.mxu0 %v4768
    %5316 = vmatpush1.bf16.msra.mxu0 %v4767
    %5317 = vmatprep.subr.bf16.mxu0 %v4770
    %5318 = vmatpush1.bf16.msra.mxu0 %v4769
    %5319 = vmatprep.subr.bf16.mxu0 %v4772
    %5320 = vmatpush1.bf16.msra.mxu0 %v4771
    %5321 = vmatprep.subr.bf16.mxu0 %v4774
    %5322 = vmatpush1.bf16.msra.mxu0 %v4773
    %5323 = vmatprep.subr.bf16.mxu0 %v4776
    %5324 = vmatpush1.bf16.msra.mxu0 %v4775
    %5325 = vmatprep.subr.bf16.mxu0 %v4778
    %5326 = vmatpush1.bf16.msra.mxu0 %v4777
    %5327 = vmatprep.subr.bf16.mxu0 %v4780
    %5328 = vmatpush1.bf16.msra.mxu0 %v4779
    %5329 = vmatprep.subr.bf16.mxu0 %v4782
    %5330 = vmatpush1.bf16.msra.mxu0 %v4781
    %5331 = vmatprep.subr.bf16.mxu0 %v4784
    %5332 = vmatpush1.bf16.msra.mxu0 %v4783
    %5333 = vmatprep.subr.bf16.mxu0 %v4786
    %5334 = vmatpush1.bf16.msra.mxu0 %v4785
    %5335 = vmatprep.subr.bf16.mxu0 %v4788
    %5336 = vmatpush1.bf16.msra.mxu0 %v4787
    %5337 = vmatprep.subr.bf16.mxu0 %v4790
    %5338 = vmatpush1.bf16.msra.mxu0 %v4789
    %5339 = vmatprep.subr.bf16.mxu0 %v4792
    %5340 = vmatpush1.bf16.msra.mxu0 %v4791
    %5341 = vmatprep.subr.bf16.mxu0 %v4794
    %5342 = vmatpush1.bf16.msra.mxu0 %v4793
    %5343 = vmatprep.subr.bf16.mxu0 %v4796
    %5344 = vmatpush1.bf16.msra.mxu0 %v4795
    %5345 = vmatprep.mubr.bf16.mxu0 %v3594
    %5346 = vmatmul.mubr.bf16.gmra.mrb[0].mxu0 %v3593
    %v5347 = vpop.f32.mrb[0].mxu0
    %v5348 = vadd.f32 %v5307, %v5347
    %v5349 = vpop.f32.mrb[0].mxu0
    %v5350 = vadd.f32 %v5309, %v5349
    %v5351 = vpop.f32.mrb[0].mxu0
    %v5352 = vpop.f32.mrb[0].mxu0
    %5353 = vdwg.mxu0
    %5354 = vmatprep.subr.bf16.mxu0 %v4798
    %5355 = vmatpush1.bf16.msra.mxu0 %v4797
    %5356 = vmatprep.subr.bf16.mxu0 %v4800
    %5357 = vmatpush1.bf16.msra.mxu0 %v4799
    %5358 = vmatprep.subr.bf16.mxu0 %v4802
    %5359 = vmatpush1.bf16.msra.mxu0 %v4801
    %5360 = vmatprep.subr.bf16.mxu0 %v4804
    %5361 = vmatpush1.bf16.msra.mxu0 %v4803
    %5362 = vmatprep.subr.bf16.mxu0 %v4806
    %5363 = vmatpush1.bf16.msra.mxu0 %v4805
    %5364 = vmatprep.subr.bf16.mxu0 %v4808
    %5365 = vmatpush1.bf16.msra.mxu0 %v4807
    %5366 = vmatprep.subr.bf16.mxu0 %v4810
    %5367 = vmatpush1.bf16.msra.mxu0 %v4809
    %5368 = vmatprep.subr.bf16.mxu0 %v4812
    %5369 = vmatpush1.bf16.msra.mxu0 %v4811
    %5370 = vmatprep.subr.bf16.mxu0 %v4814
    %5371 = vmatpush1.bf16.msra.mxu0 %v4813
    %5372 = vmatprep.subr.bf16.mxu0 %v4816
    %5373 = vmatpush1.bf16.msra.mxu0 %v4815
    %5374 = vmatprep.subr.bf16.mxu0 %v4818
    %5375 = vmatpush1.bf16.msra.mxu0 %v4817
    %5376 = vmatprep.subr.bf16.mxu0 %v4820
    %5377 = vmatpush1.bf16.msra.mxu0 %v4819
    %5378 = vmatprep.subr.bf16.mxu0 %v4822
    %5379 = vmatpush1.bf16.msra.mxu0 %v4821
    %5380 = vmatprep.subr.bf16.mxu0 %v4824
    %5381 = vmatpush1.bf16.msra.mxu0 %v4823
    %5382 = vmatprep.subr.bf16.mxu0 %v4826
    %5383 = vmatpush1.bf16.msra.mxu0 %v4825
    %5384 = vmatprep.subr.bf16.mxu0 %v4828
    %5385 = vmatpush1.bf16.msra.mxu0 %v4827
    %5386 = vmatprep.mubr.bf16.mxu0 %v3596
    %5387 = vmatmul.mubr.bf16.gmra.mrb[0].mxu0 %v3595
    %v5388 = vpop.f32.mrb[0].mxu0
    %v5389 = vadd.f32 %v5348, %v5388
    %v5390 = vpop.f32.mrb[0].mxu0
    %v5391 = vadd.f32 %v5350, %v5390
    %v5392 = vpop.f32.mrb[0].mxu0
    %v5393 = vpop.f32.mrb[0].mxu0
    %5394 = vdwg.mxu0
    %5395 = vmatprep.subr.bf16.mxu0 %v4830
    %5396 = vmatpush1.bf16.msra.mxu0 %v4829
    %5397 = vmatprep.subr.bf16.mxu0 %v4832
    %5398 = vmatpush1.bf16.msra.mxu0 %v4831
    %5399 = vmatprep.subr.bf16.mxu0 %v4834
    %5400 = vmatpush1.bf16.msra.mxu0 %v4833
    %5401 = vmatprep.subr.bf16.mxu0 %v4836
    %5402 = vmatpush1.bf16.msra.mxu0 %v4835
    %5403 = vmatprep.subr.bf16.mxu0 %v4838
    %5404 = vmatpush1.bf16.msra.mxu0 %v4837
    %5405 = vmatprep.subr.bf16.mxu0 %v4840
    %5406 = vmatpush1.bf16.msra.mxu0 %v4839
    %5407 = vmatprep.subr.bf16.mxu0 %v4842
    %5408 = vmatpush1.bf16.msra.mxu0 %v4841
    %5409 = vmatprep.subr.bf16.mxu0 %v4844
    %5410 = vmatpush1.bf16.msra.mxu0 %v4843
    %5411 = vmatprep.subr.bf16.mxu0 %v4846
    %5412 = vmatpush1.bf16.msra.mxu0 %v4845
    %5413 = vmatprep.subr.bf16.mxu0 %v4848
    %5414 = vmatpush1.bf16.msra.mxu0 %v4847
    %5415 = vmatprep.subr.bf16.mxu0 %v4850
    %5416 = vmatpush1.bf16.msra.mxu0 %v4849
    %5417 = vmatprep.subr.bf16.mxu0 %v4852
    %5418 = vmatpush1.bf16.msra.mxu0 %v4851
    %5419 = vmatprep.subr.bf16.mxu0 %v4854
    %5420 = vmatpush1.bf16.msra.mxu0 %v4853
    %5421 = vmatprep.subr.bf16.mxu0 %v4856
    %5422 = vmatpush1.bf16.msra.mxu0 %v4855
    %5423 = vmatprep.subr.bf16.mxu0 %v4858
    %5424 = vmatpush1.bf16.msra.mxu0 %v4857
    %5425 = vmatprep.subr.bf16.mxu0 %v4860
    %5426 = vmatpush1.bf16.msra.mxu0 %v4859
    %5427 = vmatprep.mubr.bf16.mxu0 %v3598
    %5428 = vmatmul.mubr.bf16.gmra.mrb[0].mxu0 %v3597
    %v5429 = vpop.f32.mrb[0].mxu0
    %v5430 = vadd.f32 %v5389, %v5429
    %v5431 = vpop.f32.mrb[0].mxu0
    %v5432 = vadd.f32 %v5391, %v5431
    %v5433 = vpop.f32.mrb[0].mxu0
    %v5434 = vpop.f32.mrb[0].mxu0
    %5435 = vdwg.mxu0
    %5436 = vmatprep.subr.bf16.mxu0 %v4862
    %5437 = vmatpush1.bf16.msra.mxu0 %v4861
    %5438 = vmatprep.subr.bf16.mxu0 %v4864
    %5439 = vmatpush1.bf16.msra.mxu0 %v4863
    %5440 = vmatprep.subr.bf16.mxu0 %v4866
    %5441 = vmatpush1.bf16.msra.mxu0 %v4865
    %5442 = vmatprep.subr.bf16.mxu0 %v4868
    %5443 = vmatpush1.bf16.msra.mxu0 %v4867
    %5444 = vmatprep.subr.bf16.mxu0 %v4870
    %5445 = vmatpush1.bf16.msra.mxu0 %v4869
    %5446 = vmatprep.subr.bf16.mxu0 %v4872
    %5447 = vmatpush1.bf16.msra.mxu0 %v4871
    %5448 = vmatprep.subr.bf16.mxu0 %v4874
    %5449 = vmatpush1.bf16.msra.mxu0 %v4873
    %5450 = vmatprep.subr.bf16.mxu0 %v4876
    %5451 = vmatpush1.bf16.msra.mxu0 %v4875
    %5452 = vmatprep.subr.bf16.mxu0 %v4878
    %5453 = vmatpush1.bf16.msra.mxu0 %v4877
    %5454 = vmatprep.subr.bf16.mxu0 %v4880
    %5455 = vmatpush1.bf16.msra.mxu0 %v4879
    %5456 = vmatprep.subr.bf16.mxu0 %v4882
    %5457 = vmatpush1.bf16.msra.mxu0 %v4881
    %5458 = vmatprep.subr.bf16.mxu0 %v4884
    %5459 = vmatpush1.bf16.msra.mxu0 %v4883
    %5460 = vmatprep.subr.bf16.mxu0 %v4886
    %5461 = vmatpush1.bf16.msra.mxu0 %v4885
    %5462 = vmatprep.subr.bf16.mxu0 %v4888
    %5463 = vmatpush1.bf16.msra.mxu0 %v4887
    %5464 = vmatprep.subr.bf16.mxu0 %v4890
    %5465 = vmatpush1.bf16.msra.mxu0 %v4889
    %5466 = vmatprep.subr.bf16.mxu0 %v4892
    %5467 = vmatpush1.bf16.msra.mxu0 %v4891
    %5468 = vmatprep.mubr.bf16.mxu0 %v3600
    %5469 = vmatmul.mubr.bf16.gmra.mrb[0].mxu0 %v3599
    %v5470 = vpop.f32.mrb[0].mxu0
    %v5471 = vadd.f32 %v5430, %v5470
    %v5472 = vpop.f32.mrb[0].mxu0
    %v5473 = vadd.f32 %v5432, %v5472
    %v5474 = vpop.f32.mrb[0].mxu0
    %v5475 = vpop.f32.mrb[0].mxu0
    %5476 = vdwg.mxu0
    %v5477 = vmax.f32 %v5471, 0.0
    %v5478 = vmax.f32 %v5473, 0.0
    %v5479 = vpack.c.bf16 %v5477, %v5477
    %v5480 = vpack.c.bf16 %v5478, %v5478
    %v5481 = vld [vmem:[#allocation12] sm:$0xf]
    %v5482 = vld [vmem:[#allocation12 + $0x4] sm:$0xf]
    %v5483 = vld [vmem:[#allocation12 + $0x8] sm:$0xf]
    %v5484 = vld [vmem:[#allocation12 + $0xc] sm:$0xf]
    %v5485 = vld [vmem:[#allocation12 + $0x10] sm:$0xf]
    %v5486 = vld [vmem:[#allocation12 + $0x14] sm:$0xf]
    %v5487 = vld [vmem:[#allocation12 + $0x18] sm:$0xf]
    %v5488 = vld [vmem:[#allocation12 + $0x1c] sm:$0xf]
    %v5489 = vld [vmem:[#allocation12 + $0x20] sm:$0xf]
    %v5490 = vld [vmem:[#allocation12 + $0x24] sm:$0xf]
    %v5491 = vld [vmem:[#allocation12 + $0x28] sm:$0xf]
    %v5492 = vld [vmem:[#allocation12 + $0x2c] sm:$0xf]
    %v5493 = vld [vmem:[#allocation12 + $0x30] sm:$0xf]
    %v5494 = vld [vmem:[#allocation12 + $0x34] sm:$0xf]
    %v5495 = vld [vmem:[#allocation12 + $0x38] sm:$0xf]
    %v5496 = vld [vmem:[#allocation12 + $0x3c] sm:$0xf]
    %v5497 = vld [vmem:[#allocation12 + $0x40] sm:$0xf]
    %v5498 = vld [vmem:[#allocation12 + $0x44] sm:$0xf]
    %v5499 = vld [vmem:[#allocation12 + $0x48] sm:$0xf]
    %v5500 = vld [vmem:[#allocation12 + $0x4c] sm:$0xf]
    %v5501 = vld [vmem:[#allocation12 + $0x50] sm:$0xf]
    %v5502 = vld [vmem:[#allocation12 + $0x54] sm:$0xf]
    %v5503 = vld [vmem:[#allocation12 + $0x58] sm:$0xf]
    %v5504 = vld [vmem:[#allocation12 + $0x5c] sm:$0xf]
    %v5505 = vld [vmem:[#allocation12 + $0x60] sm:$0xf]
    %v5506 = vld [vmem:[#allocation12 + $0x64] sm:$0xf]
    %v5507 = vld [vmem:[#allocation12 + $0x68] sm:$0xf]
    %v5508 = vld [vmem:[#allocation12 + $0x6c] sm:$0xf]
    %v5509 = vld [vmem:[#allocation12 + $0x70] sm:$0xf]
    %v5510 = vld [vmem:[#allocation12 + $0x74] sm:$0xf]
    %v5511 = vld [vmem:[#allocation12 + $0x78] sm:$0xf]
    %v5512 = vld [vmem:[#allocation12 + $0x7c] sm:$0xf]
    %v5513 = vld [vmem:[#allocation13] sm:$0x1]
    %v5515 = vlaneseq
    %v5516 = vshrl.u32 %v5515, 7
    %v5517 = vsub.s32 0, %v5516
    %v5518 = vrot.slane %v5513, %v5517
    %v5552 = vunpack.c.l.b16 %v5481
    %v5553 = vunpack.c.l.b16 %v5482
    %v5554 = vunpack.c.l.b16 %v5483
    %v5555 = vunpack.c.l.b16 %v5484
    %v5556 = vunpack.c.l.b16 %v5485
    %v5557 = vunpack.c.l.b16 %v5486
    %v5558 = vunpack.c.l.b16 %v5487
    %v5559 = vunpack.c.l.b16 %v5488
    %v5560 = vunpack.c.l.b16 %v5489
    %v5561 = vunpack.c.l.b16 %v5490
    %v5562 = vunpack.c.l.b16 %v5491
    %v5563 = vunpack.c.l.b16 %v5492
    %v5564 = vunpack.c.l.b16 %v5493
    %v5565 = vunpack.c.l.b16 %v5494
    %v5566 = vunpack.c.l.b16 %v5495
    %v5567 = vunpack.c.l.b16 %v5496
    %v5568 = vunpack.c.l.b16 %v5497
    %v5569 = vunpack.c.l.b16 %v5498
    %v5570 = vunpack.c.l.b16 %v5499
    %v5571 = vunpack.c.l.b16 %v5500
    %v5572 = vunpack.c.l.b16 %v5501
    %v5573 = vunpack.c.l.b16 %v5502
    %v5574 = vunpack.c.l.b16 %v5503
    %v5575 = vunpack.c.l.b16 %v5504
    %v5576 = vunpack.c.l.b16 %v5505
    %v5577 = vunpack.c.l.b16 %v5506
    %v5578 = vunpack.c.l.b16 %v5507
    %v5579 = vunpack.c.l.b16 %v5508
    %v5580 = vunpack.c.l.b16 %v5509
    %v5581 = vunpack.c.l.b16 %v5510
    %v5582 = vunpack.c.l.b16 %v5511
    %v5583 = vunpack.c.l.b16 %v5512
    %v5584 = vpack.c.b16 %v5553, %v5552
    %v5585 = vpack.c.b16 %v5555, %v5554
    %v5586 = vpack.c.b16 %v5557, %v5556
    %v5587 = vpack.c.b16 %v5559, %v5558
    %v5588 = vpack.c.b16 %v5561, %v5560
    %v5589 = vpack.c.b16 %v5563, %v5562
    %v5590 = vpack.c.b16 %v5565, %v5564
    %v5591 = vpack.c.b16 %v5567, %v5566
    %v5592 = vpack.c.b16 %v5569, %v5568
    %v5593 = vpack.c.b16 %v5571, %v5570
    %v5594 = vpack.c.b16 %v5573, %v5572
    %v5595 = vpack.c.b16 %v5575, %v5574
    %v5596 = vpack.c.b16 %v5577, %v5576
    %v5597 = vpack.c.b16 %v5579, %v5578
    %v5598 = vpack.c.b16 %v5581, %v5580
    %v5599 = vpack.c.b16 %v5583, %v5582
    %5616 = vmatprep.subr.bf16.mxu0 0
    %5617 = vmatpush1.bf16.msra.mxu0 %v5584
    %5618 = vmatprep.subr.bf16.mxu0 0
    %5619 = vmatpush1.bf16.msra.mxu0 %v5585
    %5620 = vmatprep.subr.bf16.mxu0 0
    %5621 = vmatpush1.bf16.msra.mxu0 %v5586
    %5622 = vmatprep.subr.bf16.mxu0 0
    %5623 = vmatpush1.bf16.msra.mxu0 %v5587
    %5624 = vmatprep.subr.bf16.mxu0 0
    %5625 = vmatpush1.bf16.msra.mxu0 %v5588
    %5626 = vmatprep.subr.bf16.mxu0 0
    %5627 = vmatpush1.bf16.msra.mxu0 %v5589
    %5628 = vmatprep.subr.bf16.mxu0 0
    %5629 = vmatpush1.bf16.msra.mxu0 %v5590
    %5630 = vmatprep.subr.bf16.mxu0 0
    %5631 = vmatpush1.bf16.msra.mxu0 %v5591
    %5632 = vmatprep.subr.bf16.mxu0 0
    %5633 = vmatpush1.bf16.msra.mxu0 %v5592
    %5634 = vmatprep.subr.bf16.mxu0 0
    %5635 = vmatpush1.bf16.msra.mxu0 %v5593
    %5636 = vmatprep.subr.bf16.mxu0 0
    %5637 = vmatpush1.bf16.msra.mxu0 %v5594
    %5638 = vmatprep.subr.bf16.mxu0 0
    %5639 = vmatpush1.bf16.msra.mxu0 %v5595
    %5640 = vmatprep.subr.bf16.mxu0 0
    %5641 = vmatpush1.bf16.msra.mxu0 %v5596
    %5642 = vmatprep.subr.bf16.mxu0 0
    %5643 = vmatpush1.bf16.msra.mxu0 %v5597
    %5644 = vmatprep.subr.bf16.mxu0 0
    %5645 = vmatpush1.bf16.msra.mxu0 %v5598
    %5646 = vmatprep.subr.bf16.mxu0 0
    %5647 = vmatpush1.bf16.msra.mxu0 %v5599
    %5648 = vmatprep.mubr.bf16.mxu0 %v5480
    %5649 = vmatmul.mubr.bf16.gmra.mrb[0].mxu0 %v5479
    %v5650 = vpop.f32.mrb[0].mxu0
    %v5651 = vadd.f32 %v5518, %v5650
    %v5652 = vpop.f32.mrb[0].mxu0
    %v5653 = vpop.f32.mrb[0].mxu0
    %v5654 = vpop.f32.mrb[0].mxu0
    %5655 = vdwg.mxu0
    %v5656 = vmax.f32 %v5651, 0.0
    %v5657 = vpack.c.bf16 %v5656, %v5656
    %v5658 = vld [vmem:[#allocation15] sm:$0xf]
    %v5659 = vld [vmem:[#allocation15 + $0x4] sm:$0xf]
    %v5660 = vld [vmem:[#allocation15 + $0x8] sm:$0xf]
    %v5661 = vld [vmem:[#allocation15 + $0xc] sm:$0xf]
    %v5662 = vld [vmem:[#allocation15 + $0x10] sm:$0xf]
    %v5663 = vld [vmem:[#allocation15 + $0x14] sm:$0xf]
    %v5664 = vld [vmem:[#allocation15 + $0x18] sm:$0xf]
    %v5665 = vld [vmem:[#allocation15 + $0x1c] sm:$0xf]
    %v5666 = vld [vmem:[#allocation15 + $0x20] sm:$0xf]
    %v5667 = vld [vmem:[#allocation15 + $0x24] sm:$0xf]
    %v5668 = vld [vmem:[#allocation15 + $0x28] sm:$0xf]
    %v5669 = vld [vmem:[#allocation15 + $0x2c] sm:$0xf]
    %v5670 = vld [vmem:[#allocation15 + $0x30] sm:$0xf]
    %v5671 = vld [vmem:[#allocation15 + $0x34] sm:$0xf]
    %v5672 = vld [vmem:[#allocation15 + $0x38] sm:$0xf]
    %v5673 = vld [vmem:[#allocation15 + $0x3c] sm:$0xf]
    %v5674 = vld [vmem:[#allocation16] sm:$0x1]
    %v5676 = vlaneseq
    %v5677 = vshrl.u32 %v5676, 7
    %v5678 = vsub.s32 0, %v5677
    %v5679 = vrot.slane %v5674, %v5678
    %v5697 = vunpack.c.l.b16 %v5658
    %v5698 = vunpack.c.l.b16 %v5659
    %v5699 = vunpack.c.l.b16 %v5660
    %v5700 = vunpack.c.l.b16 %v5661
    %v5701 = vunpack.c.l.b16 %v5662
    %v5702 = vunpack.c.l.b16 %v5663
    %v5703 = vunpack.c.l.b16 %v5664
    %v5704 = vunpack.c.l.b16 %v5665
    %v5705 = vunpack.c.l.b16 %v5666
    %v5706 = vunpack.c.l.b16 %v5667
    %v5707 = vunpack.c.l.b16 %v5668
    %v5708 = vunpack.c.l.b16 %v5669
    %v5709 = vunpack.c.l.b16 %v5670
    %v5710 = vunpack.c.l.b16 %v5671
    %v5711 = vunpack.c.l.b16 %v5672
    %v5712 = vunpack.c.l.b16 %v5673
    %v5713 = vpack.c.b16 %v5698, %v5697
    %v5714 = vpack.c.b16 %v5700, %v5699
    %v5715 = vpack.c.b16 %v5702, %v5701
    %v5716 = vpack.c.b16 %v5704, %v5703
    %v5717 = vpack.c.b16 %v5706, %v5705
    %v5718 = vpack.c.b16 %v5708, %v5707
    %v5719 = vpack.c.b16 %v5710, %v5709
    %v5720 = vpack.c.b16 %v5712, %v5711
    %5729 = vmatprep.subr.bf16.mxu0 0
    %5730 = vmatpush1.bf16.msra.mxu0 %v5713
    %5731 = vmatprep.subr.bf16.mxu0 0
    %5732 = vmatpush1.bf16.msra.mxu0 %v5714
    %5733 = vmatprep.subr.bf16.mxu0 0
    %5734 = vmatpush1.bf16.msra.mxu0 %v5715
    %5735 = vmatprep.subr.bf16.mxu0 0
    %5736 = vmatpush1.bf16.msra.mxu0 %v5716
    %5737 = vmatprep.subr.bf16.mxu0 0
    %5738 = vmatpush1.bf16.msra.mxu0 %v5717
    %5739 = vmatprep.subr.bf16.mxu0 0
    %5740 = vmatpush1.bf16.msra.mxu0 %v5718
    %5741 = vmatprep.subr.bf16.mxu0 0
    %5742 = vmatpush1.bf16.msra.mxu0 %v5719
    %5743 = vmatprep.subr.bf16.mxu0 0
    %5744 = vmatpush1.bf16.msra.mxu0 %v5720
    %5745 = vmatprep.subr.bf16.mxu0 0
    %5746 = vmatpush1.bf16.msra.mxu0 0
    %5747 = vmatprep.subr.bf16.mxu0 0
    %5748 = vmatpush1.bf16.msra.mxu0 0
    %5749 = vmatprep.subr.bf16.mxu0 0
    %5750 = vmatpush1.bf16.msra.mxu0 0
    %5751 = vmatprep.subr.bf16.mxu0 0
    %5752 = vmatpush1.bf16.msra.mxu0 0
    %5753 = vmatprep.subr.bf16.mxu0 0
    %5754 = vmatpush1.bf16.msra.mxu0 0
    %5755 = vmatprep.subr.bf16.mxu0 0
    %5756 = vmatpush1.bf16.msra.mxu0 0
    %5757 = vmatprep.subr.bf16.mxu0 0
    %5758 = vmatpush1.bf16.msra.mxu0 0
    %5759 = vmatprep.subr.bf16.mxu0 0
    %5760 = vmatpush1.bf16.msra.mxu0 0
    %5761 = vmatprep.mubr.bf16.mxu0 0
    %5762 = vmatmul.mubr.bf16.gmra.mrb[0].mxu0 %v5657
    %v5763 = vpop.f32.mrb[0].mxu0
    %v5764 = vadd.f32 %v5679, %v5763
    %v5765 = vpop.f32.mrb[0].mxu0
    %v5766 = vpop.f32.mrb[0].mxu0
    %v5767 = vpop.f32.mrb[0].mxu0
    %5768 = vdwg.mxu0
    %5769 = vst [vmem:[%s20] sm:$0xff] %v5764
    %v5770 = vld [vmem:[%s14] sm:$0xf]
    %v5771 = vld [vmem:[%s14 + $0x4] sm:$0xf]
    %v5772 = vld [vmem:[%s14 + $0x8] sm:$0xf]
    %v5773 = vld [vmem:[%s14 + $0xc] sm:$0xf]
    %v5774 = vld [vmem:[%s14 + $0x10] sm:$0xf]
    %v5775 = vld [vmem:[%s14 + $0x14] sm:$0xf]
    %v5776 = vld [vmem:[%s14 + $0x18] sm:$0xf]
    %v5777 = vld [vmem:[%s14 + $0x1c] sm:$0xf]
    %v5778 = vld [vmem:[%s14 + $0x20] sm:$0xf]
    %v5779 = vld [vmem:[%s14 + $0x24] sm:$0xf]
    %v5780 = vld [vmem:[%s14 + $0x28] sm:$0xf]
    %v5781 = vld [vmem:[%s14 + $0x2c] sm:$0xf]
    %v5782 = vld [vmem:[%s14 + $0x30] sm:$0xf]
    %v5783 = vld [vmem:[%s14 + $0x34] sm:$0xf]
    %v5784 = vld [vmem:[%s14 + $0x38] sm:$0xf]
    %v5785 = vld [vmem:[%s14 + $0x3c] sm:$0xf]
    %v5786 = vld [vmem:[#allocation18] sm:$0x1]
    %v5788 = vlaneseq
    %v5789 = vshrl.u32 %v5788, 7
    %v5790 = vsub.s32 0, %v5789
    %v5791 = vrot.slane %v5786, %v5790
    %v5809 = vunpack.c.l.b16 %v5770
    %v5810 = vunpack.c.l.b16 %v5771
    %v5811 = vunpack.c.l.b16 %v5772
    %v5812 = vunpack.c.l.b16 %v5773
    %v5813 = vunpack.c.l.b16 %v5774
    %v5814 = vunpack.c.l.b16 %v5775
    %v5815 = vunpack.c.l.b16 %v5776
    %v5816 = vunpack.c.l.b16 %v5777
    %v5817 = vunpack.c.l.b16 %v5778
    %v5818 = vunpack.c.l.b16 %v5779
    %v5819 = vunpack.c.l.b16 %v5780
    %v5820 = vunpack.c.l.b16 %v5781
    %v5821 = vunpack.c.l.b16 %v5782
    %v5822 = vunpack.c.l.b16 %v5783
    %v5823 = vunpack.c.l.b16 %v5784
    %v5824 = vunpack.c.l.b16 %v5785
    %v5825 = vpack.c.b16 %v5810, %v5809
    %v5826 = vpack.c.b16 %v5812, %v5811
    %v5827 = vpack.c.b16 %v5814, %v5813
    %v5828 = vpack.c.b16 %v5816, %v5815
    %v5829 = vpack.c.b16 %v5818, %v5817
    %v5830 = vpack.c.b16 %v5820, %v5819
    %v5831 = vpack.c.b16 %v5822, %v5821
    %v5832 = vpack.c.b16 %v5824, %v5823
    %5841 = vmatprep.subr.bf16.mxu0 0
    %5842 = vmatpush1.bf16.msra.mxu0 %v5825
    %5843 = vmatprep.subr.bf16.mxu0 0
    %5844 = vmatpush1.bf16.msra.mxu0 %v5826
    %5845 = vmatprep.subr.bf16.mxu0 0
    %5846 = vmatpush1.bf16.msra.mxu0 %v5827
    %5847 = vmatprep.subr.bf16.mxu0 0
    %5848 = vmatpush1.bf16.msra.mxu0 %v5828
    %5849 = vmatprep.subr.bf16.mxu0 0
    %5850 = vmatpush1.bf16.msra.mxu0 %v5829
    %5851 = vmatprep.subr.bf16.mxu0 0
    %5852 = vmatpush1.bf16.msra.mxu0 %v5830
    %5853 = vmatprep.subr.bf16.mxu0 0
    %5854 = vmatpush1.bf16.msra.mxu0 %v5831
    %5855 = vmatprep.subr.bf16.mxu0 0
    %5856 = vmatpush1.bf16.msra.mxu0 %v5832
    %5857 = vmatprep.subr.bf16.mxu0 0
    %5858 = vmatpush1.bf16.msra.mxu0 0
    %5859 = vmatprep.subr.bf16.mxu0 0
    %5860 = vmatpush1.bf16.msra.mxu0 0
    %5861 = vmatprep.subr.bf16.mxu0 0
    %5862 = vmatpush1.bf16.msra.mxu0 0
    %5863 = vmatprep.subr.bf16.mxu0 0
    %5864 = vmatpush1.bf16.msra.mxu0 0
    %5865 = vmatprep.subr.bf16.mxu0 0
    %5866 = vmatpush1.bf16.msra.mxu0 0
    %5867 = vmatprep.subr.bf16.mxu0 0
    %5868 = vmatpush1.bf16.msra.mxu0 0
    %5869 = vmatprep.subr.bf16.mxu0 0
    %5870 = vmatpush1.bf16.msra.mxu0 0
    %5871 = vmatprep.subr.bf16.mxu0 0
    %5872 = vmatpush1.bf16.msra.mxu0 0
    %5873 = vmatprep.mubr.bf16.mxu0 0
    %5874 = vmatmul.mubr.bf16.gmra.mrb[0].mxu0 %v5657
    %v5875 = vpop.f32.mrb[0].mxu0
    %v5876 = vadd.f32 %v5791, %v5875
    %v5877 = vpop.f32.mrb[0].mxu0
    %v5878 = vpop.f32.mrb[0].mxu0
    %v5879 = vpop.f32.mrb[0].mxu0
    %5880 = vdwg.mxu0
    %v5881 = vmax.f32 %v5876, 0.0
    %v5882 = vpack.c.bf16 %v5881, %v5881
    %v5883 = vld [vmem:[%s16] sm:$0xf]
    %v5884 = vld [vmem:[%s16 + $0x4] sm:$0xf]
    %v5885 = vld [vmem:[%s16 + $0x8] sm:$0xf]
    %v5886 = vld [vmem:[%s16 + $0xc] sm:$0xf]
    %v5887 = vld [vmem:[%s16 + $0x10] sm:$0xf]
    %v5888 = vld [vmem:[%s16 + $0x14] sm:$0xf]
    %v5889 = vld [vmem:[%s16 + $0x18] sm:$0xf]
    %v5890 = vld [vmem:[%s16 + $0x1c] sm:$0xf]
    %v5891 = vld [vmem:[%s17] sm:$0x1]
    %v5893 = vlaneseq
    %v5894 = vshrl.u32 %v5893, 7
    %v5895 = vsub.s32 0, %v5894
    %v5896 = vrot.slane %v5891, %v5895
    %v5906 = vunpack.c.l.b16 %v5883
    %v5907 = vunpack.c.l.b16 %v5884
    %v5908 = vunpack.c.l.b16 %v5885
    %v5909 = vunpack.c.l.b16 %v5886
    %v5910 = vunpack.c.l.b16 %v5887
    %v5911 = vunpack.c.l.b16 %v5888
    %v5912 = vunpack.c.l.b16 %v5889
    %v5913 = vunpack.c.l.b16 %v5890
    %v5914 = vpack.c.b16 %v5907, %v5906
    %v5915 = vpack.c.b16 %v5909, %v5908
    %v5916 = vpack.c.b16 %v5911, %v5910
    %v5917 = vpack.c.b16 %v5913, %v5912
    %v5923 = vsel %vm946, %v5882, 0
    %5925 = vmatprep.subr.bf16.mxu0 0
    %5926 = vmatpush1.bf16.msra.mxu0 %v5914
    %5927 = vmatprep.subr.bf16.mxu0 0
    %5928 = vmatpush1.bf16.msra.mxu0 %v5915
    %5929 = vmatprep.subr.bf16.mxu0 0
    %5930 = vmatpush1.bf16.msra.mxu0 %v5916
    %5931 = vmatprep.subr.bf16.mxu0 0
    %5932 = vmatpush1.bf16.msra.mxu0 %v5917
    %5933 = vmatprep.subr.bf16.mxu0 0
    %5934 = vmatpush1.bf16.msra.mxu0 0
    %5935 = vmatprep.subr.bf16.mxu0 0
    %5936 = vmatpush1.bf16.msra.mxu0 0
    %5937 = vmatprep.subr.bf16.mxu0 0
    %5938 = vmatpush1.bf16.msra.mxu0 0
    %5939 = vmatprep.subr.bf16.mxu0 0
    %5940 = vmatpush1.bf16.msra.mxu0 0
    %5941 = vmatprep.subr.bf16.mxu0 0
    %5942 = vmatpush1.bf16.msra.mxu0 0
    %5943 = vmatprep.subr.bf16.mxu0 0
    %5944 = vmatpush1.bf16.msra.mxu0 0
    %5945 = vmatprep.subr.bf16.mxu0 0
    %5946 = vmatpush1.bf16.msra.mxu0 0
    %5947 = vmatprep.subr.bf16.mxu0 0
    %5948 = vmatpush1.bf16.msra.mxu0 0
    %5949 = vmatprep.subr.bf16.mxu0 0
    %5950 = vmatpush1.bf16.msra.mxu0 0
    %5951 = vmatprep.subr.bf16.mxu0 0
    %5952 = vmatpush1.bf16.msra.mxu0 0
    %5953 = vmatprep.subr.bf16.mxu0 0
    %5954 = vmatpush1.bf16.msra.mxu0 0
    %5955 = vmatprep.subr.bf16.mxu0 0
    %5956 = vmatpush1.bf16.msra.mxu0 0
    %5957 = vmatprep.mubr.bf16.mxu0 0
    %5958 = vmatmul.mubr.bf16.gmra.mrb[0].mxu0 %v5923
    %v5959 = vpop.f32.mrb[0].mxu0
    %v5960 = vadd.f32 %v5896, %v5959
    %v5961 = vpop.f32.mrb[0].mxu0
    %v5962 = vpop.f32.mrb[0].mxu0
    %v5963 = vpop.f32.mrb[0].mxu0
    %5964 = vdwg.mxu0
    %5965 = vst [vmem:[%s21] sm:$0xff] %v5960
    // Predicated region
    $region118: #{agent2d_forward.1} parent=1 // pred_check
      _
    $region119: #{agent2d_forward.1} parent=1 // pred_check_branch
      %5967 = sbr.rel (0) target = $region121
    $region120: #{agent2d_forward.1} parent=1 // pred_region
      _
    $region121: #{agent2d_forward.1} parent=1 // pred_fallthru
      _
    // Predicated region
    $region122: #{agent2d_forward.1} parent=1 // pred_check
      _
    $region123: #{agent2d_forward.1} parent=1 // pred_check_branch
      %5969 = sbr.rel (0) target = $region125
    $region124: #{agent2d_forward.1} parent=1 // pred_region
      _
    $region125: #{agent2d_forward.1} parent=1 // pred_fallthru
      _
    // Predicated region
    $region126: #{agent2d_forward.1} parent=1 // pred_check
      _
    $region127: #{agent2d_forward.1} parent=1 // pred_check_branch
      %5971 = sbr.rel (0) target = $region129
    $region128: #{agent2d_forward.1} parent=1 // pred_region
      _
    $region129: #{agent2d_forward.1} parent=1 // pred_fallthru
      _
    // Predicated region
    $region130: #{agent2d_forward.1} parent=1 // pred_check
      _
    $region131: #{agent2d_forward.1} parent=1 // pred_check_branch
      %5973 = sbr.rel (0) target = $region133
    $region132: #{agent2d_forward.1} parent=1 // pred_region
      _
    $region133: #{agent2d_forward.1} parent=1 // pred_fallthru
      _
    // Predicated region
    $region134: #{agent2d_forward.1} parent=1 // pred_check
      _
    $region135: #{agent2d_forward.1} parent=1 // pred_check_branch
      %5975 = sbr.rel (0) target = $region137
    $region136: #{agent2d_forward.1} parent=1 // pred_region
      _
    $region137: #{agent2d_forward.1} parent=1 // pred_fallthru
      _
    // Predicated region
    $region138: #{agent2d_forward.1} parent=1 // pred_check
      _
    $region139: #{agent2d_forward.1} parent=1 // pred_check_branch
      %5977 = sbr.rel (0) target = $region141
    $region140: #{agent2d_forward.1} parent=1 // pred_region
      _
    $region141: #{agent2d_forward.1} parent=1 // pred_fallthru
      _
    // Predicated region
    $region142: #{agent2d_forward.1} parent=1 // pred_check
      _
    $region143: #{agent2d_forward.1} parent=1 // pred_check_branch
      %5979 = sbr.rel (0) target = $region145
    $region144: #{agent2d_forward.1} parent=1 // pred_region
      _
    $region145: #{agent2d_forward.1} parent=1 // pred_fallthru
      _
    // Predicated region
    $region146: #{agent2d_forward.1} parent=1 // pred_check
      _
    $region147: #{agent2d_forward.1} parent=1 // pred_check_branch
      %5981 = sbr.rel (0) target = $region149
    $region148: #{agent2d_forward.1} parent=1 // pred_region
      _
    $region149: #{agent2d_forward.1} parent=1 // pred_fallthru
      _
    %5982 = vsyncpa [#allocation3], 1
    %5983 = vsyncpa [#allocation5], 1
    %5984 = vsyncpa [#allocation8], 1
    %5985 = vsyncpa [#allocation11], 1
    %5986 = vsyncpa [#allocation14], 1
    %5987 = vsyncpa [#allocation17], 1

</llo_original>
